<compile_context>
chip_gen: v7x
topology: tpu7x:2x2x1
jax: 0.10.0
libtpu: 0.0.40
codegen_flags: <defaults>
</compile_context>

<pallas_src>
import math

import jax
import jax.numpy as jnp
from jax.experimental import pallas as pl
from jax.experimental.pallas import tpu as pltpu

# ---- scaled-down "bert-base" dims (synthetic, deterministic init) ----
VOCAB = 50
VOCAB_PAD = 64               # one-hot / embedding-table row padding
MAX_POS = 16
TYPE_VOCAB = 2
HIDDEN = 32                  # bert hidden_size
NUM_HEADS = 4
HEAD_DIM = HIDDEN // NUM_HEADS
INTER = 64                   # FFN intermediate size
NUM_LAYERS = 2
NUM_FEATURES = 6
OUTPUT_DIM = 5
H4 = HIDDEN // 4             # feature_processor width
H2 = HIDDEN // 2             # combination_layer width
LANE = 128
PAD_OUT = 128                # lane-dense classifier output width (sliced in wrapper)
LN_EPS = 1e-12
BN_EPS = 1e-5
MASK_BIAS = -1e9

# ---------------- f32 vector-parameter slab row layout (cols padded to 128) ----------------
VROW_EMB_G, VROW_EMB_B = 0, 1
VROW_LAYER0, VROWS_PER_LAYER = 2, 8
(VOFF_BQKV, VOFF_BO, VOFF_LN1G, VOFF_LN1B,
 VOFF_BI, VOFF_BO2, VOFF_LN2G, VOFF_LN2B) = range(8)
VROW_POOL_B = VROW_LAYER0 + NUM_LAYERS * VROWS_PER_LAYER   # 18
VROW_FP_B = VROW_POOL_B + 1                                # 19
VROW_COMB_B = VROW_POOL_B + 2                              # 20
VROW_CLF_B = VROW_POOL_B + 3                               # 21
VROW_POSTYPE = 24                                          # 8-aligned; pos_emb + type_emb[0]
VEC_ROWS = VROW_POSTYPE + MAX_POS                          # 40

# ---------------- bf16 matmul-weight slab row layout (cols padded to 128) ----------------
WROW_WORD = 0                                              # word-emb table [VOCAB_PAD, H]
WROW_LAYER0 = WROW_WORD + VOCAB_PAD                        # 64
WOFF_WQKV, WOFF_WO, WOFF_WI, WOFF_WO2 = 0, HIDDEN, 2 * HIDDEN, 3 * HIDDEN
WROWS_PER_LAYER = 3 * HIDDEN + LANE                        # 224 (wo2 K padded to 128)
WROW_POOL = WROW_LAYER0 + NUM_LAYERS * WROWS_PER_LAYER     # 512
WROW_FP = WROW_POOL + HIDDEN                               # 544
WROW_CWB = WROW_FP + 8                                     # 552
WROW_CWF = WROW_CWB + HIDDEN                               # 584
WROW_CLF = WROW_CWF + 8                                    # 592
WT_ROWS = WROW_CLF + H2                                    # 608


# ---------------- in-kernel helpers (traced inside the Pallas body) ----------------
def _layer_norm(x, g, b, eps=LN_EPS):
    mu = jnp.mean(x, axis=-1, keepdims=True)
    var = jnp.mean(jnp.square(x - mu), axis=-1, keepdims=True)
    return (x - mu) * jax.lax.rsqrt(var + eps) * g + b


def _gelu_tanh(x):
    # TODO(synk): BERT uses exact erf-GELU; tanh approximation used here (|dev| ~3e-3).
    c = 0.7978845608028654  # sqrt(2/pi)
    return 0.5 * x * (1.0 + jnp.tanh(c * (x + 0.044715 * x * x * x)))


# ---------------------------------- fused kernel ----------------------------------
def fused_bert_kernel(ids_ref, mask_ref, feat_ref, vec_ref, wts_ref, out_ref):
    Bt, S, _ = ids_ref.shape
    T = Bt * S
    bf16 = jnp.bfloat16
    f32 = jnp.float32
    scale = 1.0 / math.sqrt(HEAD_DIM)

    def vrow(r, cols=HIDDEN):
        return vec_ref[r:r + 1, :cols]

    # ---- embedding lookup fused in-kernel: one-hot(ids) @ word_emb on the MXU ----
    ids = ids_ref[...]                                                      # [Bt,S,1] i32
    vocab_iota = jax.lax.broadcasted_iota(jnp.int32, (Bt, S, VOCAB_PAD), 2)
    onehot = jnp.where(ids == vocab_iota, 1.0, 0.0).astype(bf16)            # [Bt,S,VP]
    tok = jnp.dot(onehot.reshape(T, VOCAB_PAD),
                  wts_ref[WROW_WORD:WROW_WORD + VOCAB_PAD, :HIDDEN],
                  preferred_element_type=f32)                               # [T,H]
    postype = vec_ref[VROW_POSTYPE:VROW_POSTYPE + S, :HIDDEN]               # [S,H] f32
    pt_full = jnp.broadcast_to(postype[None], (Bt, S, HIDDEN)).reshape(T, HIDDEN)
    x = _layer_norm(tok + pt_full, vrow(VROW_EMB_G), vrow(VROW_EMB_B))      # [T,H] f32

    # ---- additive key-mask bias: built & broadcast ONCE, reused by all layers/heads ----
    mbias = jnp.broadcast_to((1.0 - mask_ref[...]) * MASK_BIAS, (Bt, S, S))  # [Bt,S,S]

    for l in range(NUM_LAYERS):                                             # static unroll
        wbase = WROW_LAYER0 + l * WROWS_PER_LAYER
        vbase = VROW_LAYER0 + l * VROWS_PER_LAYER

        # ---- self-attention: fused QKV projection for all Bt*S tokens (lane-dense 128) ----
        xb = x.astype(bf16)
        qkv = jnp.dot(xb, wts_ref[wbase + WOFF_WQKV:wbase + WOFF_WQKV + HIDDEN, :],
                      preferred_element_type=f32) + vrow(vbase + VOFF_BQKV, cols=LANE)
        qkv3 = qkv.reshape(Bt, S, LANE)                                     # [Bt,S,128]
        ctx_parts = []
        for h in range(NUM_HEADS):                                          # static unroll
            lo = h * HEAD_DIM
            qh = qkv3[:, :, lo:lo + HEAD_DIM].astype(bf16)
            kh = qkv3[:, :, HIDDEN + lo:HIDDEN + lo + HEAD_DIM].astype(bf16)
            vh = qkv3[:, :, 2 * HIDDEN + lo:2 * HIDDEN + lo + HEAD_DIM].astype(bf16)
            # scores / context batched over the Bt block elements
            sc = jnp.einsum('bqd,bkd->bqk', qh, kh,
                            preferred_element_type=f32) * scale + mbias
            sc = sc - jnp.max(sc, axis=-1, keepdims=True)
            p = jnp.exp(sc)
            p = p * pl.reciprocal(jnp.sum(p, axis=-1, keepdims=True), approx=True)
            ctx_parts.append(jnp.einsum('bqk,bkd->bqd', p.astype(bf16), vh,
                                        preferred_element_type=f32))        # [Bt,S,HD]
        # concat-over-heads @ Wo == single [T,H] @ [H,H] matmul
        ctx = jnp.concatenate(ctx_parts, axis=-1).reshape(T, HIDDEN).astype(bf16)
        attn = jnp.dot(ctx, wts_ref[wbase + WOFF_WO:wbase + WOFF_WO + HIDDEN, :HIDDEN],
                       preferred_element_type=f32) + vrow(vbase + VOFF_BO)
        h1 = _layer_norm(x + attn, vrow(vbase + VOFF_LN1G), vrow(vbase + VOFF_LN1B))

        # ---- FFN (intermediate padded to 128 lanes; the padded wo2 rows are zero) ----
        inter = _gelu_tanh(
            jnp.dot(h1.astype(bf16), wts_ref[wbase + WOFF_WI:wbase + WOFF_WI + HIDDEN, :],
                    preferred_element_type=f32) + vrow(vbase + VOFF_BI, cols=LANE))
        ffn = jnp.dot(inter.astype(bf16),
                      wts_ref[wbase + WOFF_WO2:wbase + WOFF_WO2 + LANE, :HIDDEN],
                      preferred_element_type=f32) + vrow(vbase + VOFF_BO2)
        x = _layer_norm(h1 + ffn, vrow(vbase + VOFF_LN2G), vrow(vbase + VOFF_LN2B))

    # ---- pooler + classification head, batched over the block (M = Bt) ----
    cls = x.reshape(Bt, S, HIDDEN)[:, 0:1, :].reshape(Bt, HIDDEN)           # [Bt,H]
    pooled = jnp.tanh(jnp.dot(cls.astype(bf16),
                              wts_ref[WROW_POOL:WROW_POOL + HIDDEN, :HIDDEN],
                              preferred_element_type=f32) + vrow(VROW_POOL_B))
    # dropout == identity (eval); bn_bert folded into comb_wb / comb_b.
    featv = feat_ref[...].reshape(Bt, NUM_FEATURES)
    pf = jnp.maximum(jnp.dot(featv.astype(bf16),
                             wts_ref[WROW_FP:WROW_FP + NUM_FEATURES, :H4],
                             preferred_element_type=f32) + vrow(VROW_FP_B, cols=H4), 0.0)
    # fp_bn folded into comb_wf / comb_b.
    comb = jnp.maximum(
        jnp.dot(pooled.astype(bf16), wts_ref[WROW_CWB:WROW_CWB + HIDDEN, :H2],
                preferred_element_type=f32)
        + jnp.dot(pf.astype(bf16), wts_ref[WROW_CWF:WROW_CWF + H4, :H2],
                  preferred_element_type=f32)
        + vrow(VROW_COMB_B, cols=H2), 0.0)
    # comb_bn folded into clf_w / clf_b (output padded to 128 lanes -> dense store).
    logits = jnp.dot(comb.astype(bf16), wts_ref[WROW_CLF:WROW_CLF + H2, :],
                     preferred_element_type=f32) + vrow(VROW_CLF_B, cols=LANE)
    out_ref[...] = logits.reshape(Bt, 1, PAD_OUT)


# ------------------------------- pallas wrapper -------------------------------
def _const_spec(arr):
    return pl.BlockSpec(tuple(arr.shape), lambda b: (0,) * arr.ndim)


def forward(dp, input_ids, attention_mask, numeric_features):
    B, S = input_ids.shape
    assert S <= MAX_POS
    # Batch blocking: Bt elements per grid step.  When B >= 2 keep >= 2 grid steps so
    # both v7x TensorCores get work ("parallel" batch axis); neutral on v5e / v6e.
    Bt = 1 if B < 2 else min(8, (B + 1) // 2)
    n_blocks = (B + Bt - 1) // Bt
    B_pad = n_blocks * Bt

    ids = input_ids.astype(jnp.int32).reshape(B, S, 1)
    mask = attention_mask.astype(jnp.float32).reshape(B, 1, S)
    feat = numeric_features.astype(jnp.float32).reshape(B, 1, NUM_FEATURES)
    if B_pad != B:
        pad = B_pad - B
        ids = jnp.pad(ids, ((0, pad), (0, 0), (0, 0)))
        mask = jnp.pad(mask, ((0, pad), (0, 0), (0, 0)))
        feat = jnp.pad(feat, ((0, pad), (0, 0), (0, 0)))

    out = pl.pallas_call(
        fused_bert_kernel,
        grid=(n_blocks,),
        in_specs=[
            pl.BlockSpec((Bt, S, 1), lambda b: (b, 0, 0)),              # token ids (int32)
            pl.BlockSpec((Bt, 1, S), lambda b: (b, 0, 0)),              # attention mask
            pl.BlockSpec((Bt, 1, NUM_FEATURES), lambda b: (b, 0, 0)),   # numeric features
            _const_spec(dp['vecs']),                                    # packed f32 vectors
            _const_spec(dp['wts']),                                     # packed bf16 weights
        ],
        out_specs=pl.BlockSpec((Bt, 1, PAD_OUT), lambda b: (b, 0, 0)),
        out_shape=jax.ShapeDtypeStruct((B_pad, 1, PAD_OUT), jnp.float32),
        compiler_params=pltpu.CompilerParams(
            dimension_semantics=("parallel",),
            vmem_limit_bytes=8 * 1024 * 1024),
    )(ids, mask, feat, dp['vecs'], dp['wts'])
    return out[:B, 0, :OUTPUT_DIM]


# ------------------------------- parameter init -------------------------------
def init_params(key):
    ks = iter(jax.random.split(key, 96))

    def nrm(shape, scale=0.02):
        return (scale * jax.random.normal(next(ks), shape)).astype(jnp.float32)

    def ones(shape):
        return jnp.ones(shape, jnp.float32)

    def zeros(shape):
        return jnp.zeros(shape, jnp.float32)

    def bn(c):
        return dict(
            g=(1.0 + 0.1 * jax.random.normal(next(ks), (1, c))).astype(jnp.float32),
            b=(0.1 * jax.random.normal(next(ks), (1, c))).astype(jnp.float32),
            m=(0.1 * jax.random.normal(next(ks), (1, c))).astype(jnp.float32),
            v=(1.0 + 0.1 * jnp.abs(jax.random.normal(next(ks), (1, c)))).astype(jnp.float32),
        )

    params = dict(
        word_emb=nrm((VOCAB, HIDDEN)),
        pos_emb=nrm((MAX_POS, HIDDEN)),
        type_emb=nrm((TYPE_VOCAB, HIDDEN)),
        emb_ln_g=ones((1, HIDDEN)), emb_ln_b=zeros((1, HIDDEN)),
        layers=[],
    )
    for _ in range(NUM_LAYERS):
        params['layers'].append(dict(
            wq=nrm((HIDDEN, HIDDEN)), bq=nrm((1, HIDDEN)),
            wk=nrm((HIDDEN, HIDDEN)), bk=nrm((1, HIDDEN)),
            wv=nrm((HIDDEN, HIDDEN)), bv=nrm((1, HIDDEN)),
            wo=nrm((HIDDEN, HIDDEN)), bo=nrm((1, HIDDEN)),
            ln1_g=ones((1, HIDDEN)), ln1_b=zeros((1, HIDDEN)),
            wi=nrm((HIDDEN, INTER)), bi=nrm((1, INTER)),
            wo2=nrm((INTER, HIDDEN)), bo2=nrm((1, HIDDEN)),
            ln2_g=ones((1, HIDDEN)), ln2_b=zeros((1, HIDDEN)),
        ))
    params.update(
        pool_w=nrm((HIDDEN, HIDDEN)), pool_b=nrm((1, HIDDEN)),
        bn_bert=bn(HIDDEN),
        fp_w=nrm((NUM_FEATURES, H4)), fp_b=nrm((1, H4)),
        fp_bn=bn(H4),
        comb_wb=nrm((HIDDEN, H2)),       # combination-weight rows matching bert_features
        comb_wf=nrm((H4, H2)),           # rows matching processed numeric features
        comb_b=nrm((1, H2)),
        comb_bn=bn(H2),
        clf_w=nrm((H2, OUTPUT_DIM)), clf_b=nrm((1, OUTPUT_DIM)),
    )
    # TODO(synk): training-only feature_importance bookkeeping (no-op at inference).
    return params


def prepare_device_params(p):
    """Pack parameters into two kernel-resident slabs:
         vecs [VEC_ROWS,128] f32 : biases / LayerNorm vectors / pos+type embedding rows
         wts  [WT_ROWS,128] bf16 : all matmul weights (word-emb table included),
                                   8-row-aligned, lane/row padded for dense layouts.
       Eval-mode BatchNorms (module order Linear->ReLU->Dropout->BN) are folded into
       the FOLLOWING Linear's weights/bias."""
    Ls = p['layers']

    def bn_fold(bn):
        s = bn['g'] * jax.lax.rsqrt(bn['v'] + BN_EPS)
        return s, bn['b'] - bn['m'] * s

    s_b, t_b = bn_fold(p['bn_bert'])     # bn_bert  -> folded into comb_wb / comb_b
    s_f, t_f = bn_fold(p['fp_bn'])       # fp_bn    -> folded into comb_wf / comb_b
    s_c, t_c = bn_fold(p['comb_bn'])     # comb_bn  -> folded into clf_w / clf_b
    comb_wb = p['comb_wb'] * s_b.reshape(-1, 1)
    comb_wf = p['comb_wf'] * s_f.reshape(-1, 1)
    comb_b = p['comb_b'] + t_b @ p['comb_wb'] + t_f @ p['comb_wf']
    clf_w = p['clf_w'] * s_c.reshape(-1, 1)
    clf_b = p['clf_b'] + t_c @ p['clf_w']

    def put(slab, row, arr):
        arr = jnp.asarray(arr, slab.dtype)
        if arr.ndim == 1:
            arr = arr.reshape(1, -1)
        return slab.at[row:row + arr.shape[0], :arr.shape[1]].set(arr)

    vecs = jnp.zeros((VEC_ROWS, LANE), jnp.float32)
    vecs = put(vecs, VROW_EMB_G, p['emb_ln_g'])
    vecs = put(vecs, VROW_EMB_B, p['emb_ln_b'])
    for l, lp in enumerate(Ls):
        base = VROW_LAYER0 + l * VROWS_PER_LAYER
        vecs = put(vecs, base + VOFF_BQKV,
                   jnp.concatenate([lp['bq'], lp['bk'], lp['bv']], axis=1))
        vecs = put(vecs, base + VOFF_BO, lp['bo'])
        vecs = put(vecs, base + VOFF_LN1G, lp['ln1_g'])
        vecs = put(vecs, base + VOFF_LN1B, lp['ln1_b'])
        vecs = put(vecs, base + VOFF_BI, lp['bi'])
        vecs = put(vecs, base + VOFF_BO2, lp['bo2'])
        vecs = put(vecs, base + VOFF_LN2G, lp['ln2_g'])
        vecs = put(vecs, base + VOFF_LN2B, lp['ln2_b'])
    vecs = put(vecs, VROW_POOL_B, p['pool_b'])
    vecs = put(vecs, VROW_FP_B, p['fp_b'])
    vecs = put(vecs, VROW_COMB_B, comb_b)
    vecs = put(vecs, VROW_CLF_B, clf_b)
    # TODO(synk): token_type_ids assumed all-zero (module is called without them).
    vecs = put(vecs, VROW_POSTYPE, p['pos_emb'] + p['type_emb'][0:1, :])

    wts = jnp.zeros((WT_ROWS, LANE), jnp.float32)
    wts = put(wts, WROW_WORD, p['word_emb'])
    for l, lp in enumerate(Ls):
        base = WROW_LAYER0 + l * WROWS_PER_LAYER
        wts = put(wts, base + WOFF_WQKV,
                  jnp.concatenate([lp['wq'], lp['wk'], lp['wv']], axis=1))
        wts = put(wts, base + WOFF_WO, lp['wo'])
        wts = put(wts, base + WOFF_WI, lp['wi'])
        wts = put(wts, base + WOFF_WO2, lp['wo2'])
    wts = put(wts, WROW_POOL, p['pool_w'])
    wts = put(wts, WROW_FP, p['fp_w'])
    wts = put(wts, WROW_CWB, comb_wb)
    wts = put(wts, WROW_CWF, comb_wf)
    wts = put(wts, WROW_CLF, clf_w)

    return dict(vecs=vecs, wts=wts.astype(jnp.bfloat16))


# ------------------------- pure-JAX f32 reference (module spec) -------------------------
def reference_forward(p, input_ids, attention_mask, numeric_features):
    B, S = input_ids.shape
    emb = p['word_emb'][input_ids] + p['pos_emb'][:S][None] + p['type_emb'][0][None, None]

    def ln(x, g, b):
        mu = x.mean(-1, keepdims=True)
        var = ((x - mu) ** 2).mean(-1, keepdims=True)
        return (x - mu) / jnp.sqrt(var + LN_EPS) * g + b

    x = ln(emb, p['emb_ln_g'], p['emb_ln_b'])
    mbias = (1.0 - attention_mask.astype(jnp.float32))[:, None, None, :] * MASK_BIAS
    for lp in p['layers']:
        q = x @ lp['wq'] + lp['bq']
        k = x @ lp['wk'] + lp['bk']
        v = x @ lp['wv'] + lp['bv']

        def split(t):
            return t.reshape(B, S, NUM_HEADS, HEAD_DIM).transpose(0, 2, 1, 3)

        qh, kh, vh = split(q), split(k), split(v)
        sc = jnp.einsum('bhqd,bhkd->bhqk', qh, kh) / math.sqrt(HEAD_DIM) + mbias
        pr = jax.nn.softmax(sc, axis=-1)
        ctx = jnp.einsum('bhqk,bhkd->bhqd', pr, vh).transpose(0, 2, 1, 3).reshape(B, S, HIDDEN)
        attn = ctx @ lp['wo'] + lp['bo']
        h1 = ln(x + attn, lp['ln1_g'], lp['ln1_b'])
        inter = jax.nn.gelu(h1 @ lp['wi'] + lp['bi'], approximate=False)
        x = ln(h1 + inter @ lp['wo2'] + lp['bo2'], lp['ln2_g'], lp['ln2_b'])

    pooled = jnp.tanh(x[:, 0, :] @ p['pool_w'] + p['pool_b'])

    def bn(x, d):
        return (x - d['m']) / jnp.sqrt(d['v'] + BN_EPS) * d['g'] + d['b']

    bert_feat = bn(pooled, p['bn_bert'])                         # dropout == identity (eval)
    pf = bn(jnp.maximum(numeric_features @ p['fp_w'] + p['fp_b'], 0.0), p['fp_bn'])
    comb = bn(jnp.maximum(bert_feat @ p['comb_wb'] + pf @ p['comb_wf'] + p['comb_b'], 0.0),
              p['comb_bn'])
    return comb @ p['clf_w'] + p['clf_b']


if __name__ == "__main__":
    key = jax.random.PRNGKey(0)
    kp, kid, kfeat = jax.random.split(key, 3)
    raw_params = init_params(kp)
    dev_params = prepare_device_params(raw_params)

    B, S = 2, 8
    input_ids = jax.random.randint(kid, (B, S), 0, VOCAB, dtype=jnp.int32)
    attention_mask = jnp.array([[1] * 8, [1] * 6 + [0] * 2], dtype=jnp.int32)
    numeric_features = jax.random.normal(kfeat, (B, NUM_FEATURES), dtype=jnp.float32)

    fwd = jax.jit(forward)
    logits = jax.block_until_ready(fwd(dev_params, input_ids, attention_mask, numeric_features))
    assert logits.shape == (B, OUTPUT_DIM) and logits.dtype == jnp.float32

    ref = reference_forward(raw_params, input_ids, attention_mask, numeric_features)
    err = float(jnp.max(jnp.abs(logits - ref)))
    assert err < 3e-2, f"kernel/reference mismatch: max abs err {err}"
    print("KERNEL_OK")
</pallas_src>

<mosaic_0001>
module attributes {stable_mosaic.version = 11 : i64} {
  func.func @fused_bert_kernel(%arg0: i32, %arg1: memref<1x8x1xi32, #tpu.memory_space<vmem>>, %arg2: memref<1x1x8xf32, #tpu.memory_space<vmem>>, %arg3: memref<1x1x6xf32, #tpu.memory_space<vmem>>, %arg4: memref<40x128xf32, #tpu.memory_space<vmem>>, %arg5: memref<608x128xbf16, #tpu.memory_space<vmem>>, %arg6: memref<1x1x128xf32, #tpu.memory_space<vmem>>) attributes {dimension_semantics = [#tpu.dimension_semantics<parallel>], iteration_bounds = array<i64: 2>, scalar_prefetch = 0 : i64, scratch_operands = 0 : i64, tpu.core_type = #tpu.core_type<tc>, window_params = [{transform_indices = @transform_0, window_bounds = array<i64: 1, 8, 1>}, {transform_indices = @transform_1, window_bounds = array<i64: 1, 1, 8>}, {transform_indices = @transform_2, window_bounds = array<i64: 1, 1, 6>}, {pipeline_mode = #tpu.pipeline_mode<synchronous>, transform_indices = @transform_3, window_bounds = array<i64: 40, 128>}, {pipeline_mode = #tpu.pipeline_mode<synchronous>, transform_indices = @transform_4, window_bounds = array<i64: 608, 128>}, {transform_indices = @transform_5, window_bounds = array<i64: 1, 1, 128>}]} {
    %c0 = arith.constant 0 : index
    %c0_0 = arith.constant 0 : index
    %c0_1 = arith.constant 0 : index
    %0 = vector.load %arg1[%c0, %c0_0, %c0_1] : memref<1x8x1xi32, #tpu.memory_space<vmem>>, vector<1x8x1xi32>
    %1 = tpu.iota {dimensions = array<i32: 2>} : vector<1x8x64xi32>
    %2 = vector.broadcast %0 : vector<1x8x1xi32> to vector<1x8x64xi32>
    %3 = arith.cmpi eq, %2, %1 : vector<1x8x64xi32>
    %cst = arith.constant 1.000000e+00 : f32
    %cst_2 = arith.constant 0.000000e+00 : f32
    %4 = vector.broadcast %cst : f32 to vector<1x8x64xf32>
    %5 = vector.broadcast %cst_2 : f32 to vector<1x8x64xf32>
    %6 = arith.select %3, %4, %5 : vector<1x8x64xi1>, vector<1x8x64xf32>
    %7 = arith.truncf %6 : vector<1x8x64xf32> to vector<1x8x64xbf16>
    %8 = vector.shape_cast %7 : vector<1x8x64xbf16> to vector<8x64xbf16>
    %c0_3 = arith.constant 0 : index
    %c0_4 = arith.constant 0 : index
    %9 = vector.load %arg5[%c0_3, %c0_4] : memref<608x128xbf16, #tpu.memory_space<vmem>>, vector<64x32xbf16>
    %cst_5 = arith.constant dense<0.000000e+00> : vector<8x32xf32>
    %10 = tpu.matmul %8, %9, %cst_5 {dimension_numbers = #tpu.dot_dimension_numbers<[1], [0], [0], [1], [0, 0, 1, 1], [], []>} : vector<8x64xbf16>, vector<64x32xbf16>, vector<8x32xf32> -> vector<8x32xf32>
    %c24 = arith.constant 24 : index
    %c0_6 = arith.constant 0 : index
    %11 = vector.load %arg4[%c24, %c0_6] : memref<40x128xf32, #tpu.memory_space<vmem>>, vector<8x32xf32>
    %12 = vector.shape_cast %11 : vector<8x32xf32> to vector<1x8x32xf32>
    %13 = vector.shape_cast %12 : vector<1x8x32xf32> to vector<8x32xf32>
    %14 = arith.addf %10, %13 : vector<8x32xf32>
    %c0_7 = arith.constant 0 : index
    %c0_8 = arith.constant 0 : index
    %15 = vector.load %arg4[%c0_7, %c0_8] : memref<40x128xf32, #tpu.memory_space<vmem>>, vector<1x32xf32>
    %c1 = arith.constant 1 : index
    %c0_9 = arith.constant 0 : index
    %16 = vector.load %arg4[%c1, %c0_9] : memref<40x128xf32, #tpu.memory_space<vmem>>, vector<1x32xf32>
    %cst_10 = arith.constant dense<0.000000e+00> : vector<8xf32>
    %17 = vector.multi_reduction <add>, %14, %cst_10 [1] : vector<8x32xf32> to vector<8xf32>
    %18 = vector.shape_cast %17 : vector<8xf32> to vector<8x1xf32>
    %cst_11 = arith.constant 3.200000e+01 : f32
    %19 = vector.broadcast %cst_11 : f32 to vector<8x1xf32>
    %20 = arith.divf %18, %19 : vector<8x1xf32>
    %21 = vector.broadcast %20 : vector<8x1xf32> to vector<8x32xf32>
    %22 = arith.subf %14, %21 : vector<8x32xf32>
    %23 = arith.mulf %22, %22 : vector<8x32xf32>
    %cst_12 = arith.constant dense<0.000000e+00> : vector<8xf32>
    %24 = vector.multi_reduction <add>, %23, %cst_12 [1] : vector<8x32xf32> to vector<8xf32>
    %25 = vector.shape_cast %24 : vector<8xf32> to vector<8x1xf32>
    %cst_13 = arith.constant 3.200000e+01 : f32
    %26 = vector.broadcast %cst_13 : f32 to vector<8x1xf32>
    %27 = arith.divf %25, %26 : vector<8x1xf32>
    %28 = vector.broadcast %20 : vector<8x1xf32> to vector<8x32xf32>
    %29 = arith.subf %14, %28 : vector<8x32xf32>
    %cst_14 = arith.constant 9.99999996E-13 : f32
    %30 = vector.broadcast %cst_14 : f32 to vector<8x1xf32>
    %31 = arith.addf %27, %30 : vector<8x1xf32>
    %32 = math.rsqrt %31 : vector<8x1xf32>
    %33 = vector.broadcast %32 : vector<8x1xf32> to vector<8x32xf32>
    %34 = arith.mulf %29, %33 : vector<8x32xf32>
    %35 = vector.broadcast %15 : vector<1x32xf32> to vector<8x32xf32>
    %36 = arith.mulf %34, %35 : vector<8x32xf32>
    %37 = vector.broadcast %16 : vector<1x32xf32> to vector<8x32xf32>
    %38 = arith.addf %36, %37 : vector<8x32xf32>
    %c0_15 = arith.constant 0 : index
    %c0_16 = arith.constant 0 : index
    %c0_17 = arith.constant 0 : index
    %39 = vector.load %arg2[%c0_15, %c0_16, %c0_17] : memref<1x1x8xf32, #tpu.memory_space<vmem>>, vector<1x1x8xf32>
    %cst_18 = arith.constant 1.000000e+00 : f32
    %40 = vector.broadcast %cst_18 : f32 to vector<1x1x8xf32>
    %41 = arith.subf %40, %39 : vector<1x1x8xf32>
    %cst_19 = arith.constant -1.000000e+09 : f32
    %42 = vector.broadcast %cst_19 : f32 to vector<1x1x8xf32>
    %43 = arith.mulf %41, %42 : vector<1x1x8xf32>
    %44 = vector.shape_cast %43 : vector<1x1x8xf32> to vector<1x1x8xf32>
    %45 = vector.broadcast %44 : vector<1x1x8xf32> to vector<1x8x8xf32>
    %46 = arith.truncf %38 : vector<8x32xf32> to vector<8x32xbf16>
    %c64 = arith.constant 64 : index
    %c0_20 = arith.constant 0 : index
    %47 = vector.load %arg5[%c64, %c0_20] : memref<608x128xbf16, #tpu.memory_space<vmem>>, vector<32x128xbf16>
    %cst_21 = arith.constant dense<0.000000e+00> : vector<8x128xf32>
    %48 = tpu.matmul %46, %47, %cst_21 {dimension_numbers = #tpu.dot_dimension_numbers<[1], [0], [0], [1], [0, 0, 1, 1], [], []>} : vector<8x32xbf16>, vector<32x128xbf16>, vector<8x128xf32> -> vector<8x128xf32>
    %c2 = arith.constant 2 : index
    %c0_22 = arith.constant 0 : index
    %49 = vector.load %arg4[%c2, %c0_22] : memref<40x128xf32, #tpu.memory_space<vmem>>, vector<1x128xf32>
    %50 = vector.broadcast %49 : vector<1x128xf32> to vector<8x128xf32>
    %51 = arith.addf %48, %50 : vector<8x128xf32>
    %52 = vector.shape_cast %51 : vector<8x128xf32> to vector<1x8x128xf32>
    %53 = vector.extract_strided_slice %52 {offsets = [0, 0, 0], sizes = [1, 8, 8], strides = [1, 1, 1]} : vector<1x8x128xf32> to vector<1x8x8xf32>
    %54 = arith.truncf %53 : vector<1x8x8xf32> to vector<1x8x8xbf16>
    %55 = vector.extract_strided_slice %52 {offsets = [0, 0, 32], sizes = [1, 8, 8], strides = [1, 1, 1]} : vector<1x8x128xf32> to vector<1x8x8xf32>
    %56 = arith.truncf %55 : vector<1x8x8xf32> to vector<1x8x8xbf16>
    %57 = vector.extract_strided_slice %52 {offsets = [0, 0, 64], sizes = [1, 8, 8], strides = [1, 1, 1]} : vector<1x8x128xf32> to vector<1x8x8xf32>
    %58 = arith.truncf %57 : vector<1x8x8xf32> to vector<1x8x8xbf16>
    "tpu.trace_start"() <{level = 10 : i32, message = "bqd,bkd->bqk"}> : () -> ()
    %cst_23 = arith.constant dense<0.000000e+00> : vector<1x8x8xf32>
    %59 = tpu.matmul %54, %56, %cst_23 {dimension_numbers = #tpu.dot_dimension_numbers<[2], [2], [1], [1], [0, 0, 0, 1, 1, 1], [0], [0]>} : vector<1x8x8xbf16>, vector<1x8x8xbf16>, vector<1x8x8xf32> -> vector<1x8x8xf32>
    "tpu.trace_stop"() : () -> ()
    %cst_24 = arith.constant 0.353553385 : f32
    %60 = vector.broadcast %cst_24 : f32 to vector<1x8x8xf32>
    %61 = arith.mulf %59, %60 : vector<1x8x8xf32>
    %62 = arith.addf %61, %45 : vector<1x8x8xf32>
    %cst_25 = arith.constant dense<0xFF800000> : vector<1x8xf32>
    %63 = vector.multi_reduction <maximumf>, %62, %cst_25 [2] : vector<1x8x8xf32> to vector<1x8xf32>
    %64 = vector.shape_cast %63 : vector<1x8xf32> to vector<1x8x1xf32>
    %65 = vector.broadcast %64 : vector<1x8x1xf32> to vector<1x8x8xf32>
    %66 = arith.subf %62, %65 : vector<1x8x8xf32>
    %67 = math.exp %66 : vector<1x8x8xf32>
    %cst_26 = arith.constant dense<0.000000e+00> : vector<1x8xf32>
    %68 = vector.multi_reduction <add>, %67, %cst_26 [2] : vector<1x8x8xf32> to vector<1x8xf32>
    %69 = vector.shape_cast %68 : vector<1x8xf32> to vector<1x8x1xf32>
    %70 = tpu.reciprocal %69 {approx = true} : vector<1x8x1xf32> -> vector<1x8x1xf32>
    %71 = vector.broadcast %70 : vector<1x8x1xf32> to vector<1x8x8xf32>
    %72 = arith.mulf %67, %71 : vector<1x8x8xf32>
    %73 = arith.truncf %72 : vector<1x8x8xf32> to vector<1x8x8xbf16>
    "tpu.trace_start"() <{level = 10 : i32, message = "bqk,bkd->bqd"}> : () -> ()
    %cst_27 = arith.constant dense<0.000000e+00> : vector<1x8x8xf32>
    %74 = tpu.matmul %73, %58, %cst_27 {dimension_numbers = #tpu.dot_dimension_numbers<[2], [1], [1], [2], [0, 0, 0, 1, 1, 2], [0], [0]>} : vector<1x8x8xbf16>, vector<1x8x8xbf16>, vector<1x8x8xf32> -> vector<1x8x8xf32>
    "tpu.trace_stop"() : () -> ()
    %75 = vector.extract_strided_slice %52 {offsets = [0, 0, 8], sizes = [1, 8, 8], strides = [1, 1, 1]} : vector<1x8x128xf32> to vector<1x8x8xf32>
    %76 = arith.truncf %75 : vector<1x8x8xf32> to vector<1x8x8xbf16>
    %77 = vector.extract_strided_slice %52 {offsets = [0, 0, 40], sizes = [1, 8, 8], strides = [1, 1, 1]} : vector<1x8x128xf32> to vector<1x8x8xf32>
    %78 = arith.truncf %77 : vector<1x8x8xf32> to vector<1x8x8xbf16>
    %79 = vector.extract_strided_slice %52 {offsets = [0, 0, 72], sizes = [1, 8, 8], strides = [1, 1, 1]} : vector<1x8x128xf32> to vector<1x8x8xf32>
    %80 = arith.truncf %79 : vector<1x8x8xf32> to vector<1x8x8xbf16>
    "tpu.trace_start"() <{level = 10 : i32, message = "bqd,bkd->bqk"}> : () -> ()
    %cst_28 = arith.constant dense<0.000000e+00> : vector<1x8x8xf32>
    %81 = tpu.matmul %76, %78, %cst_28 {dimension_numbers = #tpu.dot_dimension_numbers<[2], [2], [1], [1], [0, 0, 0, 1, 1, 1], [0], [0]>} : vector<1x8x8xbf16>, vector<1x8x8xbf16>, vector<1x8x8xf32> -> vector<1x8x8xf32>
    "tpu.trace_stop"() : () -> ()
    %cst_29 = arith.constant 0.353553385 : f32
    %82 = vector.broadcast %cst_29 : f32 to vector<1x8x8xf32>
    %83 = arith.mulf %81, %82 : vector<1x8x8xf32>
    %84 = arith.addf %83, %45 : vector<1x8x8xf32>
    %cst_30 = arith.constant dense<0xFF800000> : vector<1x8xf32>
    %85 = vector.multi_reduction <maximumf>, %84, %cst_30 [2] : vector<1x8x8xf32> to vector<1x8xf32>
    %86 = vector.shape_cast %85 : vector<1x8xf32> to vector<1x8x1xf32>
    %87 = vector.broadcast %86 : vector<1x8x1xf32> to vector<1x8x8xf32>
    %88 = arith.subf %84, %87 : vector<1x8x8xf32>
    %89 = math.exp %88 : vector<1x8x8xf32>
    %cst_31 = arith.constant dense<0.000000e+00> : vector<1x8xf32>
    %90 = vector.multi_reduction <add>, %89, %cst_31 [2] : vector<1x8x8xf32> to vector<1x8xf32>
    %91 = vector.shape_cast %90 : vector<1x8xf32> to vector<1x8x1xf32>
    %92 = tpu.reciprocal %91 {approx = true} : vector<1x8x1xf32> -> vector<1x8x1xf32>
    %93 = vector.broadcast %92 : vector<1x8x1xf32> to vector<1x8x8xf32>
    %94 = arith.mulf %89, %93 : vector<1x8x8xf32>
    %95 = arith.truncf %94 : vector<1x8x8xf32> to vector<1x8x8xbf16>
    "tpu.trace_start"() <{level = 10 : i32, message = "bqk,bkd->bqd"}> : () -> ()
    %cst_32 = arith.constant dense<0.000000e+00> : vector<1x8x8xf32>
    %96 = tpu.matmul %95, %80, %cst_32 {dimension_numbers = #tpu.dot_dimension_numbers<[2], [1], [1], [2], [0, 0, 0, 1, 1, 2], [0], [0]>} : vector<1x8x8xbf16>, vector<1x8x8xbf16>, vector<1x8x8xf32> -> vector<1x8x8xf32>
    "tpu.trace_stop"() : () -> ()
    %97 = vector.extract_strided_slice %52 {offsets = [0, 0, 16], sizes = [1, 8, 8], strides = [1, 1, 1]} : vector<1x8x128xf32> to vector<1x8x8xf32>
    %98 = arith.truncf %97 : vector<1x8x8xf32> to vector<1x8x8xbf16>
    %99 = vector.extract_strided_slice %52 {offsets = [0, 0, 48], sizes = [1, 8, 8], strides = [1, 1, 1]} : vector<1x8x128xf32> to vector<1x8x8xf32>
    %100 = arith.truncf %99 : vector<1x8x8xf32> to vector<1x8x8xbf16>
    %101 = vector.extract_strided_slice %52 {offsets = [0, 0, 80], sizes = [1, 8, 8], strides = [1, 1, 1]} : vector<1x8x128xf32> to vector<1x8x8xf32>
    %102 = arith.truncf %101 : vector<1x8x8xf32> to vector<1x8x8xbf16>
    "tpu.trace_start"() <{level = 10 : i32, message = "bqd,bkd->bqk"}> : () -> ()
    %cst_33 = arith.constant dense<0.000000e+00> : vector<1x8x8xf32>
    %103 = tpu.matmul %98, %100, %cst_33 {dimension_numbers = #tpu.dot_dimension_numbers<[2], [2], [1], [1], [0, 0, 0, 1, 1, 1], [0], [0]>} : vector<1x8x8xbf16>, vector<1x8x8xbf16>, vector<1x8x8xf32> -> vector<1x8x8xf32>
    "tpu.trace_stop"() : () -> ()
    %cst_34 = arith.constant 0.353553385 : f32
    %104 = vector.broadcast %cst_34 : f32 to vector<1x8x8xf32>
    %105 = arith.mulf %103, %104 : vector<1x8x8xf32>
    %106 = arith.addf %105, %45 : vector<1x8x8xf32>
    %cst_35 = arith.constant dense<0xFF800000> : vector<1x8xf32>
    %107 = vector.multi_reduction <maximumf>, %106, %cst_35 [2] : vector<1x8x8xf32> to vector<1x8xf32>
    %108 = vector.shape_cast %107 : vector<1x8xf32> to vector<1x8x1xf32>
    %109 = vector.broadcast %108 : vector<1x8x1xf32> to vector<1x8x8xf32>
    %110 = arith.subf %106, %109 : vector<1x8x8xf32>
    %111 = math.exp %110 : vector<1x8x8xf32>
    %cst_36 = arith.constant dense<0.000000e+00> : vector<1x8xf32>
    %112 = vector.multi_reduction <add>, %111, %cst_36 [2] : vector<1x8x8xf32> to vector<1x8xf32>
    %113 = vector.shape_cast %112 : vector<1x8xf32> to vector<1x8x1xf32>
    %114 = tpu.reciprocal %113 {approx = true} : vector<1x8x1xf32> -> vector<1x8x1xf32>
    %115 = vector.broadcast %114 : vector<1x8x1xf32> to vector<1x8x8xf32>
    %116 = arith.mulf %111, %115 : vector<1x8x8xf32>
    %117 = arith.truncf %116 : vector<1x8x8xf32> to vector<1x8x8xbf16>
    "tpu.trace_start"() <{level = 10 : i32, message = "bqk,bkd->bqd"}> : () -> ()
    %cst_37 = arith.constant dense<0.000000e+00> : vector<1x8x8xf32>
    %118 = tpu.matmul %117, %102, %cst_37 {dimension_numbers = #tpu.dot_dimension_numbers<[2], [1], [1], [2], [0, 0, 0, 1, 1, 2], [0], [0]>} : vector<1x8x8xbf16>, vector<1x8x8xbf16>, vector<1x8x8xf32> -> vector<1x8x8xf32>
    "tpu.trace_stop"() : () -> ()
    %119 = vector.extract_strided_slice %52 {offsets = [0, 0, 24], sizes = [1, 8, 8], strides = [1, 1, 1]} : vector<1x8x128xf32> to vector<1x8x8xf32>
    %120 = arith.truncf %119 : vector<1x8x8xf32> to vector<1x8x8xbf16>
    %121 = vector.extract_strided_slice %52 {offsets = [0, 0, 56], sizes = [1, 8, 8], strides = [1, 1, 1]} : vector<1x8x128xf32> to vector<1x8x8xf32>
    %122 = arith.truncf %121 : vector<1x8x8xf32> to vector<1x8x8xbf16>
    %123 = vector.extract_strided_slice %52 {offsets = [0, 0, 88], sizes = [1, 8, 8], strides = [1, 1, 1]} : vector<1x8x128xf32> to vector<1x8x8xf32>
    %124 = arith.truncf %123 : vector<1x8x8xf32> to vector<1x8x8xbf16>
    "tpu.trace_start"() <{level = 10 : i32, message = "bqd,bkd->bqk"}> : () -> ()
    %cst_38 = arith.constant dense<0.000000e+00> : vector<1x8x8xf32>
    %125 = tpu.matmul %120, %122, %cst_38 {dimension_numbers = #tpu.dot_dimension_numbers<[2], [2], [1], [1], [0, 0, 0, 1, 1, 1], [0], [0]>} : vector<1x8x8xbf16>, vector<1x8x8xbf16>, vector<1x8x8xf32> -> vector<1x8x8xf32>
    "tpu.trace_stop"() : () -> ()
    %cst_39 = arith.constant 0.353553385 : f32
    %126 = vector.broadcast %cst_39 : f32 to vector<1x8x8xf32>
    %127 = arith.mulf %125, %126 : vector<1x8x8xf32>
    %128 = arith.addf %127, %45 : vector<1x8x8xf32>
    %cst_40 = arith.constant dense<0xFF800000> : vector<1x8xf32>
    %129 = vector.multi_reduction <maximumf>, %128, %cst_40 [2] : vector<1x8x8xf32> to vector<1x8xf32>
    %130 = vector.shape_cast %129 : vector<1x8xf32> to vector<1x8x1xf32>
    %131 = vector.broadcast %130 : vector<1x8x1xf32> to vector<1x8x8xf32>
    %132 = arith.subf %128, %131 : vector<1x8x8xf32>
    %133 = math.exp %132 : vector<1x8x8xf32>
    %cst_41 = arith.constant dense<0.000000e+00> : vector<1x8xf32>
    %134 = vector.multi_reduction <add>, %133, %cst_41 [2] : vector<1x8x8xf32> to vector<1x8xf32>
    %135 = vector.shape_cast %134 : vector<1x8xf32> to vector<1x8x1xf32>
    %136 = tpu.reciprocal %135 {approx = true} : vector<1x8x1xf32> -> vector<1x8x1xf32>
    %137 = vector.broadcast %136 : vector<1x8x1xf32> to vector<1x8x8xf32>
    %138 = arith.mulf %133, %137 : vector<1x8x8xf32>
    %139 = arith.truncf %138 : vector<1x8x8xf32> to vector<1x8x8xbf16>
    "tpu.trace_start"() <{level = 10 : i32, message = "bqk,bkd->bqd"}> : () -> ()
    %cst_42 = arith.constant dense<0.000000e+00> : vector<1x8x8xf32>
    %140 = tpu.matmul %139, %124, %cst_42 {dimension_numbers = #tpu.dot_dimension_numbers<[2], [1], [1], [2], [0, 0, 0, 1, 1, 2], [0], [0]>} : vector<1x8x8xbf16>, vector<1x8x8xbf16>, vector<1x8x8xf32> -> vector<1x8x8xf32>
    "tpu.trace_stop"() : () -> ()
    %141 = tpu.concatenate %74, %96, %118, %140 in 2 : vector<1x8x8xf32>, vector<1x8x8xf32>, vector<1x8x8xf32>, vector<1x8x8xf32> -> vector<1x8x32xf32>
    %142 = vector.shape_cast %141 : vector<1x8x32xf32> to vector<8x32xf32>
    %143 = arith.truncf %142 : vector<8x32xf32> to vector<8x32xbf16>
    %c96 = arith.constant 96 : index
    %c0_43 = arith.constant 0 : index
    %144 = vector.load %arg5[%c96, %c0_43] : memref<608x128xbf16, #tpu.memory_space<vmem>>, vector<32x32xbf16>
    %cst_44 = arith.constant dense<0.000000e+00> : vector<8x32xf32>
    %145 = tpu.matmul %143, %144, %cst_44 {dimension_numbers = #tpu.dot_dimension_numbers<[1], [0], [0], [1], [0, 0, 1, 1], [], []>} : vector<8x32xbf16>, vector<32x32xbf16>, vector<8x32xf32> -> vector<8x32xf32>
    %c3 = arith.constant 3 : index
    %c0_45 = arith.constant 0 : index
    %146 = vector.load %arg4[%c3, %c0_45] : memref<40x128xf32, #tpu.memory_space<vmem>>, vector<1x32xf32>
    %147 = vector.broadcast %146 : vector<1x32xf32> to vector<8x32xf32>
    %148 = arith.addf %145, %147 : vector<8x32xf32>
    %149 = arith.addf %38, %148 : vector<8x32xf32>
    %c4 = arith.constant 4 : index
    %c0_46 = arith.constant 0 : index
    %150 = vector.load %arg4[%c4, %c0_46] : memref<40x128xf32, #tpu.memory_space<vmem>>, vector<1x32xf32>
    %c5 = arith.constant 5 : index
    %c0_47 = arith.constant 0 : index
    %151 = vector.load %arg4[%c5, %c0_47] : memref<40x128xf32, #tpu.memory_space<vmem>>, vector<1x32xf32>
    %cst_48 = arith.constant dense<0.000000e+00> : vector<8xf32>
    %152 = vector.multi_reduction <add>, %149, %cst_48 [1] : vector<8x32xf32> to vector<8xf32>
    %153 = vector.shape_cast %152 : vector<8xf32> to vector<8x1xf32>
    %cst_49 = arith.constant 3.200000e+01 : f32
    %154 = vector.broadcast %cst_49 : f32 to vector<8x1xf32>
    %155 = arith.divf %153, %154 : vector<8x1xf32>
    %156 = vector.broadcast %155 : vector<8x1xf32> to vector<8x32xf32>
    %157 = arith.subf %149, %156 : vector<8x32xf32>
    %158 = arith.mulf %157, %157 : vector<8x32xf32>
    %cst_50 = arith.constant dense<0.000000e+00> : vector<8xf32>
    %159 = vector.multi_reduction <add>, %158, %cst_50 [1] : vector<8x32xf32> to vector<8xf32>
    %160 = vector.shape_cast %159 : vector<8xf32> to vector<8x1xf32>
    %cst_51 = arith.constant 3.200000e+01 : f32
    %161 = vector.broadcast %cst_51 : f32 to vector<8x1xf32>
    %162 = arith.divf %160, %161 : vector<8x1xf32>
    %163 = vector.broadcast %155 : vector<8x1xf32> to vector<8x32xf32>
    %164 = arith.subf %149, %163 : vector<8x32xf32>
    %cst_52 = arith.constant 9.99999996E-13 : f32
    %165 = vector.broadcast %cst_52 : f32 to vector<8x1xf32>
    %166 = arith.addf %162, %165 : vector<8x1xf32>
    %167 = math.rsqrt %166 : vector<8x1xf32>
    %168 = vector.broadcast %167 : vector<8x1xf32> to vector<8x32xf32>
    %169 = arith.mulf %164, %168 : vector<8x32xf32>
    %170 = vector.broadcast %150 : vector<1x32xf32> to vector<8x32xf32>
    %171 = arith.mulf %169, %170 : vector<8x32xf32>
    %172 = vector.broadcast %151 : vector<1x32xf32> to vector<8x32xf32>
    %173 = arith.addf %171, %172 : vector<8x32xf32>
    %174 = arith.truncf %173 : vector<8x32xf32> to vector<8x32xbf16>
    %c128 = arith.constant 128 : index
    %c0_53 = arith.constant 0 : index
    %175 = vector.load %arg5[%c128, %c0_53] : memref<608x128xbf16, #tpu.memory_space<vmem>>, vector<32x128xbf16>
    %cst_54 = arith.constant dense<0.000000e+00> : vector<8x128xf32>
    %176 = tpu.matmul %174, %175, %cst_54 {dimension_numbers = #tpu.dot_dimension_numbers<[1], [0], [0], [1], [0, 0, 1, 1], [], []>} : vector<8x32xbf16>, vector<32x128xbf16>, vector<8x128xf32> -> vector<8x128xf32>
    %c6 = arith.constant 6 : index
    %c0_55 = arith.constant 0 : index
    %177 = vector.load %arg4[%c6, %c0_55] : memref<40x128xf32, #tpu.memory_space<vmem>>, vector<1x128xf32>
    %178 = vector.broadcast %177 : vector<1x128xf32> to vector<8x128xf32>
    %179 = arith.addf %176, %178 : vector<8x128xf32>
    %cst_56 = arith.constant 5.000000e-01 : f32
    %180 = vector.broadcast %cst_56 : f32 to vector<8x128xf32>
    %181 = arith.mulf %180, %179 : vector<8x128xf32>
    %cst_57 = arith.constant 4.471500e-02 : f32
    %182 = vector.broadcast %cst_57 : f32 to vector<8x128xf32>
    %183 = arith.mulf %182, %179 : vector<8x128xf32>
    %184 = arith.mulf %183, %179 : vector<8x128xf32>
    %185 = arith.mulf %184, %179 : vector<8x128xf32>
    %186 = arith.addf %179, %185 : vector<8x128xf32>
    %cst_58 = arith.constant 0.797884583 : f32
    %187 = vector.broadcast %cst_58 : f32 to vector<8x128xf32>
    %188 = arith.mulf %187, %186 : vector<8x128xf32>
    %189 = math.tanh %188 : vector<8x128xf32>
    %cst_59 = arith.constant 1.000000e+00 : f32
    %190 = vector.broadcast %cst_59 : f32 to vector<8x128xf32>
    %191 = arith.addf %190, %189 : vector<8x128xf32>
    %192 = arith.mulf %181, %191 : vector<8x128xf32>
    %193 = arith.truncf %192 : vector<8x128xf32> to vector<8x128xbf16>
    %c160 = arith.constant 160 : index
    %c0_60 = arith.constant 0 : index
    %194 = vector.load %arg5[%c160, %c0_60] : memref<608x128xbf16, #tpu.memory_space<vmem>>, vector<128x32xbf16>
    %cst_61 = arith.constant dense<0.000000e+00> : vector<8x32xf32>
    %195 = tpu.matmul %193, %194, %cst_61 {dimension_numbers = #tpu.dot_dimension_numbers<[1], [0], [0], [1], [0, 0, 1, 1], [], []>} : vector<8x128xbf16>, vector<128x32xbf16>, vector<8x32xf32> -> vector<8x32xf32>
    %c7 = arith.constant 7 : index
    %c0_62 = arith.constant 0 : index
    %196 = vector.load %arg4[%c7, %c0_62] : memref<40x128xf32, #tpu.memory_space<vmem>>, vector<1x32xf32>
    %197 = vector.broadcast %196 : vector<1x32xf32> to vector<8x32xf32>
    %198 = arith.addf %195, %197 : vector<8x32xf32>
    %199 = arith.addf %173, %198 : vector<8x32xf32>
    %c8 = arith.constant 8 : index
    %c0_63 = arith.constant 0 : index
    %200 = vector.load %arg4[%c8, %c0_63] : memref<40x128xf32, #tpu.memory_space<vmem>>, vector<1x32xf32>
    %c9 = arith.constant 9 : index
    %c0_64 = arith.constant 0 : index
    %201 = vector.load %arg4[%c9, %c0_64] : memref<40x128xf32, #tpu.memory_space<vmem>>, vector<1x32xf32>
    %cst_65 = arith.constant dense<0.000000e+00> : vector<8xf32>
    %202 = vector.multi_reduction <add>, %199, %cst_65 [1] : vector<8x32xf32> to vector<8xf32>
    %203 = vector.shape_cast %202 : vector<8xf32> to vector<8x1xf32>
    %cst_66 = arith.constant 3.200000e+01 : f32
    %204 = vector.broadcast %cst_66 : f32 to vector<8x1xf32>
    %205 = arith.divf %203, %204 : vector<8x1xf32>
    %206 = vector.broadcast %205 : vector<8x1xf32> to vector<8x32xf32>
    %207 = arith.subf %199, %206 : vector<8x32xf32>
    %208 = arith.mulf %207, %207 : vector<8x32xf32>
    %cst_67 = arith.constant dense<0.000000e+00> : vector<8xf32>
    %209 = vector.multi_reduction <add>, %208, %cst_67 [1] : vector<8x32xf32> to vector<8xf32>
    %210 = vector.shape_cast %209 : vector<8xf32> to vector<8x1xf32>
    %cst_68 = arith.constant 3.200000e+01 : f32
    %211 = vector.broadcast %cst_68 : f32 to vector<8x1xf32>
    %212 = arith.divf %210, %211 : vector<8x1xf32>
    %213 = vector.broadcast %205 : vector<8x1xf32> to vector<8x32xf32>
    %214 = arith.subf %199, %213 : vector<8x32xf32>
    %cst_69 = arith.constant 9.99999996E-13 : f32
    %215 = vector.broadcast %cst_69 : f32 to vector<8x1xf32>
    %216 = arith.addf %212, %215 : vector<8x1xf32>
    %217 = math.rsqrt %216 : vector<8x1xf32>
    %218 = vector.broadcast %217 : vector<8x1xf32> to vector<8x32xf32>
    %219 = arith.mulf %214, %218 : vector<8x32xf32>
    %220 = vector.broadcast %200 : vector<1x32xf32> to vector<8x32xf32>
    %221 = arith.mulf %219, %220 : vector<8x32xf32>
    %222 = vector.broadcast %201 : vector<1x32xf32> to vector<8x32xf32>
    %223 = arith.addf %221, %222 : vector<8x32xf32>
    %224 = arith.truncf %223 : vector<8x32xf32> to vector<8x32xbf16>
    %c288 = arith.constant 288 : index
    %c0_70 = arith.constant 0 : index
    %225 = vector.load %arg5[%c288, %c0_70] : memref<608x128xbf16, #tpu.memory_space<vmem>>, vector<32x128xbf16>
    %cst_71 = arith.constant dense<0.000000e+00> : vector<8x128xf32>
    %226 = tpu.matmul %224, %225, %cst_71 {dimension_numbers = #tpu.dot_dimension_numbers<[1], [0], [0], [1], [0, 0, 1, 1], [], []>} : vector<8x32xbf16>, vector<32x128xbf16>, vector<8x128xf32> -> vector<8x128xf32>
    %c10 = arith.constant 10 : index
    %c0_72 = arith.constant 0 : index
    %227 = vector.load %arg4[%c10, %c0_72] : memref<40x128xf32, #tpu.memory_space<vmem>>, vector<1x128xf32>
    %228 = vector.broadcast %227 : vector<1x128xf32> to vector<8x128xf32>
    %229 = arith.addf %226, %228 : vector<8x128xf32>
    %230 = vector.shape_cast %229 : vector<8x128xf32> to vector<1x8x128xf32>
    %231 = vector.extract_strided_slice %230 {offsets = [0, 0, 0], sizes = [1, 8, 8], strides = [1, 1, 1]} : vector<1x8x128xf32> to vector<1x8x8xf32>
    %232 = arith.truncf %231 : vector<1x8x8xf32> to vector<1x8x8xbf16>
    %233 = vector.extract_strided_slice %230 {offsets = [0, 0, 32], sizes = [1, 8, 8], strides = [1, 1, 1]} : vector<1x8x128xf32> to vector<1x8x8xf32>
    %234 = arith.truncf %233 : vector<1x8x8xf32> to vector<1x8x8xbf16>
    %235 = vector.extract_strided_slice %230 {offsets = [0, 0, 64], sizes = [1, 8, 8], strides = [1, 1, 1]} : vector<1x8x128xf32> to vector<1x8x8xf32>
    %236 = arith.truncf %235 : vector<1x8x8xf32> to vector<1x8x8xbf16>
    "tpu.trace_start"() <{level = 10 : i32, message = "bqd,bkd->bqk"}> : () -> ()
    %cst_73 = arith.constant dense<0.000000e+00> : vector<1x8x8xf32>
    %237 = tpu.matmul %232, %234, %cst_73 {dimension_numbers = #tpu.dot_dimension_numbers<[2], [2], [1], [1], [0, 0, 0, 1, 1, 1], [0], [0]>} : vector<1x8x8xbf16>, vector<1x8x8xbf16>, vector<1x8x8xf32> -> vector<1x8x8xf32>
    "tpu.trace_stop"() : () -> ()
    %cst_74 = arith.constant 0.353553385 : f32
    %238 = vector.broadcast %cst_74 : f32 to vector<1x8x8xf32>
    %239 = arith.mulf %237, %238 : vector<1x8x8xf32>
    %240 = arith.addf %239, %45 : vector<1x8x8xf32>
    %cst_75 = arith.constant dense<0xFF800000> : vector<1x8xf32>
    %241 = vector.multi_reduction <maximumf>, %240, %cst_75 [2] : vector<1x8x8xf32> to vector<1x8xf32>
    %242 = vector.shape_cast %241 : vector<1x8xf32> to vector<1x8x1xf32>
    %243 = vector.broadcast %242 : vector<1x8x1xf32> to vector<1x8x8xf32>
    %244 = arith.subf %240, %243 : vector<1x8x8xf32>
    %245 = math.exp %244 : vector<1x8x8xf32>
    %cst_76 = arith.constant dense<0.000000e+00> : vector<1x8xf32>
    %246 = vector.multi_reduction <add>, %245, %cst_76 [2] : vector<1x8x8xf32> to vector<1x8xf32>
    %247 = vector.shape_cast %246 : vector<1x8xf32> to vector<1x8x1xf32>
    %248 = tpu.reciprocal %247 {approx = true} : vector<1x8x1xf32> -> vector<1x8x1xf32>
    %249 = vector.broadcast %248 : vector<1x8x1xf32> to vector<1x8x8xf32>
    %250 = arith.mulf %245, %249 : vector<1x8x8xf32>
    %251 = arith.truncf %250 : vector<1x8x8xf32> to vector<1x8x8xbf16>
    "tpu.trace_start"() <{level = 10 : i32, message = "bqk,bkd->bqd"}> : () -> ()
    %cst_77 = arith.constant dense<0.000000e+00> : vector<1x8x8xf32>
    %252 = tpu.matmul %251, %236, %cst_77 {dimension_numbers = #tpu.dot_dimension_numbers<[2], [1], [1], [2], [0, 0, 0, 1, 1, 2], [0], [0]>} : vector<1x8x8xbf16>, vector<1x8x8xbf16>, vector<1x8x8xf32> -> vector<1x8x8xf32>
    "tpu.trace_stop"() : () -> ()
    %253 = vector.extract_strided_slice %230 {offsets = [0, 0, 8], sizes = [1, 8, 8], strides = [1, 1, 1]} : vector<1x8x128xf32> to vector<1x8x8xf32>
    %254 = arith.truncf %253 : vector<1x8x8xf32> to vector<1x8x8xbf16>
    %255 = vector.extract_strided_slice %230 {offsets = [0, 0, 40], sizes = [1, 8, 8], strides = [1, 1, 1]} : vector<1x8x128xf32> to vector<1x8x8xf32>
    %256 = arith.truncf %255 : vector<1x8x8xf32> to vector<1x8x8xbf16>
    %257 = vector.extract_strided_slice %230 {offsets = [0, 0, 72], sizes = [1, 8, 8], strides = [1, 1, 1]} : vector<1x8x128xf32> to vector<1x8x8xf32>
    %258 = arith.truncf %257 : vector<1x8x8xf32> to vector<1x8x8xbf16>
    "tpu.trace_start"() <{level = 10 : i32, message = "bqd,bkd->bqk"}> : () -> ()
    %cst_78 = arith.constant dense<0.000000e+00> : vector<1x8x8xf32>
    %259 = tpu.matmul %254, %256, %cst_78 {dimension_numbers = #tpu.dot_dimension_numbers<[2], [2], [1], [1], [0, 0, 0, 1, 1, 1], [0], [0]>} : vector<1x8x8xbf16>, vector<1x8x8xbf16>, vector<1x8x8xf32> -> vector<1x8x8xf32>
    "tpu.trace_stop"() : () -> ()
    %cst_79 = arith.constant 0.353553385 : f32
    %260 = vector.broadcast %cst_79 : f32 to vector<1x8x8xf32>
    %261 = arith.mulf %259, %260 : vector<1x8x8xf32>
    %262 = arith.addf %261, %45 : vector<1x8x8xf32>
    %cst_80 = arith.constant dense<0xFF800000> : vector<1x8xf32>
    %263 = vector.multi_reduction <maximumf>, %262, %cst_80 [2] : vector<1x8x8xf32> to vector<1x8xf32>
    %264 = vector.shape_cast %263 : vector<1x8xf32> to vector<1x8x1xf32>
    %265 = vector.broadcast %264 : vector<1x8x1xf32> to vector<1x8x8xf32>
    %266 = arith.subf %262, %265 : vector<1x8x8xf32>
    %267 = math.exp %266 : vector<1x8x8xf32>
    %cst_81 = arith.constant dense<0.000000e+00> : vector<1x8xf32>
    %268 = vector.multi_reduction <add>, %267, %cst_81 [2] : vector<1x8x8xf32> to vector<1x8xf32>
    %269 = vector.shape_cast %268 : vector<1x8xf32> to vector<1x8x1xf32>
    %270 = tpu.reciprocal %269 {approx = true} : vector<1x8x1xf32> -> vector<1x8x1xf32>
    %271 = vector.broadcast %270 : vector<1x8x1xf32> to vector<1x8x8xf32>
    %272 = arith.mulf %267, %271 : vector<1x8x8xf32>
    %273 = arith.truncf %272 : vector<1x8x8xf32> to vector<1x8x8xbf16>
    "tpu.trace_start"() <{level = 10 : i32, message = "bqk,bkd->bqd"}> : () -> ()
    %cst_82 = arith.constant dense<0.000000e+00> : vector<1x8x8xf32>
    %274 = tpu.matmul %273, %258, %cst_82 {dimension_numbers = #tpu.dot_dimension_numbers<[2], [1], [1], [2], [0, 0, 0, 1, 1, 2], [0], [0]>} : vector<1x8x8xbf16>, vector<1x8x8xbf16>, vector<1x8x8xf32> -> vector<1x8x8xf32>
    "tpu.trace_stop"() : () -> ()
    %275 = vector.extract_strided_slice %230 {offsets = [0, 0, 16], sizes = [1, 8, 8], strides = [1, 1, 1]} : vector<1x8x128xf32> to vector<1x8x8xf32>
    %276 = arith.truncf %275 : vector<1x8x8xf32> to vector<1x8x8xbf16>
    %277 = vector.extract_strided_slice %230 {offsets = [0, 0, 48], sizes = [1, 8, 8], strides = [1, 1, 1]} : vector<1x8x128xf32> to vector<1x8x8xf32>
    %278 = arith.truncf %277 : vector<1x8x8xf32> to vector<1x8x8xbf16>
    %279 = vector.extract_strided_slice %230 {offsets = [0, 0, 80], sizes = [1, 8, 8], strides = [1, 1, 1]} : vector<1x8x128xf32> to vector<1x8x8xf32>
    %280 = arith.truncf %279 : vector<1x8x8xf32> to vector<1x8x8xbf16>
    "tpu.trace_start"() <{level = 10 : i32, message = "bqd,bkd->bqk"}> : () -> ()
    %cst_83 = arith.constant dense<0.000000e+00> : vector<1x8x8xf32>
    %281 = tpu.matmul %276, %278, %cst_83 {dimension_numbers = #tpu.dot_dimension_numbers<[2], [2], [1], [1], [0, 0, 0, 1, 1, 1], [0], [0]>} : vector<1x8x8xbf16>, vector<1x8x8xbf16>, vector<1x8x8xf32> -> vector<1x8x8xf32>
    "tpu.trace_stop"() : () -> ()
    %cst_84 = arith.constant 0.353553385 : f32
    %282 = vector.broadcast %cst_84 : f32 to vector<1x8x8xf32>
    %283 = arith.mulf %281, %282 : vector<1x8x8xf32>
    %284 = arith.addf %283, %45 : vector<1x8x8xf32>
    %cst_85 = arith.constant dense<0xFF800000> : vector<1x8xf32>
    %285 = vector.multi_reduction <maximumf>, %284, %cst_85 [2] : vector<1x8x8xf32> to vector<1x8xf32>
    %286 = vector.shape_cast %285 : vector<1x8xf32> to vector<1x8x1xf32>
    %287 = vector.broadcast %286 : vector<1x8x1xf32> to vector<1x8x8xf32>
    %288 = arith.subf %284, %287 : vector<1x8x8xf32>
    %289 = math.exp %288 : vector<1x8x8xf32>
    %cst_86 = arith.constant dense<0.000000e+00> : vector<1x8xf32>
    %290 = vector.multi_reduction <add>, %289, %cst_86 [2] : vector<1x8x8xf32> to vector<1x8xf32>
    %291 = vector.shape_cast %290 : vector<1x8xf32> to vector<1x8x1xf32>
    %292 = tpu.reciprocal %291 {approx = true} : vector<1x8x1xf32> -> vector<1x8x1xf32>
    %293 = vector.broadcast %292 : vector<1x8x1xf32> to vector<1x8x8xf32>
    %294 = arith.mulf %289, %293 : vector<1x8x8xf32>
    %295 = arith.truncf %294 : vector<1x8x8xf32> to vector<1x8x8xbf16>
    "tpu.trace_start"() <{level = 10 : i32, message = "bqk,bkd->bqd"}> : () -> ()
    %cst_87 = arith.constant dense<0.000000e+00> : vector<1x8x8xf32>
    %296 = tpu.matmul %295, %280, %cst_87 {dimension_numbers = #tpu.dot_dimension_numbers<[2], [1], [1], [2], [0, 0, 0, 1, 1, 2], [0], [0]>} : vector<1x8x8xbf16>, vector<1x8x8xbf16>, vector<1x8x8xf32> -> vector<1x8x8xf32>
    "tpu.trace_stop"() : () -> ()
    %297 = vector.extract_strided_slice %230 {offsets = [0, 0, 24], sizes = [1, 8, 8], strides = [1, 1, 1]} : vector<1x8x128xf32> to vector<1x8x8xf32>
    %298 = arith.truncf %297 : vector<1x8x8xf32> to vector<1x8x8xbf16>
    %299 = vector.extract_strided_slice %230 {offsets = [0, 0, 56], sizes = [1, 8, 8], strides = [1, 1, 1]} : vector<1x8x128xf32> to vector<1x8x8xf32>
    %300 = arith.truncf %299 : vector<1x8x8xf32> to vector<1x8x8xbf16>
    %301 = vector.extract_strided_slice %230 {offsets = [0, 0, 88], sizes = [1, 8, 8], strides = [1, 1, 1]} : vector<1x8x128xf32> to vector<1x8x8xf32>
    %302 = arith.truncf %301 : vector<1x8x8xf32> to vector<1x8x8xbf16>
    "tpu.trace_start"() <{level = 10 : i32, message = "bqd,bkd->bqk"}> : () -> ()
    %cst_88 = arith.constant dense<0.000000e+00> : vector<1x8x8xf32>
    %303 = tpu.matmul %298, %300, %cst_88 {dimension_numbers = #tpu.dot_dimension_numbers<[2], [2], [1], [1], [0, 0, 0, 1, 1, 1], [0], [0]>} : vector<1x8x8xbf16>, vector<1x8x8xbf16>, vector<1x8x8xf32> -> vector<1x8x8xf32>
    "tpu.trace_stop"() : () -> ()
    %cst_89 = arith.constant 0.353553385 : f32
    %304 = vector.broadcast %cst_89 : f32 to vector<1x8x8xf32>
    %305 = arith.mulf %303, %304 : vector<1x8x8xf32>
    %306 = arith.addf %305, %45 : vector<1x8x8xf32>
    %cst_90 = arith.constant dense<0xFF800000> : vector<1x8xf32>
    %307 = vector.multi_reduction <maximumf>, %306, %cst_90 [2] : vector<1x8x8xf32> to vector<1x8xf32>
    %308 = vector.shape_cast %307 : vector<1x8xf32> to vector<1x8x1xf32>
    %309 = vector.broadcast %308 : vector<1x8x1xf32> to vector<1x8x8xf32>
    %310 = arith.subf %306, %309 : vector<1x8x8xf32>
    %311 = math.exp %310 : vector<1x8x8xf32>
    %cst_91 = arith.constant dense<0.000000e+00> : vector<1x8xf32>
    %312 = vector.multi_reduction <add>, %311, %cst_91 [2] : vector<1x8x8xf32> to vector<1x8xf32>
    %313 = vector.shape_cast %312 : vector<1x8xf32> to vector<1x8x1xf32>
    %314 = tpu.reciprocal %313 {approx = true} : vector<1x8x1xf32> -> vector<1x8x1xf32>
    %315 = vector.broadcast %314 : vector<1x8x1xf32> to vector<1x8x8xf32>
    %316 = arith.mulf %311, %315 : vector<1x8x8xf32>
    %317 = arith.truncf %316 : vector<1x8x8xf32> to vector<1x8x8xbf16>
    "tpu.trace_start"() <{level = 10 : i32, message = "bqk,bkd->bqd"}> : () -> ()
    %cst_92 = arith.constant dense<0.000000e+00> : vector<1x8x8xf32>
    %318 = tpu.matmul %317, %302, %cst_92 {dimension_numbers = #tpu.dot_dimension_numbers<[2], [1], [1], [2], [0, 0, 0, 1, 1, 2], [0], [0]>} : vector<1x8x8xbf16>, vector<1x8x8xbf16>, vector<1x8x8xf32> -> vector<1x8x8xf32>
    "tpu.trace_stop"() : () -> ()
    %319 = tpu.concatenate %252, %274, %296, %318 in 2 : vector<1x8x8xf32>, vector<1x8x8xf32>, vector<1x8x8xf32>, vector<1x8x8xf32> -> vector<1x8x32xf32>
    %320 = vector.shape_cast %319 : vector<1x8x32xf32> to vector<8x32xf32>
    %321 = arith.truncf %320 : vector<8x32xf32> to vector<8x32xbf16>
    %c320 = arith.constant 320 : index
    %c0_93 = arith.constant 0 : index
    %322 = vector.load %arg5[%c320, %c0_93] : memref<608x128xbf16, #tpu.memory_space<vmem>>, vector<32x32xbf16>
    %cst_94 = arith.constant dense<0.000000e+00> : vector<8x32xf32>
    %323 = tpu.matmul %321, %322, %cst_94 {dimension_numbers = #tpu.dot_dimension_numbers<[1], [0], [0], [1], [0, 0, 1, 1], [], []>} : vector<8x32xbf16>, vector<32x32xbf16>, vector<8x32xf32> -> vector<8x32xf32>
    %c11 = arith.constant 11 : index
    %c0_95 = arith.constant 0 : index
    %324 = vector.load %arg4[%c11, %c0_95] : memref<40x128xf32, #tpu.memory_space<vmem>>, vector<1x32xf32>
    %325 = vector.broadcast %324 : vector<1x32xf32> to vector<8x32xf32>
    %326 = arith.addf %323, %325 : vector<8x32xf32>
    %327 = arith.addf %223, %326 : vector<8x32xf32>
    %c12 = arith.constant 12 : index
    %c0_96 = arith.constant 0 : index
    %328 = vector.load %arg4[%c12, %c0_96] : memref<40x128xf32, #tpu.memory_space<vmem>>, vector<1x32xf32>
    %c13 = arith.constant 13 : index
    %c0_97 = arith.constant 0 : index
    %329 = vector.load %arg4[%c13, %c0_97] : memref<40x128xf32, #tpu.memory_space<vmem>>, vector<1x32xf32>
    %cst_98 = arith.constant dense<0.000000e+00> : vector<8xf32>
    %330 = vector.multi_reduction <add>, %327, %cst_98 [1] : vector<8x32xf32> to vector<8xf32>
    %331 = vector.shape_cast %330 : vector<8xf32> to vector<8x1xf32>
    %cst_99 = arith.constant 3.200000e+01 : f32
    %332 = vector.broadcast %cst_99 : f32 to vector<8x1xf32>
    %333 = arith.divf %331, %332 : vector<8x1xf32>
    %334 = vector.broadcast %333 : vector<8x1xf32> to vector<8x32xf32>
    %335 = arith.subf %327, %334 : vector<8x32xf32>
    %336 = arith.mulf %335, %335 : vector<8x32xf32>
    %cst_100 = arith.constant dense<0.000000e+00> : vector<8xf32>
    %337 = vector.multi_reduction <add>, %336, %cst_100 [1] : vector<8x32xf32> to vector<8xf32>
    %338 = vector.shape_cast %337 : vector<8xf32> to vector<8x1xf32>
    %cst_101 = arith.constant 3.200000e+01 : f32
    %339 = vector.broadcast %cst_101 : f32 to vector<8x1xf32>
    %340 = arith.divf %338, %339 : vector<8x1xf32>
    %341 = vector.broadcast %333 : vector<8x1xf32> to vector<8x32xf32>
    %342 = arith.subf %327, %341 : vector<8x32xf32>
    %cst_102 = arith.constant 9.99999996E-13 : f32
    %343 = vector.broadcast %cst_102 : f32 to vector<8x1xf32>
    %344 = arith.addf %340, %343 : vector<8x1xf32>
    %345 = math.rsqrt %344 : vector<8x1xf32>
    %346 = vector.broadcast %345 : vector<8x1xf32> to vector<8x32xf32>
    %347 = arith.mulf %342, %346 : vector<8x32xf32>
    %348 = vector.broadcast %328 : vector<1x32xf32> to vector<8x32xf32>
    %349 = arith.mulf %347, %348 : vector<8x32xf32>
    %350 = vector.broadcast %329 : vector<1x32xf32> to vector<8x32xf32>
    %351 = arith.addf %349, %350 : vector<8x32xf32>
    %352 = arith.truncf %351 : vector<8x32xf32> to vector<8x32xbf16>
    %c352 = arith.constant 352 : index
    %c0_103 = arith.constant 0 : index
    %353 = vector.load %arg5[%c352, %c0_103] : memref<608x128xbf16, #tpu.memory_space<vmem>>, vector<32x128xbf16>
    %cst_104 = arith.constant dense<0.000000e+00> : vector<8x128xf32>
    %354 = tpu.matmul %352, %353, %cst_104 {dimension_numbers = #tpu.dot_dimension_numbers<[1], [0], [0], [1], [0, 0, 1, 1], [], []>} : vector<8x32xbf16>, vector<32x128xbf16>, vector<8x128xf32> -> vector<8x128xf32>
    %c14 = arith.constant 14 : index
    %c0_105 = arith.constant 0 : index
    %355 = vector.load %arg4[%c14, %c0_105] : memref<40x128xf32, #tpu.memory_space<vmem>>, vector<1x128xf32>
    %356 = vector.broadcast %355 : vector<1x128xf32> to vector<8x128xf32>
    %357 = arith.addf %354, %356 : vector<8x128xf32>
    %cst_106 = arith.constant 5.000000e-01 : f32
    %358 = vector.broadcast %cst_106 : f32 to vector<8x128xf32>
    %359 = arith.mulf %358, %357 : vector<8x128xf32>
    %cst_107 = arith.constant 4.471500e-02 : f32
    %360 = vector.broadcast %cst_107 : f32 to vector<8x128xf32>
    %361 = arith.mulf %360, %357 : vector<8x128xf32>
    %362 = arith.mulf %361, %357 : vector<8x128xf32>
    %363 = arith.mulf %362, %357 : vector<8x128xf32>
    %364 = arith.addf %357, %363 : vector<8x128xf32>
    %cst_108 = arith.constant 0.797884583 : f32
    %365 = vector.broadcast %cst_108 : f32 to vector<8x128xf32>
    %366 = arith.mulf %365, %364 : vector<8x128xf32>
    %367 = math.tanh %366 : vector<8x128xf32>
    %cst_109 = arith.constant 1.000000e+00 : f32
    %368 = vector.broadcast %cst_109 : f32 to vector<8x128xf32>
    %369 = arith.addf %368, %367 : vector<8x128xf32>
    %370 = arith.mulf %359, %369 : vector<8x128xf32>
    %371 = arith.truncf %370 : vector<8x128xf32> to vector<8x128xbf16>
    %c384 = arith.constant 384 : index
    %c0_110 = arith.constant 0 : index
    %372 = vector.load %arg5[%c384, %c0_110] : memref<608x128xbf16, #tpu.memory_space<vmem>>, vector<128x32xbf16>
    %cst_111 = arith.constant dense<0.000000e+00> : vector<8x32xf32>
    %373 = tpu.matmul %371, %372, %cst_111 {dimension_numbers = #tpu.dot_dimension_numbers<[1], [0], [0], [1], [0, 0, 1, 1], [], []>} : vector<8x128xbf16>, vector<128x32xbf16>, vector<8x32xf32> -> vector<8x32xf32>
    %c15 = arith.constant 15 : index
    %c0_112 = arith.constant 0 : index
    %374 = vector.load %arg4[%c15, %c0_112] : memref<40x128xf32, #tpu.memory_space<vmem>>, vector<1x32xf32>
    %375 = vector.broadcast %374 : vector<1x32xf32> to vector<8x32xf32>
    %376 = arith.addf %373, %375 : vector<8x32xf32>
    %377 = arith.addf %351, %376 : vector<8x32xf32>
    %c16 = arith.constant 16 : index
    %c0_113 = arith.constant 0 : index
    %378 = vector.load %arg4[%c16, %c0_113] : memref<40x128xf32, #tpu.memory_space<vmem>>, vector<1x32xf32>
    %c17 = arith.constant 17 : index
    %c0_114 = arith.constant 0 : index
    %379 = vector.load %arg4[%c17, %c0_114] : memref<40x128xf32, #tpu.memory_space<vmem>>, vector<1x32xf32>
    %cst_115 = arith.constant dense<0.000000e+00> : vector<8xf32>
    %380 = vector.multi_reduction <add>, %377, %cst_115 [1] : vector<8x32xf32> to vector<8xf32>
    %381 = vector.shape_cast %380 : vector<8xf32> to vector<8x1xf32>
    %cst_116 = arith.constant 3.200000e+01 : f32
    %382 = vector.broadcast %cst_116 : f32 to vector<8x1xf32>
    %383 = arith.divf %381, %382 : vector<8x1xf32>
    %384 = vector.broadcast %383 : vector<8x1xf32> to vector<8x32xf32>
    %385 = arith.subf %377, %384 : vector<8x32xf32>
    %386 = arith.mulf %385, %385 : vector<8x32xf32>
    %cst_117 = arith.constant dense<0.000000e+00> : vector<8xf32>
    %387 = vector.multi_reduction <add>, %386, %cst_117 [1] : vector<8x32xf32> to vector<8xf32>
    %388 = vector.shape_cast %387 : vector<8xf32> to vector<8x1xf32>
    %cst_118 = arith.constant 3.200000e+01 : f32
    %389 = vector.broadcast %cst_118 : f32 to vector<8x1xf32>
    %390 = arith.divf %388, %389 : vector<8x1xf32>
    %391 = vector.broadcast %383 : vector<8x1xf32> to vector<8x32xf32>
    %392 = arith.subf %377, %391 : vector<8x32xf32>
    %cst_119 = arith.constant 9.99999996E-13 : f32
    %393 = vector.broadcast %cst_119 : f32 to vector<8x1xf32>
    %394 = arith.addf %390, %393 : vector<8x1xf32>
    %395 = math.rsqrt %394 : vector<8x1xf32>
    %396 = vector.broadcast %395 : vector<8x1xf32> to vector<8x32xf32>
    %397 = arith.mulf %392, %396 : vector<8x32xf32>
    %398 = vector.broadcast %378 : vector<1x32xf32> to vector<8x32xf32>
    %399 = arith.mulf %397, %398 : vector<8x32xf32>
    %400 = vector.broadcast %379 : vector<1x32xf32> to vector<8x32xf32>
    %401 = arith.addf %399, %400 : vector<8x32xf32>
    %402 = vector.shape_cast %401 : vector<8x32xf32> to vector<1x8x32xf32>
    %403 = vector.extract_strided_slice %402 {offsets = [0, 0, 0], sizes = [1, 1, 32], strides = [1, 1, 1]} : vector<1x8x32xf32> to vector<1x1x32xf32>
    %404 = vector.shape_cast %403 : vector<1x1x32xf32> to vector<1x32xf32>
    %405 = arith.truncf %404 : vector<1x32xf32> to vector<1x32xbf16>
    %c512 = arith.constant 512 : index
    %c0_120 = arith.constant 0 : index
    %406 = vector.load %arg5[%c512, %c0_120] : memref<608x128xbf16, #tpu.memory_space<vmem>>, vector<32x32xbf16>
    %cst_121 = arith.constant dense<0.000000e+00> : vector<1x32xf32>
    %407 = tpu.matmul %405, %406, %cst_121 {dimension_numbers = #tpu.dot_dimension_numbers<[1], [0], [0], [1], [0, 0, 1, 1], [], []>} : vector<1x32xbf16>, vector<32x32xbf16>, vector<1x32xf32> -> vector<1x32xf32>
    %c18 = arith.constant 18 : index
    %c0_122 = arith.constant 0 : index
    %408 = vector.load %arg4[%c18, %c0_122] : memref<40x128xf32, #tpu.memory_space<vmem>>, vector<1x32xf32>
    %409 = arith.addf %407, %408 : vector<1x32xf32>
    %410 = math.tanh %409 : vector<1x32xf32>
    %c0_123 = arith.constant 0 : index
    %c0_124 = arith.constant 0 : index
    %c0_125 = arith.constant 0 : index
    %411 = vector.load %arg3[%c0_123, %c0_124, %c0_125] : memref<1x1x6xf32, #tpu.memory_space<vmem>>, vector<1x1x6xf32>
    %412 = vector.shape_cast %411 : vector<1x1x6xf32> to vector<1x6xf32>
    %413 = arith.truncf %412 : vector<1x6xf32> to vector<1x6xbf16>
    %c544 = arith.constant 544 : index
    %c0_126 = arith.constant 0 : index
    %414 = vector.load %arg5[%c544, %c0_126] : memref<608x128xbf16, #tpu.memory_space<vmem>>, vector<6x8xbf16>
    %cst_127 = arith.constant dense<0.000000e+00> : vector<1x8xf32>
    %415 = tpu.matmul %413, %414, %cst_127 {dimension_numbers = #tpu.dot_dimension_numbers<[1], [0], [0], [1], [0, 0, 1, 1], [], []>} : vector<1x6xbf16>, vector<6x8xbf16>, vector<1x8xf32> -> vector<1x8xf32>
    %c19 = arith.constant 19 : index
    %c0_128 = arith.constant 0 : index
    %416 = vector.load %arg4[%c19, %c0_128] : memref<40x128xf32, #tpu.memory_space<vmem>>, vector<1x8xf32>
    %417 = arith.addf %415, %416 : vector<1x8xf32>
    %cst_129 = arith.constant 0.000000e+00 : f32
    %418 = vector.broadcast %cst_129 : f32 to vector<1x8xf32>
    %419 = arith.maximumf %417, %418 : vector<1x8xf32>
    %420 = arith.truncf %410 : vector<1x32xf32> to vector<1x32xbf16>
    %c552 = arith.constant 552 : index
    %c0_130 = arith.constant 0 : index
    %421 = vector.load %arg5[%c552, %c0_130] : memref<608x128xbf16, #tpu.memory_space<vmem>>, vector<32x16xbf16>
    %cst_131 = arith.constant dense<0.000000e+00> : vector<1x16xf32>
    %422 = tpu.matmul %420, %421, %cst_131 {dimension_numbers = #tpu.dot_dimension_numbers<[1], [0], [0], [1], [0, 0, 1, 1], [], []>} : vector<1x32xbf16>, vector<32x16xbf16>, vector<1x16xf32> -> vector<1x16xf32>
    %423 = arith.truncf %419 : vector<1x8xf32> to vector<1x8xbf16>
    %c584 = arith.constant 584 : index
    %c0_132 = arith.constant 0 : index
    %424 = vector.load %arg5[%c584, %c0_132] : memref<608x128xbf16, #tpu.memory_space<vmem>>, vector<8x16xbf16>
    %cst_133 = arith.constant dense<0.000000e+00> : vector<1x16xf32>
    %425 = tpu.matmul %423, %424, %cst_133 {dimension_numbers = #tpu.dot_dimension_numbers<[1], [0], [0], [1], [0, 0, 1, 1], [], []>} : vector<1x8xbf16>, vector<8x16xbf16>, vector<1x16xf32> -> vector<1x16xf32>
    %426 = arith.addf %422, %425 : vector<1x16xf32>
    %c20 = arith.constant 20 : index
    %c0_134 = arith.constant 0 : index
    %427 = vector.load %arg4[%c20, %c0_134] : memref<40x128xf32, #tpu.memory_space<vmem>>, vector<1x16xf32>
    %428 = arith.addf %426, %427 : vector<1x16xf32>
    %cst_135 = arith.constant 0.000000e+00 : f32
    %429 = vector.broadcast %cst_135 : f32 to vector<1x16xf32>
    %430 = arith.maximumf %428, %429 : vector<1x16xf32>
    %431 = arith.truncf %430 : vector<1x16xf32> to vector<1x16xbf16>
    %c592 = arith.constant 592 : index
    %c0_136 = arith.constant 0 : index
    %432 = vector.load %arg5[%c592, %c0_136] : memref<608x128xbf16, #tpu.memory_space<vmem>>, vector<16x128xbf16>
    %cst_137 = arith.constant dense<0.000000e+00> : vector<1x128xf32>
    %433 = tpu.matmul %431, %432, %cst_137 {dimension_numbers = #tpu.dot_dimension_numbers<[1], [0], [0], [1], [0, 0, 1, 1], [], []>} : vector<1x16xbf16>, vector<16x128xbf16>, vector<1x128xf32> -> vector<1x128xf32>
    %c21 = arith.constant 21 : index
    %c0_138 = arith.constant 0 : index
    %434 = vector.load %arg4[%c21, %c0_138] : memref<40x128xf32, #tpu.memory_space<vmem>>, vector<1x128xf32>
    %435 = arith.addf %433, %434 : vector<1x128xf32>
    %436 = vector.shape_cast %435 : vector<1x128xf32> to vector<1x1x128xf32>
    %c0_139 = arith.constant 0 : index
    %c0_140 = arith.constant 0 : index
    %c0_141 = arith.constant 0 : index
    %437 = vector.load %arg6[%c0_139, %c0_140, %c0_141] : memref<1x1x128xf32, #tpu.memory_space<vmem>>, vector<1x1x128xf32>
    tpu.vector_store %arg6[%c0_139, %c0_140, %c0_141], %436 {strides = array<i32>} : memref<1x1x128xf32, #tpu.memory_space<vmem>>, vector<1x1x128xf32>,
    return
  }
  func.func @transform_0(%arg0: i32) -> (i32, i32, i32) {
    %c0_i32 = arith.constant 0 : i32
    %c0_i32_0 = arith.constant 0 : i32
    %c0_i32_1 = arith.constant 0 : i32
    return %arg0, %c0_i32, %c0_i32_0 : i32, i32, i32
  }
  func.func @transform_1(%arg0: i32) -> (i32, i32, i32) {
    %c0_i32 = arith.constant 0 : i32
    %c0_i32_0 = arith.constant 0 : i32
    %c0_i32_1 = arith.constant 0 : i32
    return %arg0, %c0_i32, %c0_i32_0 : i32, i32, i32
  }
  func.func @transform_2(%arg0: i32) -> (i32, i32, i32) {
    %c0_i32 = arith.constant 0 : i32
    %c0_i32_0 = arith.constant 0 : i32
    %c0_i32_1 = arith.constant 0 : i32
    return %arg0, %c0_i32, %c0_i32_0 : i32, i32, i32
  }
  func.func @transform_3(%arg0: i32) -> (i32, i32) {
    %c0_i32 = arith.constant 0 : i32
    %c0_i32_0 = arith.constant 0 : i32
    %c0_i32_1 = arith.constant 0 : i32
    return %c0_i32, %c0_i32_0 : i32, i32
  }
  func.func @transform_4(%arg0: i32) -> (i32, i32) {
    %c0_i32 = arith.constant 0 : i32
    %c0_i32_0 = arith.constant 0 : i32
    %c0_i32_1 = arith.constant 0 : i32
    return %c0_i32, %c0_i32_0 : i32, i32
  }
  func.func @transform_5(%arg0: i32) -> (i32, i32, i32) {
    %c0_i32 = arith.constant 0 : i32
    %c0_i32_0 = arith.constant 0 : i32
    %c0_i32_1 = arith.constant 0 : i32
    return %arg0, %c0_i32, %c0_i32_0 : i32, i32, i32
  }
}

</mosaic_0001>

<llo_original>
// kernel: forward.1
$region0: #{forward.1}
  #allocation0 [shape = 'u32[]', space=smem, size = 0x4, offset = 0x4, fixed_abs, tag = 'smem constant byte address 0x4 - core index']
  #allocation1 [shape = 'u32[144,128]{1,0:T(1,128)}', space=vmem, size = 0x12000, scoped, tag = 'internal scratch']
  %s0 = inlined_call_operand.vmem [shape: s32[2,8,1], index: 0, kind: input, shape index: {}]
  %s1 = inlined_call_operand.vmem [shape: f32[2,1,8], index: 1, kind: input, shape index: {}]
  %s2 = inlined_call_operand.vmem [shape: f32[2,1,6], index: 2, kind: input, shape index: {}]
  %s3 = inlined_call_operand.hbm [shape: f32[40,128], index: 3, kind: input, shape index: {}]
  %s4 = inlined_call_operand.hbm [shape: bf16[608,128], index: 4, kind: input, shape index: {}]
  %s5 = inlined_call_operand.hbm [shape: f32[2,1,128], index: 5, kind: output, shape index: {}]
  %s6 = sld [smem:[#allocation0]]
  $region61: #{forward.1} parent=0
    _
  %s8 = ssub.s32 1, %s6
  %s9 = scalar_select 0, %s8, %s6
  $region1: #{forward.1} parent=0
    #allocation2 [shape = 'u8[20480]{0}', space=vmem, size = 0x5000, scoped, tag = 'input window, operand 3, single buffered']
    #allocation3 [shape = 's32[2]{0}', space=sflag, size = 0x8, scoped, tag = 'scoped memory for forward.1']
    #allocation4 [shape = 's32[2]{0}', space=sflag, size = 0x8, scoped, tag = 'scoped memory for forward.1']
    #allocation5 [shape = 'u8[155648]{0}', space=vmem, size = 0x26000, scoped, tag = 'input window, operand 4, single buffered']
    #allocation6 [shape = 's32[1]{0}', space=sflag, size = 0x4, scoped, tag = 'scoped memory for forward.1']
    #allocation7 [shape = 'u8[1024]{0}', space=vmem, size = 0x400, scoped, tag = 'output window, operand 0']
    %10 = vsyncpa [#allocation3], 0
    %11 = vsyncpa [#allocation6], 0
    %12 = vsyncpa [#allocation4], 0
    %s13 = scalar_lea.sflag [#allocation4], 1
    %14 = vsyncpa %s13, 0
    loop: start=0, step=1, limit=4
    $region2: #{forward.1} parent=1 // loop_pre_header
      _
    $region3: #{forward.1} parent=1 // loop_header
      %s16 = sphi 0, %s20
      %p17 = scmp.ge.s32.totalorder %s16, 4
      %s26 = sphi 0, %s28
      %s29 = sphi 0, %s26
      %s30 = sphi 0, %s29
      %s46 = sphi 0, %s30
      %s52 = sphi 0, %s54
      %s55 = sphi 0, %s52
      %s56 = sphi 0, %s55
      %s72 = sphi 0, %s56
      %s78 = sphi 0, %s80
      %s81 = sphi 0, %s78
      %s82 = sphi 0, %s81
      %s98 = sphi 0, %s82
      %s102 = sphi 0, %s102
      %s104 = sphi 0, %s102
      %s105 = sphi 0, %s104
      %s119 = sphi 0, %s105
      %s123 = sphi 0, %s123
      %s125 = sphi 0, %s123
      %s126 = sphi 0, %s125
      %s140 = sphi 0, %s126
      %s146 = sphi 0, %s148
      %s149 = sphi 0, %s146
      %s150 = sphi 0, %s149
      %s166 = sphi 0, %s150
    $region4: #{forward.1} parent=1 // loop_header_branch
      %19 = sbr.rel (%p17) target = $region8
    $region5: #{forward.1} parent=1 // loop_body
      %s21 = ssub.s32 %s16, 1
      %s22 = ssub.s32 %s16, 2
      %s23 = sadd.s32 %s16, 1
      %s24 = ssub.s32 %s16, %s23
      %p25 = scmp.eq.s32.totalorder %s24, 0
      %s27 = sadd.s32 %s26, 1
      %s28 = scalar_select %p25, %s26, %s27
      %p31 = pneg %p25
      %p32 = scmp.eq.s32.totalorder %s16, 1
      %p33 = por %p31, %p32
      %p34 = scmp.ne.s32.totalorder %s26, %s29
      %p35 = scmp.eq.s32.totalorder %s16, 0
      %p36 = por %p34, %p35
      %p37 = scmp.ne.s32.totalorder %s26, %s29
      %p38 = scmp.eq.s32.totalorder %s21, 1
      %p39 = por %p37, %p38
      %p40 = scmp.ne.s32.totalorder %s29, %s30
      %p41 = scmp.eq.s32.totalorder %s21, 0
      %p42 = por %p40, %p41
      %p43 = scmp.ne.s32.totalorder %s29, %s30
      %p44 = scmp.eq.s32.totalorder %s22, 1
      %p45 = por %p43, %p44
      %p47 = scmp.ne.s32.totalorder %s30, %s46
      %p48 = scmp.eq.s32.totalorder %s22, 0
      %p49 = por %p47, %p48
      %s50 = ssub.s32 %s16, %s23
      %p51 = scmp.eq.s32.totalorder %s50, 0
      %s53 = sadd.s32 %s52, 1
      %s54 = scalar_select %p51, %s52, %s53
      %p57 = pneg %p51
      %p58 = scmp.eq.s32.totalorder %s16, 1
      %p59 = por %p57, %p58
      %p60 = scmp.ne.s32.totalorder %s52, %s55
      %p61 = scmp.eq.s32.totalorder %s16, 0
      %p62 = por %p60, %p61
      %p63 = scmp.ne.s32.totalorder %s52, %s55
      %p64 = scmp.eq.s32.totalorder %s21, 1
      %p65 = por %p63, %p64
      %p66 = scmp.ne.s32.totalorder %s55, %s56
      %p67 = scmp.eq.s32.totalorder %s21, 0
      %p68 = por %p66, %p67
      %p69 = scmp.ne.s32.totalorder %s55, %s56
      %p70 = scmp.eq.s32.totalorder %s22, 1
      %p71 = por %p69, %p70
      %p73 = scmp.ne.s32.totalorder %s56, %s72
      %p74 = scmp.eq.s32.totalorder %s22, 0
      %p75 = por %p73, %p74
      %s76 = ssub.s32 %s16, %s23
      %p77 = scmp.eq.s32.totalorder %s76, 0
      %s79 = sadd.s32 %s78, 1
      %s80 = scalar_select %p77, %s78, %s79
      %p83 = pneg %p77
      %p84 = scmp.eq.s32.totalorder %s16, 1
      %p85 = por %p83, %p84
      %p86 = scmp.ne.s32.totalorder %s78, %s81
      %p87 = scmp.eq.s32.totalorder %s16, 0
      %p88 = por %p86, %p87
      %p89 = scmp.ne.s32.totalorder %s78, %s81
      %p90 = scmp.eq.s32.totalorder %s21, 1
      %p91 = por %p89, %p90
      %p92 = scmp.ne.s32.totalorder %s81, %s82
      %p93 = scmp.eq.s32.totalorder %s21, 0
      %p94 = por %p92, %p93
      %p95 = scmp.ne.s32.totalorder %s81, %s82
      %p96 = scmp.eq.s32.totalorder %s22, 1
      %p97 = por %p95, %p96
      %p99 = scmp.ne.s32.totalorder %s82, %s98
      %p100 = scmp.eq.s32.totalorder %s22, 0
      %p101 = por %p99, %p100
      %s103 = sadd.s32 %s102, 1
      %p106 = scmp.eq.s32.totalorder %s16, 1
      %p107 = scmp.ne.s32.totalorder %s102, %s104
      %p108 = scmp.eq.s32.totalorder %s16, 0
      %p109 = por %p107, %p108
      %p110 = scmp.ne.s32.totalorder %s102, %s104
      %p111 = scmp.eq.s32.totalorder %s21, 1
      %p112 = por %p110, %p111
      %p113 = scmp.ne.s32.totalorder %s104, %s105
      %p114 = scmp.eq.s32.totalorder %s21, 0
      %p115 = por %p113, %p114
      %p116 = scmp.ne.s32.totalorder %s104, %s105
      %p117 = scmp.eq.s32.totalorder %s22, 1
      %p118 = por %p116, %p117
      %p120 = scmp.ne.s32.totalorder %s105, %s119
      %p121 = scmp.eq.s32.totalorder %s22, 0
      %p122 = por %p120, %p121
      %s124 = sadd.s32 %s123, 1
      %p127 = scmp.eq.s32.totalorder %s16, 1
      %p128 = scmp.ne.s32.totalorder %s123, %s125
      %p129 = scmp.eq.s32.totalorder %s16, 0
      %p130 = por %p128, %p129
      %p131 = scmp.ne.s32.totalorder %s123, %s125
      %p132 = scmp.eq.s32.totalorder %s21, 1
      %p133 = por %p131, %p132
      %p134 = scmp.ne.s32.totalorder %s125, %s126
      %p135 = scmp.eq.s32.totalorder %s21, 0
      %p136 = por %p134, %p135
      %p137 = scmp.ne.s32.totalorder %s125, %s126
      %p138 = scmp.eq.s32.totalorder %s22, 1
      %p139 = por %p137, %p138
      %p141 = scmp.ne.s32.totalorder %s126, %s140
      %p142 = scmp.eq.s32.totalorder %s22, 0
      %p143 = por %p141, %p142
      %s144 = ssub.s32 %s16, %s23
      %p145 = scmp.eq.s32.totalorder %s144, 0
      %s147 = sadd.s32 %s146, 1
      %s148 = scalar_select %p145, %s146, %s147
      %p151 = pneg %p145
      %p152 = scmp.eq.s32.totalorder %s16, 1
      %p153 = por %p151, %p152
      %p154 = scmp.ne.s32.totalorder %s146, %s149
      %p155 = scmp.eq.s32.totalorder %s16, 0
      %p156 = por %p154, %p155
      %p157 = scmp.ne.s32.totalorder %s146, %s149
      %p158 = scmp.eq.s32.totalorder %s21, 1
      %p159 = por %p157, %p158
      %p160 = scmp.ne.s32.totalorder %s149, %s150
      %p161 = scmp.eq.s32.totalorder %s21, 0
      %p162 = por %p160, %p161
      %p163 = scmp.ne.s32.totalorder %s149, %s150
      %p164 = scmp.eq.s32.totalorder %s22, 1
      %p165 = por %p163, %p164
      %p167 = scmp.ne.s32.totalorder %s150, %s166
      %p168 = scmp.eq.s32.totalorder %s22, 0
      %p169 = por %p167, %p168
      %p170 = scmp.le.s32.totalorder 1, %s16
      %p171 = scmp.lt.s32.totalorder %s16, 3
      %p172 = pnand %p170, %p171
      %p173 = pneg %p172
      // Predicated region
      $region9: #{forward.1} parent=5 // pred_check
        _
      $region10: #{forward.1} parent=5 // pred_check_branch
        %175 = sbr.rel (%p172) target = $region12
      $region11: #{forward.1} parent=5 // pred_region
        %s176 = ssub.s32 %s16, 1
        // Predicated region
        $region13: #{forward.1} parent=11 // pred_check
          %p177 = pneg %p115
        $region14: #{forward.1} parent=11 // pred_check_branch
          %179 = sbr.rel (%p177) target = $region16
        $region15: #{forward.1} parent=11 // pred_region
          %s181 = ssub.s32 640, 640
          %182 = vsyncadd [#allocation3], %s181
          %s183 = sshll.u32 [#allocation2], 4
          %s184 = int_to_ptr.vmem [resolvable:$true] %s183
          %189 = dma.hbm_to_vmem [thread:$0]  %s3, 640, %s184, [#allocation3], 128, 128, 8
        $region16: #{forward.1} parent=11 // pred_fallthru
          _
        // Predicated region
        $region17: #{forward.1} parent=11 // pred_check
          %p190 = pneg %p136
        $region18: #{forward.1} parent=11 // pred_check_branch
          %192 = sbr.rel (%p190) target = $region20
        $region19: #{forward.1} parent=11 // pred_region
          %s194 = ssub.s32 4864, 4864
          %195 = vsyncadd [#allocation6], %s194
          %s196 = sshll.u32 [#allocation5], 4
          %s197 = int_to_ptr.vmem [resolvable:$true] %s196
          %202 = dma.hbm_to_vmem [thread:$0]  %s4, 4864, %s197, [#allocation6], 64, 64, 4
        $region20: #{forward.1} parent=11 // pred_fallthru
          _
      $region12: #{forward.1} parent=5 // pred_fallthru
        _
      %p203 = scmp.lt.s32.totalorder %s16, 2
      // Predicated region
      $region21: #{forward.1} parent=5 // pred_check
        %p204 = pneg %p203
      $region22: #{forward.1} parent=5 // pred_check_branch
        %206 = sbr.rel (%p204) target = $region24
      $region23: #{forward.1} parent=5 // pred_region
        // Predicated region
        $region25: #{forward.1} parent=23 // pred_check
          %p207 = pneg %p36
        $region26: #{forward.1} parent=23 // pred_check_branch
          %209 = sbr.rel (%p207) target = $region28
        $region27: #{forward.1} parent=23 // pred_region
          %p210 = scmp.lt.s32.totalorder %s16, 1
          %s211 = scalar_select %p210, %s16, 1
          %s212 = smul.addr %s211, 8
          %s213 = scalar_lea.vmem %s0, %s212
        $region28: #{forward.1} parent=23 // pred_fallthru
          _
        // Predicated region
        $region29: #{forward.1} parent=23 // pred_check
          %p214 = pneg %p62
        $region30: #{forward.1} parent=23 // pred_check_branch
          %216 = sbr.rel (%p214) target = $region32
        $region31: #{forward.1} parent=23 // pred_region
          %p217 = scmp.lt.s32.totalorder %s16, 1
          %s218 = scalar_select %p217, %s16, 1
          %s219 = scalar_lea.vmem %s1, %s218
        $region32: #{forward.1} parent=23 // pred_fallthru
          _
        // Predicated region
        $region33: #{forward.1} parent=23 // pred_check
          %p220 = pneg %p88
        $region34: #{forward.1} parent=23 // pred_check_branch
          %222 = sbr.rel (%p220) target = $region36
        $region35: #{forward.1} parent=23 // pred_region
          %p223 = scmp.lt.s32.totalorder %s16, 1
          %s224 = scalar_select %p223, %s16, 1
          %s225 = scalar_lea.vmem %s2, %s224
        $region36: #{forward.1} parent=23 // pred_fallthru
          _
      $region24: #{forward.1} parent=5 // pred_fallthru
        _
      %p226 = scmp.le.s32.totalorder 1, %s16
      %p227 = scmp.lt.s32.totalorder %s16, 3
      %p228 = pnand %p226, %p227
      %p229 = pneg %p228
      // Predicated region
      $region37: #{forward.1} parent=5 // pred_check
        _
      $region38: #{forward.1} parent=5 // pred_check_branch
        %231 = sbr.rel (%p228) target = $region40
      $region39: #{forward.1} parent=5 // pred_region
        %s232 = ssub.s32 %s16, 1
        // Predicated region
        $region41: #{forward.1} parent=39 // pred_check
          %p233 = pneg %p115
        $region42: #{forward.1} parent=39 // pred_check_branch
          %235 = sbr.rel (%p233) target = $region44
        $region43: #{forward.1} parent=39 // pred_region
          %236 = dma.done [#allocation3], 640
        $region44: #{forward.1} parent=39 // pred_fallthru
          _
        // Predicated region
        $region45: #{forward.1} parent=39 // pred_check
          %p237 = pneg %p136
        $region46: #{forward.1} parent=39 // pred_check_branch
          %239 = sbr.rel (%p237) target = $region48
        $region47: #{forward.1} parent=39 // pred_region
          %240 = dma.done [#allocation6], 4864
        $region48: #{forward.1} parent=39 // pred_fallthru
          _
        %p241 = scmp.lt.s32.totalorder %s21, 1
        %s242 = scalar_select %p241, %s21, 1
        %s243 = smul.addr %s242, 8
        %s244 = scalar_lea.vmem %s0, %s243
        %p245 = pneg %p42
        %p246 = pneg %p39
        %p247 = scmp.lt.s32.totalorder %s21, 1
        %s248 = scalar_select %p247, %s21, 1
        %s249 = scalar_lea.vmem %s1, %s248
        %p250 = pneg %p68
        %p251 = pneg %p65
        %p252 = scmp.lt.s32.totalorder %s21, 1
        %s253 = scalar_select %p252, %s21, 1
        %s254 = scalar_lea.vmem %s2, %s253
        %p255 = pneg %p94
        %p256 = pneg %p91
        %p257 = pneg %p115
        %p258 = pneg %p112
        %p259 = pneg %p136
        %p260 = pneg %p133
        %p261 = pneg %p162
        %p262 = pneg %p159
        %s263 = sand.u32 %s149, 1
        %s264 = scalar_lea.sflag [#allocation4], %s263
        %s265 = sand.u32 %s149, 1
        %s266 = scalar_lea.vmem [#allocation7], %s265
        %p267 = scmp.lt.s32.totalorder %s21, 1
        %s268 = scalar_select %p267, %s21, 1
        %s269 = smul.addr %s268, 8
        %s270 = scalar_lea.vmem %s0, %s269
        %p271 = scmp.lt.s32.totalorder %s21, 1
        %s272 = scalar_select %p271, %s21, 1
        %s273 = scalar_lea.vmem %s1, %s272
        %p274 = scmp.lt.s32.totalorder %s21, 1
        %s275 = scalar_select %p274, %s21, 1
        %s276 = scalar_lea.vmem %s2, %s275
        %v278 = vld [vmem:[%s270] sm:$0xff]
        %v279 = vlaneseq
        %v280 = vand.u32 %v279, 127
        %281 = vset.pattern.permute.xlu0 0
        %282 = vperm.xlu0 %281, %v278
        %v283 = vpop.permute.xlu0 %282
        %vm284 = vcmp.eq.s32.totalorder %v283, %v280
        %v285 = vsel %vm284, 1.0, 0.0
        %v286 = vpack.c.bf16 %v285, %v285
        %v287 = vld [vmem:[#allocation5] sm:$0xf]
        %v288 = vld [vmem:[#allocation5 + $0x4] sm:$0xf]
        %v289 = vld [vmem:[#allocation5 + $0x8] sm:$0xf]
        %v290 = vld [vmem:[#allocation5 + $0xc] sm:$0xf]
        %v291 = vld [vmem:[#allocation5 + $0x10] sm:$0xf]
        %v292 = vld [vmem:[#allocation5 + $0x14] sm:$0xf]
        %v293 = vld [vmem:[#allocation5 + $0x18] sm:$0xf]
        %v294 = vld [vmem:[#allocation5 + $0x1c] sm:$0xf]
        %v295 = vld [vmem:[#allocation2 + $0x18] sm:$0xff]
        %v304 = vunpack.c.l.b16 %v287
        %v305 = vunpack.c.l.b16 %v288
        %v306 = vunpack.c.l.b16 %v289
        %v307 = vunpack.c.l.b16 %v290
        %v308 = vunpack.c.l.b16 %v291
        %v309 = vunpack.c.l.b16 %v292
        %v310 = vunpack.c.l.b16 %v293
        %v311 = vunpack.c.l.b16 %v294
        %v312 = vpack.c.b16 %v305, %v304
        %v313 = vpack.c.b16 %v307, %v306
        %v314 = vpack.c.b16 %v309, %v308
        %v315 = vpack.c.b16 %v311, %v310
        %vm320 = vcmask 523264
        %v322 = vsel %vm320, %v286, 0
        %324 = vmatprep.subr.bf16.mxu0 0
        %325 = vmatpush1.bf16.msra.mxu0 %v312
        %326 = vmatprep.subr.bf16.mxu0 0
        %327 = vmatpush1.bf16.msra.mxu0 %v313
        %328 = vmatprep.subr.bf16.mxu0 0
        %329 = vmatpush1.bf16.msra.mxu0 %v314
        %330 = vmatprep.subr.bf16.mxu0 0
        %331 = vmatpush1.bf16.msra.mxu0 %v315
        %332 = vmatprep.subr.bf16.mxu0 0
        %333 = vmatpush1.bf16.msra.mxu0 0
        %334 = vmatprep.subr.bf16.mxu0 0
        %335 = vmatpush1.bf16.msra.mxu0 0
        %336 = vmatprep.subr.bf16.mxu0 0
        %337 = vmatpush1.bf16.msra.mxu0 0
        %338 = vmatprep.subr.bf16.mxu0 0
        %339 = vmatpush1.bf16.msra.mxu0 0
        %340 = vmatprep.subr.bf16.mxu0 0
        %341 = vmatpush1.bf16.msra.mxu0 0
        %342 = vmatprep.subr.bf16.mxu0 0
        %343 = vmatpush1.bf16.msra.mxu0 0
        %344 = vmatprep.subr.bf16.mxu0 0
        %345 = vmatpush1.bf16.msra.mxu0 0
        %346 = vmatprep.subr.bf16.mxu0 0
        %347 = vmatpush1.bf16.msra.mxu0 0
        %348 = vmatprep.subr.bf16.mxu0 0
        %349 = vmatpush1.bf16.msra.mxu0 0
        %350 = vmatprep.subr.bf16.mxu0 0
        %351 = vmatpush1.bf16.msra.mxu0 0
        %352 = vmatprep.subr.bf16.mxu0 0
        %353 = vmatpush1.bf16.msra.mxu0 0
        %354 = vmatprep.subr.bf16.mxu0 0
        %355 = vmatpush1.bf16.msra.mxu0 0
        %356 = vmatprep.mubr.bf16.mxu0 0
        %357 = vmatmul.mubr.bf16.gmra.mrb[0].mxu0 %v322
        %v358 = vpop.f32.mrb[0].mxu0
        %v359 = vadd.f32 %v295, %v358
        %v360 = vpop.f32.mrb[0].mxu0
        %v361 = vpop.f32.mrb[0].mxu0
        %v362 = vpop.f32.mrb[0].mxu0
        %363 = vdwg.mxu0
        %v364 = vld [vmem:[#allocation2] sm:$0x1]
        %v365 = vld [vmem:[#allocation2 + $0x1] sm:$0x1]
        %vm366 = vcmask 261120
        %v367 = vsel %vm366, %v359, 0.0
        %368 = vadd.xlane.f32.xlu0 %v367
        %v369 = vpop.xlane.xlu0 %368
        %v370 = vrcp.pop 32.0
        %v371 = vmul.f32 %v369, %v370
        %v372 = vsub.f32 %v359, %v371
        %v373 = vmul.f32 %v372, %v372
        %v374 = vsel %vm366, %v373, 0.0
        %375 = vadd.xlane.f32.xlu0 %v374
        %v376 = vpop.xlane.xlu0 %375
        %v377 = vmul.f32 %v376, %v370
        %v378 = vadd.f32 %v377, 1e-12
        %v379 = vrsqrt.pop %v378
        %v380 = vmul.f32 %v372, %v379
        %v381 = vlaneseq
        %v382 = vshrl.u32 %v381, 7
        %v383 = vsub.s32 0, %v382
        %v384 = vrot.slane %v364, %v383
        %v385 = vmul.f32 %v380, %v384
        %v386 = vlaneseq
        %v387 = vshrl.u32 %v386, 7
        %v388 = vsub.s32 0, %v387
        %v389 = vrot.slane %v365, %v388
        %v390 = vadd.f32 %v385, %v389
        %v391 = vld [vmem:[%s273] sm:$0x1]
        %v392 = vsub.f32 1.0, %v391
        %v393 = vmul.f32 %v392, -1e+09
        %v395 = vlaneseq
        %v396 = vshrl.u32 %v395, 7
        %v397 = vsub.s32 0, %v396
        %v398 = vrot.slane %v393, %v397
        %v400 = vpack.c.bf16 %v390, %v390
        %v401 = vld [vmem:[#allocation5 + $0x20] sm:$0xf]
        %v402 = vld [vmem:[#allocation5 + $0x24] sm:$0xf]
        %v403 = vld [vmem:[#allocation5 + $0x28] sm:$0xf]
        %v404 = vld [vmem:[#allocation5 + $0x2c] sm:$0xf]
        %v405 = vld [vmem:[#allocation2 + $0x2] sm:$0x1]
        %v406 = vlaneseq
        %v407 = vshrl.u32 %v406, 7
        %v408 = vsub.s32 0, %v407
        %v409 = vrot.slane %v405, %v408
        %v414 = vunpack.c.l.b16 %v401
        %v415 = vunpack.c.l.b16 %v402
        %v416 = vunpack.c.l.b16 %v403
        %v417 = vunpack.c.l.b16 %v404
        %v418 = vpack.c.b16 %v415, %v414
        %v419 = vpack.c.b16 %v417, %v416
        %v423 = vsel %vm366, %v400, 0
        %425 = vmatprep.subr.bf16.mxu0 0
        %426 = vmatpush1.bf16.msra.mxu0 %v418
        %427 = vmatprep.subr.bf16.mxu0 0
        %428 = vmatpush1.bf16.msra.mxu0 %v419
        %429 = vmatprep.subr.bf16.mxu0 0
        %430 = vmatpush1.bf16.msra.mxu0 0
        %431 = vmatprep.subr.bf16.mxu0 0
        %432 = vmatpush1.bf16.msra.mxu0 0
        %433 = vmatprep.subr.bf16.mxu0 0
        %434 = vmatpush1.bf16.msra.mxu0 0
        %435 = vmatprep.subr.bf16.mxu0 0
        %436 = vmatpush1.bf16.msra.mxu0 0
        %437 = vmatprep.subr.bf16.mxu0 0
        %438 = vmatpush1.bf16.msra.mxu0 0
        %439 = vmatprep.subr.bf16.mxu0 0
        %440 = vmatpush1.bf16.msra.mxu0 0
        %441 = vmatprep.subr.bf16.mxu0 0
        %442 = vmatpush1.bf16.msra.mxu0 0
        %443 = vmatprep.subr.bf16.mxu0 0
        %444 = vmatpush1.bf16.msra.mxu0 0
        %445 = vmatprep.subr.bf16.mxu0 0
        %446 = vmatpush1.bf16.msra.mxu0 0
        %447 = vmatprep.subr.bf16.mxu0 0
        %448 = vmatpush1.bf16.msra.mxu0 0
        %449 = vmatprep.subr.bf16.mxu0 0
        %450 = vmatpush1.bf16.msra.mxu0 0
        %451 = vmatprep.subr.bf16.mxu0 0
        %452 = vmatpush1.bf16.msra.mxu0 0
        %453 = vmatprep.subr.bf16.mxu0 0
        %454 = vmatpush1.bf16.msra.mxu0 0
        %455 = vmatprep.subr.bf16.mxu0 0
        %456 = vmatpush1.bf16.msra.mxu0 0
        %457 = vmatprep.mubr.bf16.mxu0 0
        %458 = vmatmul.mubr.bf16.gmra.mrb[0].mxu0 %v423
        %v459 = vpop.f32.mrb[0].mxu0
        %v460 = vadd.f32 %v409, %v459
        %v461 = vpop.f32.mrb[0].mxu0
        %v462 = vpop.f32.mrb[0].mxu0
        %v463 = vpop.f32.mrb[0].mxu0
        %464 = vdwg.mxu0
        %v465 = vpack.c.bf16 %v460, %v460
        %467 = vrot.lane.b32.xlu0 %v465, 96
        %v468 = vpop.permute.xlu0 %467
        %vm469 = vcmask 64512
        %v471 = vsel %vm469, %v465, 0
        %v474 = vsel %vm469, %v468, 0
        %476 = vmatprep.subr.bf16.mxu0 0
        %477 = vmatpush1.bf16.xpose.msra.mxu0 %v474
        %478 = vmatprep.subr.bf16.mxu0 0
        %479 = vmatpush1.bf16.xpose.msra.mxu0 0
        %480 = vmatprep.subr.bf16.mxu0 0
        %481 = vmatpush1.bf16.xpose.msra.mxu0 0
        %482 = vmatprep.subr.bf16.mxu0 0
        %483 = vmatpush1.bf16.xpose.msra.mxu0 0
        %484 = vmatprep.subr.bf16.mxu0 0
        %485 = vmatpush1.bf16.xpose.msra.mxu0 0
        %486 = vmatprep.subr.bf16.mxu0 0
        %487 = vmatpush1.bf16.xpose.msra.mxu0 0
        %488 = vmatprep.subr.bf16.mxu0 0
        %489 = vmatpush1.bf16.xpose.msra.mxu0 0
        %490 = vmatprep.subr.bf16.mxu0 0
        %491 = vmatpush1.bf16.xpose.msra.mxu0 0
        %492 = vmatprep.subr.bf16.mxu0 0
        %493 = vmatpush1.bf16.xpose.msra.mxu0 0
        %494 = vmatprep.subr.bf16.mxu0 0
        %495 = vmatpush1.bf16.xpose.msra.mxu0 0
        %496 = vmatprep.subr.bf16.mxu0 0
        %497 = vmatpush1.bf16.xpose.msra.mxu0 0
        %498 = vmatprep.subr.bf16.mxu0 0
        %499 = vmatpush1.bf16.xpose.msra.mxu0 0
        %500 = vmatprep.subr.bf16.mxu0 0
        %501 = vmatpush1.bf16.xpose.msra.mxu0 0
        %502 = vmatprep.subr.bf16.mxu0 0
        %503 = vmatpush1.bf16.xpose.msra.mxu0 0
        %504 = vmatprep.subr.bf16.mxu0 0
        %505 = vmatpush1.bf16.xpose.msra.mxu0 0
        %506 = vmatprep.subr.bf16.mxu0 0
        %507 = vmatpush1.bf16.xpose.msra.mxu0 0
        %508 = vmatprep.mubr.bf16.mxu0 0
        %509 = vmatmul.mubr.bf16.gmra.mrb[0].mxu0 %v471
        %v510 = vpop.f32.mrb[0].mxu0
        %v511 = vadd.f32 0.0, %v510
        %v512 = vpop.f32.mrb[0].mxu0
        %v513 = vpop.f32.mrb[0].mxu0
        %v514 = vpop.f32.mrb[0].mxu0
        %515 = vdwg.mxu0
        %v516 = vmul.f32 %v511, 0.35355338
        %v517 = vadd.f32 %v516, %v398
        %v518 = vsel %vm469, %v517, -inf
        %519 = vmax.xlane.f32.xlu0 %v518
        %v520 = vpop.xlane.xlu0 %519
        %v521 = vsub.f32 %v517, %v520
        %v522 = vmul.f32 %v521, 1.442695
        %v523 = vpow.pop %v522
        %v524 = vsel %vm469, %v523, 0.0
        %525 = vadd.xlane.f32.xlu0 %v524
        %v526 = vpop.xlane.xlu0 %525
        %v527 = vrcp.pop %v526
        %v528 = vmul.f32 %v523, %v527
        %v529 = vpack.c.bf16 %v528, %v528
        %530 = vrot.lane.b32.xlu0 %v465, 64
        %v531 = vpop.permute.xlu0 %530
        %v533 = vsel %vm469, %v529, 0
        %vm535 = vcmask 1043456
        %v537 = vsel %vm535, %v531, 0
        %539 = vmatprep.subr.bf16.mxu0 0
        %540 = vmatpush1.bf16.msra.mxu0 %v537
        %541 = vmatprep.subr.bf16.mxu0 0
        %542 = vmatpush1.bf16.msra.mxu0 0
        %543 = vmatprep.subr.bf16.mxu0 0
        %544 = vmatpush1.bf16.msra.mxu0 0
        %545 = vmatprep.subr.bf16.mxu0 0
        %546 = vmatpush1.bf16.msra.mxu0 0
        %547 = vmatprep.subr.bf16.mxu0 0
        %548 = vmatpush1.bf16.msra.mxu0 0
        %549 = vmatprep.subr.bf16.mxu0 0
        %550 = vmatpush1.bf16.msra.mxu0 0
        %551 = vmatprep.subr.bf16.mxu0 0
        %552 = vmatpush1.bf16.msra.mxu0 0
        %553 = vmatprep.subr.bf16.mxu0 0
        %554 = vmatpush1.bf16.msra.mxu0 0
        %555 = vmatprep.subr.bf16.mxu0 0
        %556 = vmatpush1.bf16.msra.mxu0 0
        %557 = vmatprep.subr.bf16.mxu0 0
        %558 = vmatpush1.bf16.msra.mxu0 0
        %559 = vmatprep.subr.bf16.mxu0 0
        %560 = vmatpush1.bf16.msra.mxu0 0
        %561 = vmatprep.subr.bf16.mxu0 0
        %562 = vmatpush1.bf16.msra.mxu0 0
        %563 = vmatprep.subr.bf16.mxu0 0
        %564 = vmatpush1.bf16.msra.mxu0 0
        %565 = vmatprep.subr.bf16.mxu0 0
        %566 = vmatpush1.bf16.msra.mxu0 0
        %567 = vmatprep.subr.bf16.mxu0 0
        %568 = vmatpush1.bf16.msra.mxu0 0
        %569 = vmatprep.subr.bf16.mxu0 0
        %570 = vmatpush1.bf16.msra.mxu0 0
        %571 = vmatprep.mubr.bf16.mxu0 0
        %572 = vmatmul.mubr.bf16.gmra.mrb[0].mxu0 %v533
        %v573 = vpop.f32.mrb[0].mxu0
        %v574 = vadd.f32 0.0, %v573
        %v575 = vpop.f32.mrb[0].mxu0
        %v576 = vpop.f32.mrb[0].mxu0
        %v577 = vpop.f32.mrb[0].mxu0
        %578 = vdwg.mxu0
        %579 = vrot.lane.b32.xlu0 %v465, 120
        %v580 = vpop.permute.xlu0 %579
        %581 = vrot.lane.b32.xlu0 %v465, 88
        %v582 = vpop.permute.xlu0 %581
        %v584 = vsel %vm469, %v580, 0
        %v587 = vsel %vm469, %v582, 0
        %589 = vmatprep.subr.bf16.mxu0 0
        %590 = vmatpush1.bf16.xpose.msra.mxu0 %v587
        %591 = vmatprep.subr.bf16.mxu0 0
        %592 = vmatpush1.bf16.xpose.msra.mxu0 0
        %593 = vmatprep.subr.bf16.mxu0 0
        %594 = vmatpush1.bf16.xpose.msra.mxu0 0
        %595 = vmatprep.subr.bf16.mxu0 0
        %596 = vmatpush1.bf16.xpose.msra.mxu0 0
        %597 = vmatprep.subr.bf16.mxu0 0
        %598 = vmatpush1.bf16.xpose.msra.mxu0 0
        %599 = vmatprep.subr.bf16.mxu0 0
        %600 = vmatpush1.bf16.xpose.msra.mxu0 0
        %601 = vmatprep.subr.bf16.mxu0 0
        %602 = vmatpush1.bf16.xpose.msra.mxu0 0
        %603 = vmatprep.subr.bf16.mxu0 0
        %604 = vmatpush1.bf16.xpose.msra.mxu0 0
        %605 = vmatprep.subr.bf16.mxu0 0
        %606 = vmatpush1.bf16.xpose.msra.mxu0 0
        %607 = vmatprep.subr.bf16.mxu0 0
        %608 = vmatpush1.bf16.xpose.msra.mxu0 0
        %609 = vmatprep.subr.bf16.mxu0 0
        %610 = vmatpush1.bf16.xpose.msra.mxu0 0
        %611 = vmatprep.subr.bf16.mxu0 0
        %612 = vmatpush1.bf16.xpose.msra.mxu0 0
        %613 = vmatprep.subr.bf16.mxu0 0
        %614 = vmatpush1.bf16.xpose.msra.mxu0 0
        %615 = vmatprep.subr.bf16.mxu0 0
        %616 = vmatpush1.bf16.xpose.msra.mxu0 0
        %617 = vmatprep.subr.bf16.mxu0 0
        %618 = vmatpush1.bf16.xpose.msra.mxu0 0
        %619 = vmatprep.subr.bf16.mxu0 0
        %620 = vmatpush1.bf16.xpose.msra.mxu0 0
        %621 = vmatprep.mubr.bf16.mxu0 0
        %622 = vmatmul.mubr.bf16.gmra.mrb[0].mxu0 %v584
        %v623 = vpop.f32.mrb[0].mxu0
        %v624 = vadd.f32 0.0, %v623
        %v625 = vpop.f32.mrb[0].mxu0
        %v626 = vpop.f32.mrb[0].mxu0
        %v627 = vpop.f32.mrb[0].mxu0
        %628 = vdwg.mxu0
        %v629 = vmul.f32 %v624, 0.35355338
        %v630 = vadd.f32 %v629, %v398
        %v631 = vsel %vm469, %v630, -inf
        %632 = vmax.xlane.f32.xlu0 %v631
        %v633 = vpop.xlane.xlu0 %632
        %v634 = vsub.f32 %v630, %v633
        %v635 = vmul.f32 %v634, 1.442695
        %v636 = vpow.pop %v635
        %v637 = vsel %vm469, %v636, 0.0
        %638 = vadd.xlane.f32.xlu0 %v637
        %v639 = vpop.xlane.xlu0 %638
        %v640 = vrcp.pop %v639
        %v641 = vmul.f32 %v636, %v640
        %v642 = vpack.c.bf16 %v641, %v641
        %643 = vrot.lane.b32.xlu0 %v465, 56
        %v644 = vpop.permute.xlu0 %643
        %v646 = vsel %vm469, %v642, 0
        %v649 = vsel %vm535, %v644, 0
        %651 = vmatprep.subr.bf16.mxu0 0
        %652 = vmatpush1.bf16.msra.mxu0 %v649
        %653 = vmatprep.subr.bf16.mxu0 0
        %654 = vmatpush1.bf16.msra.mxu0 0
        %655 = vmatprep.subr.bf16.mxu0 0
        %656 = vmatpush1.bf16.msra.mxu0 0
        %657 = vmatprep.subr.bf16.mxu0 0
        %658 = vmatpush1.bf16.msra.mxu0 0
        %659 = vmatprep.subr.bf16.mxu0 0
        %660 = vmatpush1.bf16.msra.mxu0 0
        %661 = vmatprep.subr.bf16.mxu0 0
        %662 = vmatpush1.bf16.msra.mxu0 0
        %663 = vmatprep.subr.bf16.mxu0 0
        %664 = vmatpush1.bf16.msra.mxu0 0
        %665 = vmatprep.subr.bf16.mxu0 0
        %666 = vmatpush1.bf16.msra.mxu0 0
        %667 = vmatprep.subr.bf16.mxu0 0
        %668 = vmatpush1.bf16.msra.mxu0 0
        %669 = vmatprep.subr.bf16.mxu0 0
        %670 = vmatpush1.bf16.msra.mxu0 0
        %671 = vmatprep.subr.bf16.mxu0 0
        %672 = vmatpush1.bf16.msra.mxu0 0
        %673 = vmatprep.subr.bf16.mxu0 0
        %674 = vmatpush1.bf16.msra.mxu0 0
        %675 = vmatprep.subr.bf16.mxu0 0
        %676 = vmatpush1.bf16.msra.mxu0 0
        %677 = vmatprep.subr.bf16.mxu0 0
        %678 = vmatpush1.bf16.msra.mxu0 0
        %679 = vmatprep.subr.bf16.mxu0 0
        %680 = vmatpush1.bf16.msra.mxu0 0
        %681 = vmatprep.subr.bf16.mxu0 0
        %682 = vmatpush1.bf16.msra.mxu0 0
        %683 = vmatprep.mubr.bf16.mxu0 0
        %684 = vmatmul.mubr.bf16.gmra.mrb[0].mxu0 %v646
        %v685 = vpop.f32.mrb[0].mxu0
        %v686 = vadd.f32 0.0, %v685
        %v687 = vpop.f32.mrb[0].mxu0
        %v688 = vpop.f32.mrb[0].mxu0
        %v689 = vpop.f32.mrb[0].mxu0
        %690 = vdwg.mxu0
        %691 = vrot.lane.b32.xlu0 %v465, 112
        %v692 = vpop.permute.xlu0 %691
        %693 = vrot.lane.b32.xlu0 %v465, 80
        %v694 = vpop.permute.xlu0 %693
        %v696 = vsel %vm469, %v692, 0
        %v699 = vsel %vm469, %v694, 0
        %701 = vmatprep.subr.bf16.mxu0 0
        %702 = vmatpush1.bf16.xpose.msra.mxu0 %v699
        %703 = vmatprep.subr.bf16.mxu0 0
        %704 = vmatpush1.bf16.xpose.msra.mxu0 0
        %705 = vmatprep.subr.bf16.mxu0 0
        %706 = vmatpush1.bf16.xpose.msra.mxu0 0
        %707 = vmatprep.subr.bf16.mxu0 0
        %708 = vmatpush1.bf16.xpose.msra.mxu0 0
        %709 = vmatprep.subr.bf16.mxu0 0
        %710 = vmatpush1.bf16.xpose.msra.mxu0 0
        %711 = vmatprep.subr.bf16.mxu0 0
        %712 = vmatpush1.bf16.xpose.msra.mxu0 0
        %713 = vmatprep.subr.bf16.mxu0 0
        %714 = vmatpush1.bf16.xpose.msra.mxu0 0
        %715 = vmatprep.subr.bf16.mxu0 0
        %716 = vmatpush1.bf16.xpose.msra.mxu0 0
        %717 = vmatprep.subr.bf16.mxu0 0
        %718 = vmatpush1.bf16.xpose.msra.mxu0 0
        %719 = vmatprep.subr.bf16.mxu0 0
        %720 = vmatpush1.bf16.xpose.msra.mxu0 0
        %721 = vmatprep.subr.bf16.mxu0 0
        %722 = vmatpush1.bf16.xpose.msra.mxu0 0
        %723 = vmatprep.subr.bf16.mxu0 0
        %724 = vmatpush1.bf16.xpose.msra.mxu0 0
        %725 = vmatprep.subr.bf16.mxu0 0
        %726 = vmatpush1.bf16.xpose.msra.mxu0 0
        %727 = vmatprep.subr.bf16.mxu0 0
        %728 = vmatpush1.bf16.xpose.msra.mxu0 0
        %729 = vmatprep.subr.bf16.mxu0 0
        %730 = vmatpush1.bf16.xpose.msra.mxu0 0
        %731 = vmatprep.subr.bf16.mxu0 0
        %732 = vmatpush1.bf16.xpose.msra.mxu0 0
        %733 = vmatprep.mubr.bf16.mxu0 0
        %734 = vmatmul.mubr.bf16.gmra.mrb[0].mxu0 %v696
        %v735 = vpop.f32.mrb[0].mxu0
        %v736 = vadd.f32 0.0, %v735
        %v737 = vpop.f32.mrb[0].mxu0
        %v738 = vpop.f32.mrb[0].mxu0
        %v739 = vpop.f32.mrb[0].mxu0
        %740 = vdwg.mxu0
        %v741 = vmul.f32 %v736, 0.35355338
        %v742 = vadd.f32 %v741, %v398
        %v743 = vsel %vm469, %v742, -inf
        %744 = vmax.xlane.f32.xlu0 %v743
        %v745 = vpop.xlane.xlu0 %744
        %v746 = vsub.f32 %v742, %v745
        %v747 = vmul.f32 %v746, 1.442695
        %v748 = vpow.pop %v747
        %v749 = vsel %vm469, %v748, 0.0
        %750 = vadd.xlane.f32.xlu0 %v749
        %v751 = vpop.xlane.xlu0 %750
        %v752 = vrcp.pop %v751
        %v753 = vmul.f32 %v748, %v752
        %v754 = vpack.c.bf16 %v753, %v753
        %755 = vrot.lane.b32.xlu0 %v465, 48
        %v756 = vpop.permute.xlu0 %755
        %v758 = vsel %vm469, %v754, 0
        %v761 = vsel %vm535, %v756, 0
        %763 = vmatprep.subr.bf16.mxu0 0
        %764 = vmatpush1.bf16.msra.mxu0 %v761
        %765 = vmatprep.subr.bf16.mxu0 0
        %766 = vmatpush1.bf16.msra.mxu0 0
        %767 = vmatprep.subr.bf16.mxu0 0
        %768 = vmatpush1.bf16.msra.mxu0 0
        %769 = vmatprep.subr.bf16.mxu0 0
        %770 = vmatpush1.bf16.msra.mxu0 0
        %771 = vmatprep.subr.bf16.mxu0 0
        %772 = vmatpush1.bf16.msra.mxu0 0
        %773 = vmatprep.subr.bf16.mxu0 0
        %774 = vmatpush1.bf16.msra.mxu0 0
        %775 = vmatprep.subr.bf16.mxu0 0
        %776 = vmatpush1.bf16.msra.mxu0 0
        %777 = vmatprep.subr.bf16.mxu0 0
        %778 = vmatpush1.bf16.msra.mxu0 0
        %779 = vmatprep.subr.bf16.mxu0 0
        %780 = vmatpush1.bf16.msra.mxu0 0
        %781 = vmatprep.subr.bf16.mxu0 0
        %782 = vmatpush1.bf16.msra.mxu0 0
        %783 = vmatprep.subr.bf16.mxu0 0
        %784 = vmatpush1.bf16.msra.mxu0 0
        %785 = vmatprep.subr.bf16.mxu0 0
        %786 = vmatpush1.bf16.msra.mxu0 0
        %787 = vmatprep.subr.bf16.mxu0 0
        %788 = vmatpush1.bf16.msra.mxu0 0
        %789 = vmatprep.subr.bf16.mxu0 0
        %790 = vmatpush1.bf16.msra.mxu0 0
        %791 = vmatprep.subr.bf16.mxu0 0
        %792 = vmatpush1.bf16.msra.mxu0 0
        %793 = vmatprep.subr.bf16.mxu0 0
        %794 = vmatpush1.bf16.msra.mxu0 0
        %795 = vmatprep.mubr.bf16.mxu0 0
        %796 = vmatmul.mubr.bf16.gmra.mrb[0].mxu0 %v758
        %v797 = vpop.f32.mrb[0].mxu0
        %v798 = vadd.f32 0.0, %v797
        %v799 = vpop.f32.mrb[0].mxu0
        %v800 = vpop.f32.mrb[0].mxu0
        %v801 = vpop.f32.mrb[0].mxu0
        %802 = vdwg.mxu0
        %803 = vrot.lane.b32.xlu0 %v465, 104
        %v804 = vpop.permute.xlu0 %803
        %805 = vrot.lane.b32.xlu0 %v465, 72
        %v806 = vpop.permute.xlu0 %805
        %v808 = vsel %vm469, %v804, 0
        %v811 = vsel %vm469, %v806, 0
        %813 = vmatprep.subr.bf16.mxu0 0
        %814 = vmatpush1.bf16.xpose.msra.mxu0 %v811
        %815 = vmatprep.subr.bf16.mxu0 0
        %816 = vmatpush1.bf16.xpose.msra.mxu0 0
        %817 = vmatprep.subr.bf16.mxu0 0
        %818 = vmatpush1.bf16.xpose.msra.mxu0 0
        %819 = vmatprep.subr.bf16.mxu0 0
        %820 = vmatpush1.bf16.xpose.msra.mxu0 0
        %821 = vmatprep.subr.bf16.mxu0 0
        %822 = vmatpush1.bf16.xpose.msra.mxu0 0
        %823 = vmatprep.subr.bf16.mxu0 0
        %824 = vmatpush1.bf16.xpose.msra.mxu0 0
        %825 = vmatprep.subr.bf16.mxu0 0
        %826 = vmatpush1.bf16.xpose.msra.mxu0 0
        %827 = vmatprep.subr.bf16.mxu0 0
        %828 = vmatpush1.bf16.xpose.msra.mxu0 0
        %829 = vmatprep.subr.bf16.mxu0 0
        %830 = vmatpush1.bf16.xpose.msra.mxu0 0
        %831 = vmatprep.subr.bf16.mxu0 0
        %832 = vmatpush1.bf16.xpose.msra.mxu0 0
        %833 = vmatprep.subr.bf16.mxu0 0
        %834 = vmatpush1.bf16.xpose.msra.mxu0 0
        %835 = vmatprep.subr.bf16.mxu0 0
        %836 = vmatpush1.bf16.xpose.msra.mxu0 0
        %837 = vmatprep.subr.bf16.mxu0 0
        %838 = vmatpush1.bf16.xpose.msra.mxu0 0
        %839 = vmatprep.subr.bf16.mxu0 0
        %840 = vmatpush1.bf16.xpose.msra.mxu0 0
        %841 = vmatprep.subr.bf16.mxu0 0
        %842 = vmatpush1.bf16.xpose.msra.mxu0 0
        %843 = vmatprep.subr.bf16.mxu0 0
        %844 = vmatpush1.bf16.xpose.msra.mxu0 0
        %845 = vmatprep.mubr.bf16.mxu0 0
        %846 = vmatmul.mubr.bf16.gmra.mrb[0].mxu0 %v808
        %v847 = vpop.f32.mrb[0].mxu0
        %v848 = vadd.f32 0.0, %v847
        %v849 = vpop.f32.mrb[0].mxu0
        %v850 = vpop.f32.mrb[0].mxu0
        %v851 = vpop.f32.mrb[0].mxu0
        %852 = vdwg.mxu0
        %v853 = vmul.f32 %v848, 0.35355338
        %v854 = vadd.f32 %v853, %v398
        %v855 = vsel %vm469, %v854, -inf
        %856 = vmax.xlane.f32.xlu0 %v855
        %v857 = vpop.xlane.xlu0 %856
        %v858 = vsub.f32 %v854, %v857
        %v859 = vmul.f32 %v858, 1.442695
        %v860 = vpow.pop %v859
        %v861 = vsel %vm469, %v860, 0.0
        %862 = vadd.xlane.f32.xlu0 %v861
        %v863 = vpop.xlane.xlu0 %862
        %v864 = vrcp.pop %v863
        %v865 = vmul.f32 %v860, %v864
        %v866 = vpack.c.bf16 %v865, %v865
        %867 = vrot.lane.b32.xlu0 %v465, 40
        %v868 = vpop.permute.xlu0 %867
        %v870 = vsel %vm469, %v866, 0
        %v873 = vsel %vm535, %v868, 0
        %875 = vmatprep.subr.bf16.mxu0 0
        %876 = vmatpush1.bf16.msra.mxu0 %v873
        %877 = vmatprep.subr.bf16.mxu0 0
        %878 = vmatpush1.bf16.msra.mxu0 0
        %879 = vmatprep.subr.bf16.mxu0 0
        %880 = vmatpush1.bf16.msra.mxu0 0
        %881 = vmatprep.subr.bf16.mxu0 0
        %882 = vmatpush1.bf16.msra.mxu0 0
        %883 = vmatprep.subr.bf16.mxu0 0
        %884 = vmatpush1.bf16.msra.mxu0 0
        %885 = vmatprep.subr.bf16.mxu0 0
        %886 = vmatpush1.bf16.msra.mxu0 0
        %887 = vmatprep.subr.bf16.mxu0 0
        %888 = vmatpush1.bf16.msra.mxu0 0
        %889 = vmatprep.subr.bf16.mxu0 0
        %890 = vmatpush1.bf16.msra.mxu0 0
        %891 = vmatprep.subr.bf16.mxu0 0
        %892 = vmatpush1.bf16.msra.mxu0 0
        %893 = vmatprep.subr.bf16.mxu0 0
        %894 = vmatpush1.bf16.msra.mxu0 0
        %895 = vmatprep.subr.bf16.mxu0 0
        %896 = vmatpush1.bf16.msra.mxu0 0
        %897 = vmatprep.subr.bf16.mxu0 0
        %898 = vmatpush1.bf16.msra.mxu0 0
        %899 = vmatprep.subr.bf16.mxu0 0
        %900 = vmatpush1.bf16.msra.mxu0 0
        %901 = vmatprep.subr.bf16.mxu0 0
        %902 = vmatpush1.bf16.msra.mxu0 0
        %903 = vmatprep.subr.bf16.mxu0 0
        %904 = vmatpush1.bf16.msra.mxu0 0
        %905 = vmatprep.subr.bf16.mxu0 0
        %906 = vmatpush1.bf16.msra.mxu0 0
        %907 = vmatprep.mubr.bf16.mxu0 0
        %908 = vmatmul.mubr.bf16.gmra.mrb[0].mxu0 %v870
        %v909 = vpop.f32.mrb[0].mxu0
        %v910 = vadd.f32 0.0, %v909
        %v911 = vpop.f32.mrb[0].mxu0
        %v912 = vpop.f32.mrb[0].mxu0
        %v913 = vpop.f32.mrb[0].mxu0
        %914 = vdwg.mxu0
        %916 = vrot.lane.b32.xlu0 %v686, 8
        %v917 = vpop.permute.xlu0 %916
        %920 = vrot.lane.b32.xlu0 %v798, 16
        %v921 = vpop.permute.xlu0 %920
        %924 = vrot.lane.b32.xlu0 %v910, 24
        %v925 = vpop.permute.xlu0 %924
        %v927 = vsel %vm469, %v574, %v917
        %vm928 = vcmask 130048
        %v929 = vsel %vm928, %v927, %v921
        %vm930 = vcmask 195584
        %v931 = vsel %vm930, %v929, %v925
        %v932 = vpack.c.bf16 %v931, %v931
        %v933 = vld [vmem:[#allocation5 + $0x30] sm:$0xf]
        %v934 = vld [vmem:[#allocation5 + $0x34] sm:$0xf]
        %v935 = vld [vmem:[#allocation5 + $0x38] sm:$0xf]
        %v936 = vld [vmem:[#allocation5 + $0x3c] sm:$0xf]
        %v937 = vld [vmem:[#allocation2 + $0x3] sm:$0x1]
        %v938 = vlaneseq
        %v939 = vshrl.u32 %v938, 7
        %v940 = vsub.s32 0, %v939
        %v941 = vrot.slane %v937, %v940
        %v946 = vunpack.c.l.b16 %v933
        %v947 = vunpack.c.l.b16 %v934
        %v948 = vunpack.c.l.b16 %v935
        %v949 = vunpack.c.l.b16 %v936
        %v950 = vpack.c.b16 %v947, %v946
        %v951 = vpack.c.b16 %v949, %v948
        %v955 = vsel %vm366, %v932, 0
        %957 = vmatprep.subr.bf16.mxu0 0
        %958 = vmatpush1.bf16.msra.mxu0 %v950
        %959 = vmatprep.subr.bf16.mxu0 0
        %960 = vmatpush1.bf16.msra.mxu0 %v951
        %961 = vmatprep.subr.bf16.mxu0 0
        %962 = vmatpush1.bf16.msra.mxu0 0
        %963 = vmatprep.subr.bf16.mxu0 0
        %964 = vmatpush1.bf16.msra.mxu0 0
        %965 = vmatprep.subr.bf16.mxu0 0
        %966 = vmatpush1.bf16.msra.mxu0 0
        %967 = vmatprep.subr.bf16.mxu0 0
        %968 = vmatpush1.bf16.msra.mxu0 0
        %969 = vmatprep.subr.bf16.mxu0 0
        %970 = vmatpush1.bf16.msra.mxu0 0
        %971 = vmatprep.subr.bf16.mxu0 0
        %972 = vmatpush1.bf16.msra.mxu0 0
        %973 = vmatprep.subr.bf16.mxu0 0
        %974 = vmatpush1.bf16.msra.mxu0 0
        %975 = vmatprep.subr.bf16.mxu0 0
        %976 = vmatpush1.bf16.msra.mxu0 0
        %977 = vmatprep.subr.bf16.mxu0 0
        %978 = vmatpush1.bf16.msra.mxu0 0
        %979 = vmatprep.subr.bf16.mxu0 0
        %980 = vmatpush1.bf16.msra.mxu0 0
        %981 = vmatprep.subr.bf16.mxu0 0
        %982 = vmatpush1.bf16.msra.mxu0 0
        %983 = vmatprep.subr.bf16.mxu0 0
        %984 = vmatpush1.bf16.msra.mxu0 0
        %985 = vmatprep.subr.bf16.mxu0 0
        %986 = vmatpush1.bf16.msra.mxu0 0
        %987 = vmatprep.subr.bf16.mxu0 0
        %988 = vmatpush1.bf16.msra.mxu0 0
        %989 = vmatprep.mubr.bf16.mxu0 0
        %990 = vmatmul.mubr.bf16.gmra.mrb[0].mxu0 %v955
        %v991 = vpop.f32.mrb[0].mxu0
        %v992 = vadd.f32 %v941, %v991
        %v993 = vpop.f32.mrb[0].mxu0
        %v994 = vpop.f32.mrb[0].mxu0
        %v995 = vpop.f32.mrb[0].mxu0
        %996 = vdwg.mxu0
        %v997 = vadd.f32 %v390, %v992
        %v998 = vld [vmem:[#allocation2 + $0x4] sm:$0x1]
        %v999 = vld [vmem:[#allocation2 + $0x5] sm:$0x1]
        %v1000 = vsel %vm366, %v997, 0.0
        %1001 = vadd.xlane.f32.xlu0 %v1000
        %v1002 = vpop.xlane.xlu0 %1001
        %v1003 = vmul.f32 %v1002, %v370
        %v1004 = vsub.f32 %v997, %v1003
        %v1005 = vmul.f32 %v1004, %v1004
        %v1006 = vsel %vm366, %v1005, 0.0
        %1007 = vadd.xlane.f32.xlu0 %v1006
        %v1008 = vpop.xlane.xlu0 %1007
        %v1009 = vmul.f32 %v1008, %v370
        %v1010 = vadd.f32 %v1009, 1e-12
        %v1011 = vrsqrt.pop %v1010
        %v1012 = vmul.f32 %v1004, %v1011
        %v1013 = vlaneseq
        %v1014 = vshrl.u32 %v1013, 7
        %v1015 = vsub.s32 0, %v1014
        %v1016 = vrot.slane %v998, %v1015
        %v1017 = vmul.f32 %v1012, %v1016
        %v1018 = vlaneseq
        %v1019 = vshrl.u32 %v1018, 7
        %v1020 = vsub.s32 0, %v1019
        %v1021 = vrot.slane %v999, %v1020
        %v1022 = vadd.f32 %v1017, %v1021
        %v1023 = vpack.c.bf16 %v1022, %v1022
        %v1024 = vld [vmem:[#allocation5 + $0x40] sm:$0xf]
        %v1025 = vld [vmem:[#allocation5 + $0x44] sm:$0xf]
        %v1026 = vld [vmem:[#allocation5 + $0x48] sm:$0xf]
        %v1027 = vld [vmem:[#allocation5 + $0x4c] sm:$0xf]
        %v1028 = vld [vmem:[#allocation2 + $0x6] sm:$0x1]
        %v1029 = vlaneseq
        %v1030 = vshrl.u32 %v1029, 7
        %v1031 = vsub.s32 0, %v1030
        %v1032 = vrot.slane %v1028, %v1031
        %v1037 = vunpack.c.l.b16 %v1024
        %v1038 = vunpack.c.l.b16 %v1025
        %v1039 = vunpack.c.l.b16 %v1026
        %v1040 = vunpack.c.l.b16 %v1027
        %v1041 = vpack.c.b16 %v1038, %v1037
        %v1042 = vpack.c.b16 %v1040, %v1039
        %v1046 = vsel %vm366, %v1023, 0
        %1048 = vmatprep.subr.bf16.mxu0 0
        %1049 = vmatpush1.bf16.msra.mxu0 %v1041
        %1050 = vmatprep.subr.bf16.mxu0 0
        %1051 = vmatpush1.bf16.msra.mxu0 %v1042
        %1052 = vmatprep.subr.bf16.mxu0 0
        %1053 = vmatpush1.bf16.msra.mxu0 0
        %1054 = vmatprep.subr.bf16.mxu0 0
        %1055 = vmatpush1.bf16.msra.mxu0 0
        %1056 = vmatprep.subr.bf16.mxu0 0
        %1057 = vmatpush1.bf16.msra.mxu0 0
        %1058 = vmatprep.subr.bf16.mxu0 0
        %1059 = vmatpush1.bf16.msra.mxu0 0
        %1060 = vmatprep.subr.bf16.mxu0 0
        %1061 = vmatpush1.bf16.msra.mxu0 0
        %1062 = vmatprep.subr.bf16.mxu0 0
        %1063 = vmatpush1.bf16.msra.mxu0 0
        %1064 = vmatprep.subr.bf16.mxu0 0
        %1065 = vmatpush1.bf16.msra.mxu0 0
        %1066 = vmatprep.subr.bf16.mxu0 0
        %1067 = vmatpush1.bf16.msra.mxu0 0
        %1068 = vmatprep.subr.bf16.mxu0 0
        %1069 = vmatpush1.bf16.msra.mxu0 0
        %1070 = vmatprep.subr.bf16.mxu0 0
        %1071 = vmatpush1.bf16.msra.mxu0 0
        %1072 = vmatprep.subr.bf16.mxu0 0
        %1073 = vmatpush1.bf16.msra.mxu0 0
        %1074 = vmatprep.subr.bf16.mxu0 0
        %1075 = vmatpush1.bf16.msra.mxu0 0
        %1076 = vmatprep.subr.bf16.mxu0 0
        %1077 = vmatpush1.bf16.msra.mxu0 0
        %1078 = vmatprep.subr.bf16.mxu0 0
        %1079 = vmatpush1.bf16.msra.mxu0 0
        %1080 = vmatprep.mubr.bf16.mxu0 0
        %1081 = vmatmul.mubr.bf16.gmra.mrb[0].mxu0 %v1046
        %v1082 = vpop.f32.mrb[0].mxu0
        %v1083 = vadd.f32 %v1032, %v1082
        %v1084 = vpop.f32.mrb[0].mxu0
        %v1085 = vpop.f32.mrb[0].mxu0
        %v1086 = vpop.f32.mrb[0].mxu0
        %1087 = vdwg.mxu0
        %v1088 = vmul.f32 %v1083, 0.5
        %v1089 = vmul.f32 %v1083, 0.044715
        %v1090 = vmul.f32 %v1089, %v1083
        %v1091 = vmul.f32 %v1090, %v1083
        %v1092 = vadd.f32 %v1083, %v1091
        %v1093 = vmul.f32 %v1092, 0.7978846
        %v1094 = vtanh.pop %v1093
        %v1095 = vadd.f32 %v1094, 1.0
        %v1096 = vmul.f32 %v1088, %v1095
        %v1097 = vpack.c.bf16 %v1096, %v1096
        %v1098 = vld [vmem:[#allocation5 + $0x50] sm:$0xf]
        %v1099 = vld [vmem:[#allocation5 + $0x54] sm:$0xf]
        %v1100 = vld [vmem:[#allocation5 + $0x58] sm:$0xf]
        %v1101 = vld [vmem:[#allocation5 + $0x5c] sm:$0xf]
        %v1102 = vld [vmem:[#allocation5 + $0x60] sm:$0xf]
        %v1103 = vld [vmem:[#allocation5 + $0x64] sm:$0xf]
        %v1104 = vld [vmem:[#allocation5 + $0x68] sm:$0xf]
        %v1105 = vld [vmem:[#allocation5 + $0x6c] sm:$0xf]
        %v1106 = vld [vmem:[#allocation5 + $0x70] sm:$0xf]
        %v1107 = vld [vmem:[#allocation5 + $0x74] sm:$0xf]
        %v1108 = vld [vmem:[#allocation5 + $0x78] sm:$0xf]
        %v1109 = vld [vmem:[#allocation5 + $0x7c] sm:$0xf]
        %v1110 = vld [vmem:[#allocation5 + $0x80] sm:$0xf]
        %v1111 = vld [vmem:[#allocation5 + $0x84] sm:$0xf]
        %v1112 = vld [vmem:[#allocation5 + $0x88] sm:$0xf]
        %v1113 = vld [vmem:[#allocation5 + $0x8c] sm:$0xf]
        %v1114 = vld [vmem:[#allocation2 + $0x7] sm:$0x1]
        %v1115 = vlaneseq
        %v1116 = vshrl.u32 %v1115, 7
        %v1117 = vsub.s32 0, %v1116
        %v1118 = vrot.slane %v1114, %v1117
        %v1135 = vunpack.c.l.b16 %v1098
        %v1136 = vunpack.c.l.b16 %v1099
        %v1137 = vunpack.c.l.b16 %v1100
        %v1138 = vunpack.c.l.b16 %v1101
        %v1139 = vunpack.c.l.b16 %v1102
        %v1140 = vunpack.c.l.b16 %v1103
        %v1141 = vunpack.c.l.b16 %v1104
        %v1142 = vunpack.c.l.b16 %v1105
        %v1143 = vunpack.c.l.b16 %v1106
        %v1144 = vunpack.c.l.b16 %v1107
        %v1145 = vunpack.c.l.b16 %v1108
        %v1146 = vunpack.c.l.b16 %v1109
        %v1147 = vunpack.c.l.b16 %v1110
        %v1148 = vunpack.c.l.b16 %v1111
        %v1149 = vunpack.c.l.b16 %v1112
        %v1150 = vunpack.c.l.b16 %v1113
        %v1151 = vpack.c.b16 %v1136, %v1135
        %v1152 = vpack.c.b16 %v1138, %v1137
        %v1153 = vpack.c.b16 %v1140, %v1139
        %v1154 = vpack.c.b16 %v1142, %v1141
        %v1155 = vpack.c.b16 %v1144, %v1143
        %v1156 = vpack.c.b16 %v1146, %v1145
        %v1157 = vpack.c.b16 %v1148, %v1147
        %v1158 = vpack.c.b16 %v1150, %v1149
        %1167 = vmatprep.subr.bf16.mxu0 0
        %1168 = vmatpush1.bf16.msra.mxu0 %v1151
        %1169 = vmatprep.subr.bf16.mxu0 0
        %1170 = vmatpush1.bf16.msra.mxu0 %v1152
        %1171 = vmatprep.subr.bf16.mxu0 0
        %1172 = vmatpush1.bf16.msra.mxu0 %v1153
        %1173 = vmatprep.subr.bf16.mxu0 0
        %1174 = vmatpush1.bf16.msra.mxu0 %v1154
        %1175 = vmatprep.subr.bf16.mxu0 0
        %1176 = vmatpush1.bf16.msra.mxu0 %v1155
        %1177 = vmatprep.subr.bf16.mxu0 0
        %1178 = vmatpush1.bf16.msra.mxu0 %v1156
        %1179 = vmatprep.subr.bf16.mxu0 0
        %1180 = vmatpush1.bf16.msra.mxu0 %v1157
        %1181 = vmatprep.subr.bf16.mxu0 0
        %1182 = vmatpush1.bf16.msra.mxu0 %v1158
        %1183 = vmatprep.subr.bf16.mxu0 0
        %1184 = vmatpush1.bf16.msra.mxu0 0
        %1185 = vmatprep.subr.bf16.mxu0 0
        %1186 = vmatpush1.bf16.msra.mxu0 0
        %1187 = vmatprep.subr.bf16.mxu0 0
        %1188 = vmatpush1.bf16.msra.mxu0 0
        %1189 = vmatprep.subr.bf16.mxu0 0
        %1190 = vmatpush1.bf16.msra.mxu0 0
        %1191 = vmatprep.subr.bf16.mxu0 0
        %1192 = vmatpush1.bf16.msra.mxu0 0
        %1193 = vmatprep.subr.bf16.mxu0 0
        %1194 = vmatpush1.bf16.msra.mxu0 0
        %1195 = vmatprep.subr.bf16.mxu0 0
        %1196 = vmatpush1.bf16.msra.mxu0 0
        %1197 = vmatprep.subr.bf16.mxu0 0
        %1198 = vmatpush1.bf16.msra.mxu0 0
        %1199 = vmatprep.mubr.bf16.mxu0 0
        %1200 = vmatmul.mubr.bf16.gmra.mrb[0].mxu0 %v1097
        %v1201 = vpop.f32.mrb[0].mxu0
        %v1202 = vadd.f32 %v1118, %v1201
        %v1203 = vpop.f32.mrb[0].mxu0
        %v1204 = vpop.f32.mrb[0].mxu0
        %v1205 = vpop.f32.mrb[0].mxu0
        %1206 = vdwg.mxu0
        %v1207 = vadd.f32 %v1022, %v1202
        %v1208 = vld [vmem:[#allocation2 + $0x8] sm:$0x1]
        %v1209 = vld [vmem:[#allocation2 + $0x9] sm:$0x1]
        %v1210 = vsel %vm366, %v1207, 0.0
        %1211 = vadd.xlane.f32.xlu0 %v1210
        %v1212 = vpop.xlane.xlu0 %1211
        %v1213 = vmul.f32 %v1212, %v370
        %v1214 = vsub.f32 %v1207, %v1213
        %v1215 = vmul.f32 %v1214, %v1214
        %v1216 = vsel %vm366, %v1215, 0.0
        %1217 = vadd.xlane.f32.xlu0 %v1216
        %v1218 = vpop.xlane.xlu0 %1217
        %v1219 = vmul.f32 %v1218, %v370
        %v1220 = vadd.f32 %v1219, 1e-12
        %v1221 = vrsqrt.pop %v1220
        %v1222 = vmul.f32 %v1214, %v1221
        %v1223 = vlaneseq
        %v1224 = vshrl.u32 %v1223, 7
        %v1225 = vsub.s32 0, %v1224
        %v1226 = vrot.slane %v1208, %v1225
        %v1227 = vmul.f32 %v1222, %v1226
        %v1228 = vlaneseq
        %v1229 = vshrl.u32 %v1228, 7
        %v1230 = vsub.s32 0, %v1229
        %v1231 = vrot.slane %v1209, %v1230
        %v1232 = vadd.f32 %v1227, %v1231
        %v1233 = vpack.c.bf16 %v1232, %v1232
        %v1234 = vld [vmem:[#allocation5 + $0x90] sm:$0xf]
        %v1235 = vld [vmem:[#allocation5 + $0x94] sm:$0xf]
        %v1236 = vld [vmem:[#allocation5 + $0x98] sm:$0xf]
        %v1237 = vld [vmem:[#allocation5 + $0x9c] sm:$0xf]
        %v1238 = vld [vmem:[#allocation2 + $0xa] sm:$0x1]
        %v1239 = vlaneseq
        %v1240 = vshrl.u32 %v1239, 7
        %v1241 = vsub.s32 0, %v1240
        %v1242 = vrot.slane %v1238, %v1241
        %v1247 = vunpack.c.l.b16 %v1234
        %v1248 = vunpack.c.l.b16 %v1235
        %v1249 = vunpack.c.l.b16 %v1236
        %v1250 = vunpack.c.l.b16 %v1237
        %v1251 = vpack.c.b16 %v1248, %v1247
        %v1252 = vpack.c.b16 %v1250, %v1249
        %v1256 = vsel %vm366, %v1233, 0
        %1258 = vmatprep.subr.bf16.mxu0 0
        %1259 = vmatpush1.bf16.msra.mxu0 %v1251
        %1260 = vmatprep.subr.bf16.mxu0 0
        %1261 = vmatpush1.bf16.msra.mxu0 %v1252
        %1262 = vmatprep.subr.bf16.mxu0 0
        %1263 = vmatpush1.bf16.msra.mxu0 0
        %1264 = vmatprep.subr.bf16.mxu0 0
        %1265 = vmatpush1.bf16.msra.mxu0 0
        %1266 = vmatprep.subr.bf16.mxu0 0
        %1267 = vmatpush1.bf16.msra.mxu0 0
        %1268 = vmatprep.subr.bf16.mxu0 0
        %1269 = vmatpush1.bf16.msra.mxu0 0
        %1270 = vmatprep.subr.bf16.mxu0 0
        %1271 = vmatpush1.bf16.msra.mxu0 0
        %1272 = vmatprep.subr.bf16.mxu0 0
        %1273 = vmatpush1.bf16.msra.mxu0 0
        %1274 = vmatprep.subr.bf16.mxu0 0
        %1275 = vmatpush1.bf16.msra.mxu0 0
        %1276 = vmatprep.subr.bf16.mxu0 0
        %1277 = vmatpush1.bf16.msra.mxu0 0
        %1278 = vmatprep.subr.bf16.mxu0 0
        %1279 = vmatpush1.bf16.msra.mxu0 0
        %1280 = vmatprep.subr.bf16.mxu0 0
        %1281 = vmatpush1.bf16.msra.mxu0 0
        %1282 = vmatprep.subr.bf16.mxu0 0
        %1283 = vmatpush1.bf16.msra.mxu0 0
        %1284 = vmatprep.subr.bf16.mxu0 0
        %1285 = vmatpush1.bf16.msra.mxu0 0
        %1286 = vmatprep.subr.bf16.mxu0 0
        %1287 = vmatpush1.bf16.msra.mxu0 0
        %1288 = vmatprep.subr.bf16.mxu0 0
        %1289 = vmatpush1.bf16.msra.mxu0 0
        %1290 = vmatprep.mubr.bf16.mxu0 0
        %1291 = vmatmul.mubr.bf16.gmra.mrb[0].mxu0 %v1256
        %v1292 = vpop.f32.mrb[0].mxu0
        %v1293 = vadd.f32 %v1242, %v1292
        %v1294 = vpop.f32.mrb[0].mxu0
        %v1295 = vpop.f32.mrb[0].mxu0
        %v1296 = vpop.f32.mrb[0].mxu0
        %1297 = vdwg.mxu0
        %v1298 = vpack.c.bf16 %v1293, %v1293
        %1300 = vrot.lane.b32.xlu0 %v1298, 96
        %v1301 = vpop.permute.xlu0 %1300
        %v1303 = vsel %vm469, %v1298, 0
        %v1306 = vsel %vm469, %v1301, 0
        %1308 = vmatprep.subr.bf16.mxu0 0
        %1309 = vmatpush1.bf16.xpose.msra.mxu0 %v1306
        %1310 = vmatprep.subr.bf16.mxu0 0
        %1311 = vmatpush1.bf16.xpose.msra.mxu0 0
        %1312 = vmatprep.subr.bf16.mxu0 0
        %1313 = vmatpush1.bf16.xpose.msra.mxu0 0
        %1314 = vmatprep.subr.bf16.mxu0 0
        %1315 = vmatpush1.bf16.xpose.msra.mxu0 0
        %1316 = vmatprep.subr.bf16.mxu0 0
        %1317 = vmatpush1.bf16.xpose.msra.mxu0 0
        %1318 = vmatprep.subr.bf16.mxu0 0
        %1319 = vmatpush1.bf16.xpose.msra.mxu0 0
        %1320 = vmatprep.subr.bf16.mxu0 0
        %1321 = vmatpush1.bf16.xpose.msra.mxu0 0
        %1322 = vmatprep.subr.bf16.mxu0 0
        %1323 = vmatpush1.bf16.xpose.msra.mxu0 0
        %1324 = vmatprep.subr.bf16.mxu0 0
        %1325 = vmatpush1.bf16.xpose.msra.mxu0 0
        %1326 = vmatprep.subr.bf16.mxu0 0
        %1327 = vmatpush1.bf16.xpose.msra.mxu0 0
        %1328 = vmatprep.subr.bf16.mxu0 0
        %1329 = vmatpush1.bf16.xpose.msra.mxu0 0
        %1330 = vmatprep.subr.bf16.mxu0 0
        %1331 = vmatpush1.bf16.xpose.msra.mxu0 0
        %1332 = vmatprep.subr.bf16.mxu0 0
        %1333 = vmatpush1.bf16.xpose.msra.mxu0 0
        %1334 = vmatprep.subr.bf16.mxu0 0
        %1335 = vmatpush1.bf16.xpose.msra.mxu0 0
        %1336 = vmatprep.subr.bf16.mxu0 0
        %1337 = vmatpush1.bf16.xpose.msra.mxu0 0
        %1338 = vmatprep.subr.bf16.mxu0 0
        %1339 = vmatpush1.bf16.xpose.msra.mxu0 0
        %1340 = vmatprep.mubr.bf16.mxu0 0
        %1341 = vmatmul.mubr.bf16.gmra.mrb[0].mxu0 %v1303
        %v1342 = vpop.f32.mrb[0].mxu0
        %v1343 = vadd.f32 0.0, %v1342
        %v1344 = vpop.f32.mrb[0].mxu0
        %v1345 = vpop.f32.mrb[0].mxu0
        %v1346 = vpop.f32.mrb[0].mxu0
        %1347 = vdwg.mxu0
        %v1348 = vmul.f32 %v1343, 0.35355338
        %v1349 = vadd.f32 %v1348, %v398
        %v1350 = vsel %vm469, %v1349, -inf
        %1351 = vmax.xlane.f32.xlu0 %v1350
        %v1352 = vpop.xlane.xlu0 %1351
        %v1353 = vsub.f32 %v1349, %v1352
        %v1354 = vmul.f32 %v1353, 1.442695
        %v1355 = vpow.pop %v1354
        %v1356 = vsel %vm469, %v1355, 0.0
        %1357 = vadd.xlane.f32.xlu0 %v1356
        %v1358 = vpop.xlane.xlu0 %1357
        %v1359 = vrcp.pop %v1358
        %v1360 = vmul.f32 %v1355, %v1359
        %v1361 = vpack.c.bf16 %v1360, %v1360
        %1362 = vrot.lane.b32.xlu0 %v1298, 64
        %v1363 = vpop.permute.xlu0 %1362
        %v1365 = vsel %vm469, %v1361, 0
        %v1368 = vsel %vm535, %v1363, 0
        %1370 = vmatprep.subr.bf16.mxu0 0
        %1371 = vmatpush1.bf16.msra.mxu0 %v1368
        %1372 = vmatprep.subr.bf16.mxu0 0
        %1373 = vmatpush1.bf16.msra.mxu0 0
        %1374 = vmatprep.subr.bf16.mxu0 0
        %1375 = vmatpush1.bf16.msra.mxu0 0
        %1376 = vmatprep.subr.bf16.mxu0 0
        %1377 = vmatpush1.bf16.msra.mxu0 0
        %1378 = vmatprep.subr.bf16.mxu0 0
        %1379 = vmatpush1.bf16.msra.mxu0 0
        %1380 = vmatprep.subr.bf16.mxu0 0
        %1381 = vmatpush1.bf16.msra.mxu0 0
        %1382 = vmatprep.subr.bf16.mxu0 0
        %1383 = vmatpush1.bf16.msra.mxu0 0
        %1384 = vmatprep.subr.bf16.mxu0 0
        %1385 = vmatpush1.bf16.msra.mxu0 0
        %1386 = vmatprep.subr.bf16.mxu0 0
        %1387 = vmatpush1.bf16.msra.mxu0 0
        %1388 = vmatprep.subr.bf16.mxu0 0
        %1389 = vmatpush1.bf16.msra.mxu0 0
        %1390 = vmatprep.subr.bf16.mxu0 0
        %1391 = vmatpush1.bf16.msra.mxu0 0
        %1392 = vmatprep.subr.bf16.mxu0 0
        %1393 = vmatpush1.bf16.msra.mxu0 0
        %1394 = vmatprep.subr.bf16.mxu0 0
        %1395 = vmatpush1.bf16.msra.mxu0 0
        %1396 = vmatprep.subr.bf16.mxu0 0
        %1397 = vmatpush1.bf16.msra.mxu0 0
        %1398 = vmatprep.subr.bf16.mxu0 0
        %1399 = vmatpush1.bf16.msra.mxu0 0
        %1400 = vmatprep.subr.bf16.mxu0 0
        %1401 = vmatpush1.bf16.msra.mxu0 0
        %1402 = vmatprep.mubr.bf16.mxu0 0
        %1403 = vmatmul.mubr.bf16.gmra.mrb[0].mxu0 %v1365
        %v1404 = vpop.f32.mrb[0].mxu0
        %v1405 = vadd.f32 0.0, %v1404
        %v1406 = vpop.f32.mrb[0].mxu0
        %v1407 = vpop.f32.mrb[0].mxu0
        %v1408 = vpop.f32.mrb[0].mxu0
        %1409 = vdwg.mxu0
        %1410 = vrot.lane.b32.xlu0 %v1298, 120
        %v1411 = vpop.permute.xlu0 %1410
        %1412 = vrot.lane.b32.xlu0 %v1298, 88
        %v1413 = vpop.permute.xlu0 %1412
        %v1415 = vsel %vm469, %v1411, 0
        %v1418 = vsel %vm469, %v1413, 0
        %1420 = vmatprep.subr.bf16.mxu0 0
        %1421 = vmatpush1.bf16.xpose.msra.mxu0 %v1418
        %1422 = vmatprep.subr.bf16.mxu0 0
        %1423 = vmatpush1.bf16.xpose.msra.mxu0 0
        %1424 = vmatprep.subr.bf16.mxu0 0
        %1425 = vmatpush1.bf16.xpose.msra.mxu0 0
        %1426 = vmatprep.subr.bf16.mxu0 0
        %1427 = vmatpush1.bf16.xpose.msra.mxu0 0
        %1428 = vmatprep.subr.bf16.mxu0 0
        %1429 = vmatpush1.bf16.xpose.msra.mxu0 0
        %1430 = vmatprep.subr.bf16.mxu0 0
        %1431 = vmatpush1.bf16.xpose.msra.mxu0 0
        %1432 = vmatprep.subr.bf16.mxu0 0
        %1433 = vmatpush1.bf16.xpose.msra.mxu0 0
        %1434 = vmatprep.subr.bf16.mxu0 0
        %1435 = vmatpush1.bf16.xpose.msra.mxu0 0
        %1436 = vmatprep.subr.bf16.mxu0 0
        %1437 = vmatpush1.bf16.xpose.msra.mxu0 0
        %1438 = vmatprep.subr.bf16.mxu0 0
        %1439 = vmatpush1.bf16.xpose.msra.mxu0 0
        %1440 = vmatprep.subr.bf16.mxu0 0
        %1441 = vmatpush1.bf16.xpose.msra.mxu0 0
        %1442 = vmatprep.subr.bf16.mxu0 0
        %1443 = vmatpush1.bf16.xpose.msra.mxu0 0
        %1444 = vmatprep.subr.bf16.mxu0 0
        %1445 = vmatpush1.bf16.xpose.msra.mxu0 0
        %1446 = vmatprep.subr.bf16.mxu0 0
        %1447 = vmatpush1.bf16.xpose.msra.mxu0 0
        %1448 = vmatprep.subr.bf16.mxu0 0
        %1449 = vmatpush1.bf16.xpose.msra.mxu0 0
        %1450 = vmatprep.subr.bf16.mxu0 0
        %1451 = vmatpush1.bf16.xpose.msra.mxu0 0
        %1452 = vmatprep.mubr.bf16.mxu0 0
        %1453 = vmatmul.mubr.bf16.gmra.mrb[0].mxu0 %v1415
        %v1454 = vpop.f32.mrb[0].mxu0
        %v1455 = vadd.f32 0.0, %v1454
        %v1456 = vpop.f32.mrb[0].mxu0
        %v1457 = vpop.f32.mrb[0].mxu0
        %v1458 = vpop.f32.mrb[0].mxu0
        %1459 = vdwg.mxu0
        %v1460 = vmul.f32 %v1455, 0.35355338
        %v1461 = vadd.f32 %v1460, %v398
        %v1462 = vsel %vm469, %v1461, -inf
        %1463 = vmax.xlane.f32.xlu0 %v1462
        %v1464 = vpop.xlane.xlu0 %1463
        %v1465 = vsub.f32 %v1461, %v1464
        %v1466 = vmul.f32 %v1465, 1.442695
        %v1467 = vpow.pop %v1466
        %v1468 = vsel %vm469, %v1467, 0.0
        %1469 = vadd.xlane.f32.xlu0 %v1468
        %v1470 = vpop.xlane.xlu0 %1469
        %v1471 = vrcp.pop %v1470
        %v1472 = vmul.f32 %v1467, %v1471
        %v1473 = vpack.c.bf16 %v1472, %v1472
        %1474 = vrot.lane.b32.xlu0 %v1298, 56
        %v1475 = vpop.permute.xlu0 %1474
        %v1477 = vsel %vm469, %v1473, 0
        %v1480 = vsel %vm535, %v1475, 0
        %1482 = vmatprep.subr.bf16.mxu0 0
        %1483 = vmatpush1.bf16.msra.mxu0 %v1480
        %1484 = vmatprep.subr.bf16.mxu0 0
        %1485 = vmatpush1.bf16.msra.mxu0 0
        %1486 = vmatprep.subr.bf16.mxu0 0
        %1487 = vmatpush1.bf16.msra.mxu0 0
        %1488 = vmatprep.subr.bf16.mxu0 0
        %1489 = vmatpush1.bf16.msra.mxu0 0
        %1490 = vmatprep.subr.bf16.mxu0 0
        %1491 = vmatpush1.bf16.msra.mxu0 0
        %1492 = vmatprep.subr.bf16.mxu0 0
        %1493 = vmatpush1.bf16.msra.mxu0 0
        %1494 = vmatprep.subr.bf16.mxu0 0
        %1495 = vmatpush1.bf16.msra.mxu0 0
        %1496 = vmatprep.subr.bf16.mxu0 0
        %1497 = vmatpush1.bf16.msra.mxu0 0
        %1498 = vmatprep.subr.bf16.mxu0 0
        %1499 = vmatpush1.bf16.msra.mxu0 0
        %1500 = vmatprep.subr.bf16.mxu0 0
        %1501 = vmatpush1.bf16.msra.mxu0 0
        %1502 = vmatprep.subr.bf16.mxu0 0
        %1503 = vmatpush1.bf16.msra.mxu0 0
        %1504 = vmatprep.subr.bf16.mxu0 0
        %1505 = vmatpush1.bf16.msra.mxu0 0
        %1506 = vmatprep.subr.bf16.mxu0 0
        %1507 = vmatpush1.bf16.msra.mxu0 0
        %1508 = vmatprep.subr.bf16.mxu0 0
        %1509 = vmatpush1.bf16.msra.mxu0 0
        %1510 = vmatprep.subr.bf16.mxu0 0
        %1511 = vmatpush1.bf16.msra.mxu0 0
        %1512 = vmatprep.subr.bf16.mxu0 0
        %1513 = vmatpush1.bf16.msra.mxu0 0
        %1514 = vmatprep.mubr.bf16.mxu0 0
        %1515 = vmatmul.mubr.bf16.gmra.mrb[0].mxu0 %v1477
        %v1516 = vpop.f32.mrb[0].mxu0
        %v1517 = vadd.f32 0.0, %v1516
        %v1518 = vpop.f32.mrb[0].mxu0
        %v1519 = vpop.f32.mrb[0].mxu0
        %v1520 = vpop.f32.mrb[0].mxu0
        %1521 = vdwg.mxu0
        %1522 = vrot.lane.b32.xlu0 %v1298, 112
        %v1523 = vpop.permute.xlu0 %1522
        %1524 = vrot.lane.b32.xlu0 %v1298, 80
        %v1525 = vpop.permute.xlu0 %1524
        %v1527 = vsel %vm469, %v1523, 0
        %v1530 = vsel %vm469, %v1525, 0
        %1532 = vmatprep.subr.bf16.mxu0 0
        %1533 = vmatpush1.bf16.xpose.msra.mxu0 %v1530
        %1534 = vmatprep.subr.bf16.mxu0 0
        %1535 = vmatpush1.bf16.xpose.msra.mxu0 0
        %1536 = vmatprep.subr.bf16.mxu0 0
        %1537 = vmatpush1.bf16.xpose.msra.mxu0 0
        %1538 = vmatprep.subr.bf16.mxu0 0
        %1539 = vmatpush1.bf16.xpose.msra.mxu0 0
        %1540 = vmatprep.subr.bf16.mxu0 0
        %1541 = vmatpush1.bf16.xpose.msra.mxu0 0
        %1542 = vmatprep.subr.bf16.mxu0 0
        %1543 = vmatpush1.bf16.xpose.msra.mxu0 0
        %1544 = vmatprep.subr.bf16.mxu0 0
        %1545 = vmatpush1.bf16.xpose.msra.mxu0 0
        %1546 = vmatprep.subr.bf16.mxu0 0
        %1547 = vmatpush1.bf16.xpose.msra.mxu0 0
        %1548 = vmatprep.subr.bf16.mxu0 0
        %1549 = vmatpush1.bf16.xpose.msra.mxu0 0
        %1550 = vmatprep.subr.bf16.mxu0 0
        %1551 = vmatpush1.bf16.xpose.msra.mxu0 0
        %1552 = vmatprep.subr.bf16.mxu0 0
        %1553 = vmatpush1.bf16.xpose.msra.mxu0 0
        %1554 = vmatprep.subr.bf16.mxu0 0
        %1555 = vmatpush1.bf16.xpose.msra.mxu0 0
        %1556 = vmatprep.subr.bf16.mxu0 0
        %1557 = vmatpush1.bf16.xpose.msra.mxu0 0
        %1558 = vmatprep.subr.bf16.mxu0 0
        %1559 = vmatpush1.bf16.xpose.msra.mxu0 0
        %1560 = vmatprep.subr.bf16.mxu0 0
        %1561 = vmatpush1.bf16.xpose.msra.mxu0 0
        %1562 = vmatprep.subr.bf16.mxu0 0
        %1563 = vmatpush1.bf16.xpose.msra.mxu0 0
        %1564 = vmatprep.mubr.bf16.mxu0 0
        %1565 = vmatmul.mubr.bf16.gmra.mrb[0].mxu0 %v1527
        %v1566 = vpop.f32.mrb[0].mxu0
        %v1567 = vadd.f32 0.0, %v1566
        %v1568 = vpop.f32.mrb[0].mxu0
        %v1569 = vpop.f32.mrb[0].mxu0
        %v1570 = vpop.f32.mrb[0].mxu0
        %1571 = vdwg.mxu0
        %v1572 = vmul.f32 %v1567, 0.35355338
        %v1573 = vadd.f32 %v1572, %v398
        %v1574 = vsel %vm469, %v1573, -inf
        %1575 = vmax.xlane.f32.xlu0 %v1574
        %v1576 = vpop.xlane.xlu0 %1575
        %v1577 = vsub.f32 %v1573, %v1576
        %v1578 = vmul.f32 %v1577, 1.442695
        %v1579 = vpow.pop %v1578
        %v1580 = vsel %vm469, %v1579, 0.0
        %1581 = vadd.xlane.f32.xlu0 %v1580
        %v1582 = vpop.xlane.xlu0 %1581
        %v1583 = vrcp.pop %v1582
        %v1584 = vmul.f32 %v1579, %v1583
        %v1585 = vpack.c.bf16 %v1584, %v1584
        %1586 = vrot.lane.b32.xlu0 %v1298, 48
        %v1587 = vpop.permute.xlu0 %1586
        %v1589 = vsel %vm469, %v1585, 0
        %v1592 = vsel %vm535, %v1587, 0
        %1594 = vmatprep.subr.bf16.mxu0 0
        %1595 = vmatpush1.bf16.msra.mxu0 %v1592
        %1596 = vmatprep.subr.bf16.mxu0 0
        %1597 = vmatpush1.bf16.msra.mxu0 0
        %1598 = vmatprep.subr.bf16.mxu0 0
        %1599 = vmatpush1.bf16.msra.mxu0 0
        %1600 = vmatprep.subr.bf16.mxu0 0
        %1601 = vmatpush1.bf16.msra.mxu0 0
        %1602 = vmatprep.subr.bf16.mxu0 0
        %1603 = vmatpush1.bf16.msra.mxu0 0
        %1604 = vmatprep.subr.bf16.mxu0 0
        %1605 = vmatpush1.bf16.msra.mxu0 0
        %1606 = vmatprep.subr.bf16.mxu0 0
        %1607 = vmatpush1.bf16.msra.mxu0 0
        %1608 = vmatprep.subr.bf16.mxu0 0
        %1609 = vmatpush1.bf16.msra.mxu0 0
        %1610 = vmatprep.subr.bf16.mxu0 0
        %1611 = vmatpush1.bf16.msra.mxu0 0
        %1612 = vmatprep.subr.bf16.mxu0 0
        %1613 = vmatpush1.bf16.msra.mxu0 0
        %1614 = vmatprep.subr.bf16.mxu0 0
        %1615 = vmatpush1.bf16.msra.mxu0 0
        %1616 = vmatprep.subr.bf16.mxu0 0
        %1617 = vmatpush1.bf16.msra.mxu0 0
        %1618 = vmatprep.subr.bf16.mxu0 0
        %1619 = vmatpush1.bf16.msra.mxu0 0
        %1620 = vmatprep.subr.bf16.mxu0 0
        %1621 = vmatpush1.bf16.msra.mxu0 0
        %1622 = vmatprep.subr.bf16.mxu0 0
        %1623 = vmatpush1.bf16.msra.mxu0 0
        %1624 = vmatprep.subr.bf16.mxu0 0
        %1625 = vmatpush1.bf16.msra.mxu0 0
        %1626 = vmatprep.mubr.bf16.mxu0 0
        %1627 = vmatmul.mubr.bf16.gmra.mrb[0].mxu0 %v1589
        %v1628 = vpop.f32.mrb[0].mxu0
        %v1629 = vadd.f32 0.0, %v1628
        %v1630 = vpop.f32.mrb[0].mxu0
        %v1631 = vpop.f32.mrb[0].mxu0
        %v1632 = vpop.f32.mrb[0].mxu0
        %1633 = vdwg.mxu0
        %1634 = vrot.lane.b32.xlu0 %v1298, 104
        %v1635 = vpop.permute.xlu0 %1634
        %1636 = vrot.lane.b32.xlu0 %v1298, 72
        %v1637 = vpop.permute.xlu0 %1636
        %v1639 = vsel %vm469, %v1635, 0
        %v1642 = vsel %vm469, %v1637, 0
        %1644 = vmatprep.subr.bf16.mxu0 0
        %1645 = vmatpush1.bf16.xpose.msra.mxu0 %v1642
        %1646 = vmatprep.subr.bf16.mxu0 0
        %1647 = vmatpush1.bf16.xpose.msra.mxu0 0
        %1648 = vmatprep.subr.bf16.mxu0 0
        %1649 = vmatpush1.bf16.xpose.msra.mxu0 0
        %1650 = vmatprep.subr.bf16.mxu0 0
        %1651 = vmatpush1.bf16.xpose.msra.mxu0 0
        %1652 = vmatprep.subr.bf16.mxu0 0
        %1653 = vmatpush1.bf16.xpose.msra.mxu0 0
        %1654 = vmatprep.subr.bf16.mxu0 0
        %1655 = vmatpush1.bf16.xpose.msra.mxu0 0
        %1656 = vmatprep.subr.bf16.mxu0 0
        %1657 = vmatpush1.bf16.xpose.msra.mxu0 0
        %1658 = vmatprep.subr.bf16.mxu0 0
        %1659 = vmatpush1.bf16.xpose.msra.mxu0 0
        %1660 = vmatprep.subr.bf16.mxu0 0
        %1661 = vmatpush1.bf16.xpose.msra.mxu0 0
        %1662 = vmatprep.subr.bf16.mxu0 0
        %1663 = vmatpush1.bf16.xpose.msra.mxu0 0
        %1664 = vmatprep.subr.bf16.mxu0 0
        %1665 = vmatpush1.bf16.xpose.msra.mxu0 0
        %1666 = vmatprep.subr.bf16.mxu0 0
        %1667 = vmatpush1.bf16.xpose.msra.mxu0 0
        %1668 = vmatprep.subr.bf16.mxu0 0
        %1669 = vmatpush1.bf16.xpose.msra.mxu0 0
        %1670 = vmatprep.subr.bf16.mxu0 0
        %1671 = vmatpush1.bf16.xpose.msra.mxu0 0
        %1672 = vmatprep.subr.bf16.mxu0 0
        %1673 = vmatpush1.bf16.xpose.msra.mxu0 0
        %1674 = vmatprep.subr.bf16.mxu0 0
        %1675 = vmatpush1.bf16.xpose.msra.mxu0 0
        %1676 = vmatprep.mubr.bf16.mxu0 0
        %1677 = vmatmul.mubr.bf16.gmra.mrb[0].mxu0 %v1639
        %v1678 = vpop.f32.mrb[0].mxu0
        %v1679 = vadd.f32 0.0, %v1678
        %v1680 = vpop.f32.mrb[0].mxu0
        %v1681 = vpop.f32.mrb[0].mxu0
        %v1682 = vpop.f32.mrb[0].mxu0
        %1683 = vdwg.mxu0
        %v1684 = vmul.f32 %v1679, 0.35355338
        %v1685 = vadd.f32 %v1684, %v398
        %v1686 = vsel %vm469, %v1685, -inf
        %1687 = vmax.xlane.f32.xlu0 %v1686
        %v1688 = vpop.xlane.xlu0 %1687
        %v1689 = vsub.f32 %v1685, %v1688
        %v1690 = vmul.f32 %v1689, 1.442695
        %v1691 = vpow.pop %v1690
        %v1692 = vsel %vm469, %v1691, 0.0
        %1693 = vadd.xlane.f32.xlu0 %v1692
        %v1694 = vpop.xlane.xlu0 %1693
        %v1695 = vrcp.pop %v1694
        %v1696 = vmul.f32 %v1691, %v1695
        %v1697 = vpack.c.bf16 %v1696, %v1696
        %1698 = vrot.lane.b32.xlu0 %v1298, 40
        %v1699 = vpop.permute.xlu0 %1698
        %v1701 = vsel %vm469, %v1697, 0
        %v1704 = vsel %vm535, %v1699, 0
        %1706 = vmatprep.subr.bf16.mxu0 0
        %1707 = vmatpush1.bf16.msra.mxu0 %v1704
        %1708 = vmatprep.subr.bf16.mxu0 0
        %1709 = vmatpush1.bf16.msra.mxu0 0
        %1710 = vmatprep.subr.bf16.mxu0 0
        %1711 = vmatpush1.bf16.msra.mxu0 0
        %1712 = vmatprep.subr.bf16.mxu0 0
        %1713 = vmatpush1.bf16.msra.mxu0 0
        %1714 = vmatprep.subr.bf16.mxu0 0
        %1715 = vmatpush1.bf16.msra.mxu0 0
        %1716 = vmatprep.subr.bf16.mxu0 0
        %1717 = vmatpush1.bf16.msra.mxu0 0
        %1718 = vmatprep.subr.bf16.mxu0 0
        %1719 = vmatpush1.bf16.msra.mxu0 0
        %1720 = vmatprep.subr.bf16.mxu0 0
        %1721 = vmatpush1.bf16.msra.mxu0 0
        %1722 = vmatprep.subr.bf16.mxu0 0
        %1723 = vmatpush1.bf16.msra.mxu0 0
        %1724 = vmatprep.subr.bf16.mxu0 0
        %1725 = vmatpush1.bf16.msra.mxu0 0
        %1726 = vmatprep.subr.bf16.mxu0 0
        %1727 = vmatpush1.bf16.msra.mxu0 0
        %1728 = vmatprep.subr.bf16.mxu0 0
        %1729 = vmatpush1.bf16.msra.mxu0 0
        %1730 = vmatprep.subr.bf16.mxu0 0
        %1731 = vmatpush1.bf16.msra.mxu0 0
        %1732 = vmatprep.subr.bf16.mxu0 0
        %1733 = vmatpush1.bf16.msra.mxu0 0
        %1734 = vmatprep.subr.bf16.mxu0 0
        %1735 = vmatpush1.bf16.msra.mxu0 0
        %1736 = vmatprep.subr.bf16.mxu0 0
        %1737 = vmatpush1.bf16.msra.mxu0 0
        %1738 = vmatprep.mubr.bf16.mxu0 0
        %1739 = vmatmul.mubr.bf16.gmra.mrb[0].mxu0 %v1701
        %v1740 = vpop.f32.mrb[0].mxu0
        %v1741 = vadd.f32 0.0, %v1740
        %v1742 = vpop.f32.mrb[0].mxu0
        %v1743 = vpop.f32.mrb[0].mxu0
        %v1744 = vpop.f32.mrb[0].mxu0
        %1745 = vdwg.mxu0
        %1747 = vrot.lane.b32.xlu0 %v1517, 8
        %v1748 = vpop.permute.xlu0 %1747
        %1751 = vrot.lane.b32.xlu0 %v1629, 16
        %v1752 = vpop.permute.xlu0 %1751
        %1755 = vrot.lane.b32.xlu0 %v1741, 24
        %v1756 = vpop.permute.xlu0 %1755
        %v1758 = vsel %vm469, %v1405, %v1748
        %v1759 = vsel %vm928, %v1758, %v1752
        %v1760 = vsel %vm930, %v1759, %v1756
        %v1761 = vpack.c.bf16 %v1760, %v1760
        %v1762 = vld [vmem:[#allocation5 + $0xa0] sm:$0xf]
        %v1763 = vld [vmem:[#allocation5 + $0xa4] sm:$0xf]
        %v1764 = vld [vmem:[#allocation5 + $0xa8] sm:$0xf]
        %v1765 = vld [vmem:[#allocation5 + $0xac] sm:$0xf]
        %v1766 = vld [vmem:[#allocation2 + $0xb] sm:$0x1]
        %v1767 = vlaneseq
        %v1768 = vshrl.u32 %v1767, 7
        %v1769 = vsub.s32 0, %v1768
        %v1770 = vrot.slane %v1766, %v1769
        %v1775 = vunpack.c.l.b16 %v1762
        %v1776 = vunpack.c.l.b16 %v1763
        %v1777 = vunpack.c.l.b16 %v1764
        %v1778 = vunpack.c.l.b16 %v1765
        %v1779 = vpack.c.b16 %v1776, %v1775
        %v1780 = vpack.c.b16 %v1778, %v1777
        %v1784 = vsel %vm366, %v1761, 0
        %1786 = vmatprep.subr.bf16.mxu0 0
        %1787 = vmatpush1.bf16.msra.mxu0 %v1779
        %1788 = vmatprep.subr.bf16.mxu0 0
        %1789 = vmatpush1.bf16.msra.mxu0 %v1780
        %1790 = vmatprep.subr.bf16.mxu0 0
        %1791 = vmatpush1.bf16.msra.mxu0 0
        %1792 = vmatprep.subr.bf16.mxu0 0
        %1793 = vmatpush1.bf16.msra.mxu0 0
        %1794 = vmatprep.subr.bf16.mxu0 0
        %1795 = vmatpush1.bf16.msra.mxu0 0
        %1796 = vmatprep.subr.bf16.mxu0 0
        %1797 = vmatpush1.bf16.msra.mxu0 0
        %1798 = vmatprep.subr.bf16.mxu0 0
        %1799 = vmatpush1.bf16.msra.mxu0 0
        %1800 = vmatprep.subr.bf16.mxu0 0
        %1801 = vmatpush1.bf16.msra.mxu0 0
        %1802 = vmatprep.subr.bf16.mxu0 0
        %1803 = vmatpush1.bf16.msra.mxu0 0
        %1804 = vmatprep.subr.bf16.mxu0 0
        %1805 = vmatpush1.bf16.msra.mxu0 0
        %1806 = vmatprep.subr.bf16.mxu0 0
        %1807 = vmatpush1.bf16.msra.mxu0 0
        %1808 = vmatprep.subr.bf16.mxu0 0
        %1809 = vmatpush1.bf16.msra.mxu0 0
        %1810 = vmatprep.subr.bf16.mxu0 0
        %1811 = vmatpush1.bf16.msra.mxu0 0
        %1812 = vmatprep.subr.bf16.mxu0 0
        %1813 = vmatpush1.bf16.msra.mxu0 0
        %1814 = vmatprep.subr.bf16.mxu0 0
        %1815 = vmatpush1.bf16.msra.mxu0 0
        %1816 = vmatprep.subr.bf16.mxu0 0
        %1817 = vmatpush1.bf16.msra.mxu0 0
        %1818 = vmatprep.mubr.bf16.mxu0 0
        %1819 = vmatmul.mubr.bf16.gmra.mrb[0].mxu0 %v1784
        %v1820 = vpop.f32.mrb[0].mxu0
        %v1821 = vadd.f32 %v1770, %v1820
        %v1822 = vpop.f32.mrb[0].mxu0
        %v1823 = vpop.f32.mrb[0].mxu0
        %v1824 = vpop.f32.mrb[0].mxu0
        %1825 = vdwg.mxu0
        %v1826 = vadd.f32 %v1232, %v1821
        %v1827 = vld [vmem:[#allocation2 + $0xc] sm:$0x1]
        %v1828 = vld [vmem:[#allocation2 + $0xd] sm:$0x1]
        %v1829 = vsel %vm366, %v1826, 0.0
        %1830 = vadd.xlane.f32.xlu0 %v1829
        %v1831 = vpop.xlane.xlu0 %1830
        %v1832 = vmul.f32 %v1831, %v370
        %v1833 = vsub.f32 %v1826, %v1832
        %v1834 = vmul.f32 %v1833, %v1833
        %v1835 = vsel %vm366, %v1834, 0.0
        %1836 = vadd.xlane.f32.xlu0 %v1835
        %v1837 = vpop.xlane.xlu0 %1836
        %v1838 = vmul.f32 %v1837, %v370
        %v1839 = vadd.f32 %v1838, 1e-12
        %v1840 = vrsqrt.pop %v1839
        %v1841 = vmul.f32 %v1833, %v1840
        %v1842 = vlaneseq
        %v1843 = vshrl.u32 %v1842, 7
        %v1844 = vsub.s32 0, %v1843
        %v1845 = vrot.slane %v1827, %v1844
        %v1846 = vmul.f32 %v1841, %v1845
        %v1847 = vlaneseq
        %v1848 = vshrl.u32 %v1847, 7
        %v1849 = vsub.s32 0, %v1848
        %v1850 = vrot.slane %v1828, %v1849
        %v1851 = vadd.f32 %v1846, %v1850
        %v1852 = vpack.c.bf16 %v1851, %v1851
        %v1853 = vld [vmem:[#allocation5 + $0xb0] sm:$0xf]
        %v1854 = vld [vmem:[#allocation5 + $0xb4] sm:$0xf]
        %v1855 = vld [vmem:[#allocation5 + $0xb8] sm:$0xf]
        %v1856 = vld [vmem:[#allocation5 + $0xbc] sm:$0xf]
        %v1857 = vld [vmem:[#allocation2 + $0xe] sm:$0x1]
        %v1858 = vlaneseq
        %v1859 = vshrl.u32 %v1858, 7
        %v1860 = vsub.s32 0, %v1859
        %v1861 = vrot.slane %v1857, %v1860
        %v1866 = vunpack.c.l.b16 %v1853
        %v1867 = vunpack.c.l.b16 %v1854
        %v1868 = vunpack.c.l.b16 %v1855
        %v1869 = vunpack.c.l.b16 %v1856
        %v1870 = vpack.c.b16 %v1867, %v1866
        %v1871 = vpack.c.b16 %v1869, %v1868
        %v1875 = vsel %vm366, %v1852, 0
        %1877 = vmatprep.subr.bf16.mxu0 0
        %1878 = vmatpush1.bf16.msra.mxu0 %v1870
        %1879 = vmatprep.subr.bf16.mxu0 0
        %1880 = vmatpush1.bf16.msra.mxu0 %v1871
        %1881 = vmatprep.subr.bf16.mxu0 0
        %1882 = vmatpush1.bf16.msra.mxu0 0
        %1883 = vmatprep.subr.bf16.mxu0 0
        %1884 = vmatpush1.bf16.msra.mxu0 0
        %1885 = vmatprep.subr.bf16.mxu0 0
        %1886 = vmatpush1.bf16.msra.mxu0 0
        %1887 = vmatprep.subr.bf16.mxu0 0
        %1888 = vmatpush1.bf16.msra.mxu0 0
        %1889 = vmatprep.subr.bf16.mxu0 0
        %1890 = vmatpush1.bf16.msra.mxu0 0
        %1891 = vmatprep.subr.bf16.mxu0 0
        %1892 = vmatpush1.bf16.msra.mxu0 0
        %1893 = vmatprep.subr.bf16.mxu0 0
        %1894 = vmatpush1.bf16.msra.mxu0 0
        %1895 = vmatprep.subr.bf16.mxu0 0
        %1896 = vmatpush1.bf16.msra.mxu0 0
        %1897 = vmatprep.subr.bf16.mxu0 0
        %1898 = vmatpush1.bf16.msra.mxu0 0
        %1899 = vmatprep.subr.bf16.mxu0 0
        %1900 = vmatpush1.bf16.msra.mxu0 0
        %1901 = vmatprep.subr.bf16.mxu0 0
        %1902 = vmatpush1.bf16.msra.mxu0 0
        %1903 = vmatprep.subr.bf16.mxu0 0
        %1904 = vmatpush1.bf16.msra.mxu0 0
        %1905 = vmatprep.subr.bf16.mxu0 0
        %1906 = vmatpush1.bf16.msra.mxu0 0
        %1907 = vmatprep.subr.bf16.mxu0 0
        %1908 = vmatpush1.bf16.msra.mxu0 0
        %1909 = vmatprep.mubr.bf16.mxu0 0
        %1910 = vmatmul.mubr.bf16.gmra.mrb[0].mxu0 %v1875
        %v1911 = vpop.f32.mrb[0].mxu0
        %v1912 = vadd.f32 %v1861, %v1911
        %v1913 = vpop.f32.mrb[0].mxu0
        %v1914 = vpop.f32.mrb[0].mxu0
        %v1915 = vpop.f32.mrb[0].mxu0
        %1916 = vdwg.mxu0
        %v1917 = vmul.f32 %v1912, 0.5
        %v1918 = vmul.f32 %v1912, 0.044715
        %v1919 = vmul.f32 %v1918, %v1912
        %v1920 = vmul.f32 %v1919, %v1912
        %v1921 = vadd.f32 %v1912, %v1920
        %v1922 = vmul.f32 %v1921, 0.7978846
        %v1923 = vtanh.pop %v1922
        %v1924 = vadd.f32 %v1923, 1.0
        %v1925 = vmul.f32 %v1917, %v1924
        %v1926 = vpack.c.bf16 %v1925, %v1925
        %v1927 = vld [vmem:[#allocation5 + $0xc0] sm:$0xf]
        %v1928 = vld [vmem:[#allocation5 + $0xc4] sm:$0xf]
        %v1929 = vld [vmem:[#allocation5 + $0xc8] sm:$0xf]
        %v1930 = vld [vmem:[#allocation5 + $0xcc] sm:$0xf]
        %v1931 = vld [vmem:[#allocation5 + $0xd0] sm:$0xf]
        %v1932 = vld [vmem:[#allocation5 + $0xd4] sm:$0xf]
        %v1933 = vld [vmem:[#allocation5 + $0xd8] sm:$0xf]
        %v1934 = vld [vmem:[#allocation5 + $0xdc] sm:$0xf]
        %v1935 = vld [vmem:[#allocation5 + $0xe0] sm:$0xf]
        %v1936 = vld [vmem:[#allocation5 + $0xe4] sm:$0xf]
        %v1937 = vld [vmem:[#allocation5 + $0xe8] sm:$0xf]
        %v1938 = vld [vmem:[#allocation5 + $0xec] sm:$0xf]
        %v1939 = vld [vmem:[#allocation5 + $0xf0] sm:$0xf]
        %v1940 = vld [vmem:[#allocation5 + $0xf4] sm:$0xf]
        %v1941 = vld [vmem:[#allocation5 + $0xf8] sm:$0xf]
        %v1942 = vld [vmem:[#allocation5 + $0xfc] sm:$0xf]
        %v1943 = vld [vmem:[#allocation2 + $0xf] sm:$0x1]
        %v1944 = vlaneseq
        %v1945 = vshrl.u32 %v1944, 7
        %v1946 = vsub.s32 0, %v1945
        %v1947 = vrot.slane %v1943, %v1946
        %v1964 = vunpack.c.l.b16 %v1927
        %v1965 = vunpack.c.l.b16 %v1928
        %v1966 = vunpack.c.l.b16 %v1929
        %v1967 = vunpack.c.l.b16 %v1930
        %v1968 = vunpack.c.l.b16 %v1931
        %v1969 = vunpack.c.l.b16 %v1932
        %v1970 = vunpack.c.l.b16 %v1933
        %v1971 = vunpack.c.l.b16 %v1934
        %v1972 = vunpack.c.l.b16 %v1935
        %v1973 = vunpack.c.l.b16 %v1936
        %v1974 = vunpack.c.l.b16 %v1937
        %v1975 = vunpack.c.l.b16 %v1938
        %v1976 = vunpack.c.l.b16 %v1939
        %v1977 = vunpack.c.l.b16 %v1940
        %v1978 = vunpack.c.l.b16 %v1941
        %v1979 = vunpack.c.l.b16 %v1942
        %v1980 = vpack.c.b16 %v1965, %v1964
        %v1981 = vpack.c.b16 %v1967, %v1966
        %v1982 = vpack.c.b16 %v1969, %v1968
        %v1983 = vpack.c.b16 %v1971, %v1970
        %v1984 = vpack.c.b16 %v1973, %v1972
        %v1985 = vpack.c.b16 %v1975, %v1974
        %v1986 = vpack.c.b16 %v1977, %v1976
        %v1987 = vpack.c.b16 %v1979, %v1978
        %1996 = vmatprep.subr.bf16.mxu0 0
        %1997 = vmatpush1.bf16.msra.mxu0 %v1980
        %1998 = vmatprep.subr.bf16.mxu0 0
        %1999 = vmatpush1.bf16.msra.mxu0 %v1981
        %2000 = vmatprep.subr.bf16.mxu0 0
        %2001 = vmatpush1.bf16.msra.mxu0 %v1982
        %2002 = vmatprep.subr.bf16.mxu0 0
        %2003 = vmatpush1.bf16.msra.mxu0 %v1983
        %2004 = vmatprep.subr.bf16.mxu0 0
        %2005 = vmatpush1.bf16.msra.mxu0 %v1984
        %2006 = vmatprep.subr.bf16.mxu0 0
        %2007 = vmatpush1.bf16.msra.mxu0 %v1985
        %2008 = vmatprep.subr.bf16.mxu0 0
        %2009 = vmatpush1.bf16.msra.mxu0 %v1986
        %2010 = vmatprep.subr.bf16.mxu0 0
        %2011 = vmatpush1.bf16.msra.mxu0 %v1987
        %2012 = vmatprep.subr.bf16.mxu0 0
        %2013 = vmatpush1.bf16.msra.mxu0 0
        %2014 = vmatprep.subr.bf16.mxu0 0
        %2015 = vmatpush1.bf16.msra.mxu0 0
        %2016 = vmatprep.subr.bf16.mxu0 0
        %2017 = vmatpush1.bf16.msra.mxu0 0
        %2018 = vmatprep.subr.bf16.mxu0 0
        %2019 = vmatpush1.bf16.msra.mxu0 0
        %2020 = vmatprep.subr.bf16.mxu0 0
        %2021 = vmatpush1.bf16.msra.mxu0 0
        %2022 = vmatprep.subr.bf16.mxu0 0
        %2023 = vmatpush1.bf16.msra.mxu0 0
        %2024 = vmatprep.subr.bf16.mxu0 0
        %2025 = vmatpush1.bf16.msra.mxu0 0
        %2026 = vmatprep.subr.bf16.mxu0 0
        %2027 = vmatpush1.bf16.msra.mxu0 0
        %2028 = vmatprep.mubr.bf16.mxu0 0
        %2029 = vmatmul.mubr.bf16.gmra.mrb[0].mxu0 %v1926
        %v2030 = vpop.f32.mrb[0].mxu0
        %v2031 = vadd.f32 %v1947, %v2030
        %v2032 = vpop.f32.mrb[0].mxu0
        %v2033 = vpop.f32.mrb[0].mxu0
        %v2034 = vpop.f32.mrb[0].mxu0
        %2035 = vdwg.mxu0
        %v2036 = vadd.f32 %v1851, %v2031
        %v2037 = vld [vmem:[#allocation2 + $0x10] sm:$0x1]
        %v2038 = vld [vmem:[#allocation2 + $0x11] sm:$0x1]
        %v2039 = vsel %vm366, %v2036, 0.0
        %2040 = vadd.xlane.f32.xlu0 %v2039
        %v2041 = vpop.xlane.xlu0 %2040
        %v2042 = vmul.f32 %v2041, %v370
        %v2043 = vsub.f32 %v2036, %v2042
        %v2044 = vmul.f32 %v2043, %v2043
        %v2045 = vsel %vm366, %v2044, 0.0
        %2046 = vadd.xlane.f32.xlu0 %v2045
        %v2047 = vpop.xlane.xlu0 %2046
        %v2048 = vmul.f32 %v2047, %v370
        %v2049 = vadd.f32 %v2048, 1e-12
        %v2050 = vrsqrt.pop %v2049
        %v2051 = vmul.f32 %v2043, %v2050
        %v2052 = vlaneseq
        %v2053 = vshrl.u32 %v2052, 7
        %v2054 = vsub.s32 0, %v2053
        %v2055 = vrot.slane %v2037, %v2054
        %v2056 = vmul.f32 %v2051, %v2055
        %v2057 = vlaneseq
        %v2058 = vshrl.u32 %v2057, 7
        %v2059 = vsub.s32 0, %v2058
        %v2060 = vrot.slane %v2038, %v2059
        %v2061 = vadd.f32 %v2056, %v2060
        %v2062 = vpack.c.bf16 %v2061, %v2061
        %v2063 = vld [vmem:[#allocation5 + $0x100] sm:$0xf]
        %v2064 = vld [vmem:[#allocation5 + $0x104] sm:$0xf]
        %v2065 = vld [vmem:[#allocation5 + $0x108] sm:$0xf]
        %v2066 = vld [vmem:[#allocation5 + $0x10c] sm:$0xf]
        %v2067 = vld [vmem:[#allocation2 + $0x12] sm:$0x1]
        %v2072 = vunpack.c.l.b16 %v2063
        %v2073 = vunpack.c.l.b16 %v2064
        %v2074 = vunpack.c.l.b16 %v2065
        %v2075 = vunpack.c.l.b16 %v2066
        %v2076 = vpack.c.b16 %v2073, %v2072
        %v2077 = vpack.c.b16 %v2075, %v2074
        %v2081 = vsel %vm366, %v2062, 0
        %2083 = vmatprep.subr.bf16.mxu0 0
        %2084 = vmatpush1.bf16.msra.mxu0 %v2076
        %2085 = vmatprep.subr.bf16.mxu0 0
        %2086 = vmatpush1.bf16.msra.mxu0 %v2077
        %2087 = vmatprep.subr.bf16.mxu0 0
        %2088 = vmatpush1.bf16.msra.mxu0 0
        %2089 = vmatprep.subr.bf16.mxu0 0
        %2090 = vmatpush1.bf16.msra.mxu0 0
        %2091 = vmatprep.subr.bf16.mxu0 0
        %2092 = vmatpush1.bf16.msra.mxu0 0
        %2093 = vmatprep.subr.bf16.mxu0 0
        %2094 = vmatpush1.bf16.msra.mxu0 0
        %2095 = vmatprep.subr.bf16.mxu0 0
        %2096 = vmatpush1.bf16.msra.mxu0 0
        %2097 = vmatprep.subr.bf16.mxu0 0
        %2098 = vmatpush1.bf16.msra.mxu0 0
        %2099 = vmatprep.subr.bf16.mxu0 0
        %2100 = vmatpush1.bf16.msra.mxu0 0
        %2101 = vmatprep.subr.bf16.mxu0 0
        %2102 = vmatpush1.bf16.msra.mxu0 0
        %2103 = vmatprep.subr.bf16.mxu0 0
        %2104 = vmatpush1.bf16.msra.mxu0 0
        %2105 = vmatprep.subr.bf16.mxu0 0
        %2106 = vmatpush1.bf16.msra.mxu0 0
        %2107 = vmatprep.subr.bf16.mxu0 0
        %2108 = vmatpush1.bf16.msra.mxu0 0
        %2109 = vmatprep.subr.bf16.mxu0 0
        %2110 = vmatpush1.bf16.msra.mxu0 0
        %2111 = vmatprep.subr.bf16.mxu0 0
        %2112 = vmatpush1.bf16.msra.mxu0 0
        %2113 = vmatprep.subr.bf16.mxu0 0
        %2114 = vmatpush1.bf16.msra.mxu0 0
        %2115 = vmatprep.mubr.bf16.mxu0 0
        %2116 = vmatmul.mubr.bf16.gmra.mrb[0].mxu0 %v2081
        %v2117 = vpop.f32.mrb[0].mxu0
        %v2118 = vadd.f32 %v2067, %v2117
        %v2119 = vpop.f32.mrb[0].mxu0
        %v2120 = vpop.f32.mrb[0].mxu0
        %v2121 = vpop.f32.mrb[0].mxu0
        %2122 = vdwg.mxu0
        %v2123 = vtanh.pop %v2118
        %v2124 = vld [vmem:[%s276] sm:$0x1]
        %v2125 = vpack.c.bf16 %v2124, %v2124
        %v2126 = vld [vmem:[#allocation5 + $0x110] sm:$0x7]
        %v2127 = vld [vmem:[#allocation2 + $0x13] sm:$0x1]
        %vm2128 = vcmask 48128
        %v2130 = vsel %vm2128, %v2125, 0
        %vm2132 = vcmask 1042432
        %v2134 = vsel %vm2132, %v2126, 0
        %2136 = vmatprep.subr.bf16.mxu0 0
        %2137 = vmatpush1.bf16.msra.mxu0 %v2134
        %2138 = vmatprep.subr.bf16.mxu0 0
        %2139 = vmatpush1.bf16.msra.mxu0 0
        %2140 = vmatprep.subr.bf16.mxu0 0
        %2141 = vmatpush1.bf16.msra.mxu0 0
        %2142 = vmatprep.subr.bf16.mxu0 0
        %2143 = vmatpush1.bf16.msra.mxu0 0
        %2144 = vmatprep.subr.bf16.mxu0 0
        %2145 = vmatpush1.bf16.msra.mxu0 0
        %2146 = vmatprep.subr.bf16.mxu0 0
        %2147 = vmatpush1.bf16.msra.mxu0 0
        %2148 = vmatprep.subr.bf16.mxu0 0
        %2149 = vmatpush1.bf16.msra.mxu0 0
        %2150 = vmatprep.subr.bf16.mxu0 0
        %2151 = vmatpush1.bf16.msra.mxu0 0
        %2152 = vmatprep.subr.bf16.mxu0 0
        %2153 = vmatpush1.bf16.msra.mxu0 0
        %2154 = vmatprep.subr.bf16.mxu0 0
        %2155 = vmatpush1.bf16.msra.mxu0 0
        %2156 = vmatprep.subr.bf16.mxu0 0
        %2157 = vmatpush1.bf16.msra.mxu0 0
        %2158 = vmatprep.subr.bf16.mxu0 0
        %2159 = vmatpush1.bf16.msra.mxu0 0
        %2160 = vmatprep.subr.bf16.mxu0 0
        %2161 = vmatpush1.bf16.msra.mxu0 0
        %2162 = vmatprep.subr.bf16.mxu0 0
        %2163 = vmatpush1.bf16.msra.mxu0 0
        %2164 = vmatprep.subr.bf16.mxu0 0
        %2165 = vmatpush1.bf16.msra.mxu0 0
        %2166 = vmatprep.subr.bf16.mxu0 0
        %2167 = vmatpush1.bf16.msra.mxu0 0
        %2168 = vmatprep.mubr.bf16.mxu0 0
        %2169 = vmatmul.mubr.bf16.gmra.mrb[0].mxu0 %v2130
        %v2170 = vpop.f32.mrb[0].mxu0
        %v2171 = vadd.f32 %v2127, %v2170
        %v2172 = vpop.f32.mrb[0].mxu0
        %v2173 = vpop.f32.mrb[0].mxu0
        %v2174 = vpop.f32.mrb[0].mxu0
        %2175 = vdwg.mxu0
        %v2176 = vmax.f32 %v2171, 0.0
        %v2177 = vpack.c.bf16 %v2123, %v2123
        %v2178 = vld [vmem:[#allocation5 + $0x114] sm:$0xf]
        %v2179 = vld [vmem:[#allocation5 + $0x118] sm:$0xf]
        %v2180 = vld [vmem:[#allocation5 + $0x11c] sm:$0xf]
        %v2181 = vld [vmem:[#allocation5 + $0x120] sm:$0xf]
        %v2182 = vpack.c.bf16 %v2176, %v2176
        %v2183 = vld [vmem:[#allocation5 + $0x124] sm:$0xf]
        %v2185 = vsel %vm469, %v2182, 0
        %v2188 = vsel %vm535, %v2183, 0
        %2190 = vmatprep.subr.bf16.mxu0 0
        %2191 = vmatpush1.bf16.msra.mxu0 %v2188
        %2192 = vmatprep.subr.bf16.mxu0 0
        %2193 = vmatpush1.bf16.msra.mxu0 0
        %2194 = vmatprep.subr.bf16.mxu0 0
        %2195 = vmatpush1.bf16.msra.mxu0 0
        %2196 = vmatprep.subr.bf16.mxu0 0
        %2197 = vmatpush1.bf16.msra.mxu0 0
        %2198 = vmatprep.subr.bf16.mxu0 0
        %2199 = vmatpush1.bf16.msra.mxu0 0
        %2200 = vmatprep.subr.bf16.mxu0 0
        %2201 = vmatpush1.bf16.msra.mxu0 0
        %2202 = vmatprep.subr.bf16.mxu0 0
        %2203 = vmatpush1.bf16.msra.mxu0 0
        %2204 = vmatprep.subr.bf16.mxu0 0
        %2205 = vmatpush1.bf16.msra.mxu0 0
        %2206 = vmatprep.subr.bf16.mxu0 0
        %2207 = vmatpush1.bf16.msra.mxu0 0
        %2208 = vmatprep.subr.bf16.mxu0 0
        %2209 = vmatpush1.bf16.msra.mxu0 0
        %2210 = vmatprep.subr.bf16.mxu0 0
        %2211 = vmatpush1.bf16.msra.mxu0 0
        %2212 = vmatprep.subr.bf16.mxu0 0
        %2213 = vmatpush1.bf16.msra.mxu0 0
        %2214 = vmatprep.subr.bf16.mxu0 0
        %2215 = vmatpush1.bf16.msra.mxu0 0
        %2216 = vmatprep.subr.bf16.mxu0 0
        %2217 = vmatpush1.bf16.msra.mxu0 0
        %2218 = vmatprep.subr.bf16.mxu0 0
        %2219 = vmatpush1.bf16.msra.mxu0 0
        %2220 = vmatprep.subr.bf16.mxu0 0
        %2221 = vmatpush1.bf16.msra.mxu0 0
        %2222 = vmatprep.mubr.bf16.mxu0 0
        %2223 = vmatmul.mubr.bf16.gmra.mrb[0].mxu0 %v2185
        %v2224 = vpop.f32.mrb[0].mxu0
        %v2225 = vadd.f32 0.0, %v2224
        %v2226 = vpop.f32.mrb[0].mxu0
        %v2227 = vpop.f32.mrb[0].mxu0
        %v2228 = vpop.f32.mrb[0].mxu0
        %2229 = vdwg.mxu0
        %v2234 = vunpack.c.l.b16 %v2178
        %v2235 = vunpack.c.l.b16 %v2179
        %v2236 = vunpack.c.l.b16 %v2180
        %v2237 = vunpack.c.l.b16 %v2181
        %v2238 = vpack.c.b16 %v2235, %v2234
        %v2239 = vpack.c.b16 %v2237, %v2236
        %v2243 = vsel %vm366, %v2177, 0
        %2245 = vmatprep.subr.bf16.mxu0 0
        %2246 = vmatpush1.bf16.msra.mxu0 %v2238
        %2247 = vmatprep.subr.bf16.mxu0 0
        %2248 = vmatpush1.bf16.msra.mxu0 %v2239
        %2249 = vmatprep.subr.bf16.mxu0 0
        %2250 = vmatpush1.bf16.msra.mxu0 0
        %2251 = vmatprep.subr.bf16.mxu0 0
        %2252 = vmatpush1.bf16.msra.mxu0 0
        %2253 = vmatprep.subr.bf16.mxu0 0
        %2254 = vmatpush1.bf16.msra.mxu0 0
        %2255 = vmatprep.subr.bf16.mxu0 0
        %2256 = vmatpush1.bf16.msra.mxu0 0
        %2257 = vmatprep.subr.bf16.mxu0 0
        %2258 = vmatpush1.bf16.msra.mxu0 0
        %2259 = vmatprep.subr.bf16.mxu0 0
        %2260 = vmatpush1.bf16.msra.mxu0 0
        %2261 = vmatprep.subr.bf16.mxu0 0
        %2262 = vmatpush1.bf16.msra.mxu0 0
        %2263 = vmatprep.subr.bf16.mxu0 0
        %2264 = vmatpush1.bf16.msra.mxu0 0
        %2265 = vmatprep.subr.bf16.mxu0 0
        %2266 = vmatpush1.bf16.msra.mxu0 0
        %2267 = vmatprep.subr.bf16.mxu0 0
        %2268 = vmatpush1.bf16.msra.mxu0 0
        %2269 = vmatprep.subr.bf16.mxu0 0
        %2270 = vmatpush1.bf16.msra.mxu0 0
        %2271 = vmatprep.subr.bf16.mxu0 0
        %2272 = vmatpush1.bf16.msra.mxu0 0
        %2273 = vmatprep.subr.bf16.mxu0 0
        %2274 = vmatpush1.bf16.msra.mxu0 0
        %2275 = vmatprep.subr.bf16.mxu0 0
        %2276 = vmatpush1.bf16.msra.mxu0 0
        %2277 = vmatprep.mubr.bf16.mxu0 0
        %2278 = vmatmul.mubr.bf16.gmra.mrb[0].mxu0 %v2243
        %v2279 = vpop.f32.mrb[0].mxu0
        %v2280 = vadd.f32 %v2225, %v2279
        %v2281 = vpop.f32.mrb[0].mxu0
        %v2282 = vpop.f32.mrb[0].mxu0
        %v2283 = vpop.f32.mrb[0].mxu0
        %2284 = vdwg.mxu0
        %v2285 = vld [vmem:[#allocation2 + $0x14] sm:$0x1]
        %v2286 = vadd.f32 %v2280, %v2285
        %v2287 = vmax.f32 %v2286, 0.0
        %v2288 = vpack.c.bf16 %v2287, %v2287
        %v2289 = vld [vmem:[#allocation5 + $0x128] sm:$0xf]
        %v2290 = vld [vmem:[#allocation5 + $0x12c] sm:$0xf]
        %v2291 = vld [vmem:[#allocation2 + $0x15] sm:$0x1]
        %v2294 = vunpack.c.l.b16 %v2289
        %v2295 = vunpack.c.l.b16 %v2290
        %v2296 = vpack.c.b16 %v2295, %v2294
        %v2299 = vsel %vm928, %v2288, 0
        %2301 = vmatprep.subr.bf16.mxu0 0
        %2302 = vmatpush1.bf16.msra.mxu0 %v2296
        %2303 = vmatprep.subr.bf16.mxu0 0
        %2304 = vmatpush1.bf16.msra.mxu0 0
        %2305 = vmatprep.subr.bf16.mxu0 0
        %2306 = vmatpush1.bf16.msra.mxu0 0
        %2307 = vmatprep.subr.bf16.mxu0 0
        %2308 = vmatpush1.bf16.msra.mxu0 0
        %2309 = vmatprep.subr.bf16.mxu0 0
        %2310 = vmatpush1.bf16.msra.mxu0 0
        %2311 = vmatprep.subr.bf16.mxu0 0
        %2312 = vmatpush1.bf16.msra.mxu0 0
        %2313 = vmatprep.subr.bf16.mxu0 0
        %2314 = vmatpush1.bf16.msra.mxu0 0
        %2315 = vmatprep.subr.bf16.mxu0 0
        %2316 = vmatpush1.bf16.msra.mxu0 0
        %2317 = vmatprep.subr.bf16.mxu0 0
        %2318 = vmatpush1.bf16.msra.mxu0 0
        %2319 = vmatprep.subr.bf16.mxu0 0
        %2320 = vmatpush1.bf16.msra.mxu0 0
        %2321 = vmatprep.subr.bf16.mxu0 0
        %2322 = vmatpush1.bf16.msra.mxu0 0
        %2323 = vmatprep.subr.bf16.mxu0 0
        %2324 = vmatpush1.bf16.msra.mxu0 0
        %2325 = vmatprep.subr.bf16.mxu0 0
        %2326 = vmatpush1.bf16.msra.mxu0 0
        %2327 = vmatprep.subr.bf16.mxu0 0
        %2328 = vmatpush1.bf16.msra.mxu0 0
        %2329 = vmatprep.subr.bf16.mxu0 0
        %2330 = vmatpush1.bf16.msra.mxu0 0
        %2331 = vmatprep.subr.bf16.mxu0 0
        %2332 = vmatpush1.bf16.msra.mxu0 0
        %2333 = vmatprep.mubr.bf16.mxu0 0
        %2334 = vmatmul.mubr.bf16.gmra.mrb[0].mxu0 %v2299
        %v2335 = vpop.f32.mrb[0].mxu0
        %v2336 = vadd.f32 %v2291, %v2335
        %v2337 = vpop.f32.mrb[0].mxu0
        %v2338 = vpop.f32.mrb[0].mxu0
        %v2339 = vpop.f32.mrb[0].mxu0
        %2340 = vdwg.mxu0
        %2341 = vst [vmem:[%s266] sm:$0x1] %v2336
        %s2342 = sand.u32 %s149, 1
        %s2343 = scalar_lea.sflag [#allocation4], %s2342
        %s2344 = sand.u32 %s149, 1
        %s2345 = scalar_lea.vmem [#allocation7], %s2344
        // Predicated region
        $region49: #{forward.1} parent=39 // pred_check
          %p2346 = pneg %p159
        $region50: #{forward.1} parent=39 // pred_check_branch
          %2348 = sbr.rel (%p2346) target = $region52
        $region51: #{forward.1} parent=39 // pred_region
          %s2350 = ssub.s32 16, 16
          %2351 = vsyncadd %s2343, %s2350
          %s2352 = smul.addr %s21, 16
          %s2353 = scalar_lea.hbm %s5, %s2352
          %s2355 = sshll.u32 %s2345, 4
          %s2356 = int_to_ptr.vmem [resolvable:$true] %s2355
          %2358 = dma.vmem_to_hbm [thread:$0]  %s2356, 16, %s2353, %s2343
        $region52: #{forward.1} parent=39 // pred_fallthru
          _
      $region40: #{forward.1} parent=5 // pred_fallthru
        _
      %p2359 = scmp.le.s32.totalorder 2, %s16
      // Predicated region
      $region53: #{forward.1} parent=5 // pred_check
        %p2360 = pneg %p2359
      $region54: #{forward.1} parent=5 // pred_check_branch
        %2362 = sbr.rel (%p2360) target = $region56
      $region55: #{forward.1} parent=5 // pred_region
        %s2363 = ssub.s32 %s16, 2
        // Predicated region
        $region57: #{forward.1} parent=55 // pred_check
          %p2364 = pneg %p165
        $region58: #{forward.1} parent=55 // pred_check_branch
          %2366 = sbr.rel (%p2364) target = $region60
        $region59: #{forward.1} parent=55 // pred_region
          %s2367 = sand.u32 %s150, 1
          %s2368 = scalar_lea.sflag [#allocation4], %s2367
          %s2369 = sand.u32 %s150, 1
          %s2370 = scalar_lea.vmem [#allocation7], %s2369
          %2371 = dma.done %s2368, 16
        $region60: #{forward.1} parent=55 // pred_fallthru
          _
      $region56: #{forward.1} parent=5 // pred_fallthru
        _
    $region6: #{forward.1} parent=1 // loop_footer
      %s20 = sadd.s32 1, %s16
    $region7: #{forward.1} parent=1 // loop_footer_branch
      %15 = sbr.rel target = $region3
    $region8: #{forward.1} parent=1 // loop_exit
      _
    %2372 = vsyncpa [#allocation3], 1
    %s2373 = scalar_lea.sflag [#allocation3], 1
    %2374 = vsyncpa %s2373, 1
    %2375 = vsyncpa [#allocation6], 1
    %2376 = vsyncpa [#allocation4], 1
    %s2377 = scalar_lea.sflag [#allocation4], 1
    %2378 = vsyncpa %s2377, 1

</llo_original>
